<compile_context>
chip_gen: v6e
topology: v6e:2x2x1
jax: 0.10.0
libtpu: 0.0.40
codegen_flags: <defaults>
</compile_context>

<pallas_src>
import functools

import jax
import jax.numpy as jnp
import numpy as np
from jax.experimental import pallas as pl
from jax.experimental.pallas import tpu as pltpu

EPS = 1e-5  # torch.nn.LayerNorm default eps


def _layernorm(x, gamma, beta):
    # x: (..., H); gamma/beta: (1, H) -- keep the 2-D broadcast (no [0] index).
    mu = jnp.mean(x, axis=-1, keepdims=True)
    var = jnp.mean((x - mu) ** 2, axis=-1, keepdims=True)
    return (x - mu) * jax.lax.rsqrt(var + EPS) * gamma + beta


def discriminator_kernel(
    x_ref,
    w_emb_ref, b_emb_ref,
    w_qh_ref, b_qh_ref,
    w_kh_ref, b_kh_ref,
    w_vh_ref, b_vh_ref,
    w_aoh_ref, b_ao_ref,
    g1_ref, be1_ref,
    g2_ref, be2_ref,
    w_ff1_ref, b_ff1_ref,
    w_ff2_ref, b_ff2_ref,
    w_fc0_ref, b_fc0_ref,
    w_fc1_ref, b_fc1_ref,
    w_out_ref, b_out_ref,
    o_ref,
    *, num_heads, compute_dtype,
):
    cdt = compute_dtype
    f32 = jnp.float32
    x = x_ref[...]                                      # (S, Din)
    NH = num_heads

    def linear(v, w_ref, b_ref):
        # matmul in `cdt` with f32 accumulation; bias stays a 2-D (1, out) add.
        y = jnp.dot(v.astype(cdt), w_ref[...], preferred_element_type=f32)
        return y + b_ref[...].astype(f32)

    # --- embedding ---
    h = linear(x, w_emb_ref, b_emb_ref)                 # (S, H) f32

    # --- transformer encoder layer (norm_first=True; dropout = identity) ---
    hn = _layernorm(h, g1_ref[...], be1_ref[...])       # (S, H) f32
    hn_b = jnp.broadcast_to(hn.astype(cdt)[None], (NH,) + hn.shape)  # (NH,S,H)

    # Per-head Q/K/V projections, heads batched along the leading dim.
    # 1/sqrt(Dh) is already folded into w_qh / b_qh by the wrapper.
    q = jnp.einsum('hsd,hde->hse', hn_b, w_qh_ref[...],
                   preferred_element_type=f32) + b_qh_ref[...]        # (NH,S,Dh)
    k = jnp.einsum('hsd,hde->hse', hn_b, w_kh_ref[...],
                   preferred_element_type=f32) + b_kh_ref[...]
    v = jnp.einsum('hsd,hde->hse', hn_b, w_vh_ref[...],
                   preferred_element_type=f32) + b_vh_ref[...]

    s = jnp.einsum('hqd,hkd->hqk', q.astype(cdt), k.astype(cdt),
                   preferred_element_type=f32)                        # (NH,S,S)
    s = s - jnp.max(s, axis=-1, keepdims=True)
    e = jnp.exp(s)
    p = e * pl.reciprocal(jnp.sum(e, axis=-1, keepdims=True), approx=True)
    ctx = jnp.einsum('hqk,hkd->hqd', p.astype(cdt), v.astype(cdt),
                     preferred_element_type=f32)                      # (NH,S,Dh)

    # Output projection: sum_h ctx_h @ W_out_h  (no concat needed).
    proj = jnp.einsum('hsd,hde->hse', ctx.astype(cdt), w_aoh_ref[...],
                      preferred_element_type=f32)                     # (NH,S,H)
    attn = proj[0]
    for hh in range(1, NH):                                           # static NH
        attn = attn + proj[hh]
    h = h + attn + b_ao_ref[...].astype(f32)

    hn2 = _layernorm(h, g2_ref[...], be2_ref[...])
    ff = jnp.maximum(linear(hn2, w_ff1_ref, b_ff1_ref), 0.0)          # ReLU
    h = h + linear(ff, w_ff2_ref, b_ff2_ref)

    # --- fc head ---
    f = jnp.maximum(linear(h, w_fc0_ref, b_fc0_ref), 0.0)
    f = jnp.maximum(linear(f, w_fc1_ref, b_fc1_ref), 0.0)

    # Final 1-wide projection, computed in batched A.B^T form so the result is
    # already a lane-dense (1, S) row: logits[0, s] = sum_c w_out[c] * f[s, c].
    logits = jnp.einsum('bec,bsc->bes', w_out_ref[...], f.astype(cdt)[None],
                        preferred_element_type=f32)[0]                # (1, S)
    logits = logits + b_out_ref[...].astype(f32)
    o_ref[...] = pl.reciprocal(1.0 + jnp.exp(-logits),
                               approx=True).astype(o_ref.dtype)


def transformer_discriminator(x, params, *, num_heads,
                              compute_dtype=jnp.bfloat16):
    B, S, DIN = x.shape
    H = params['emb'][0].shape[1]
    FC = params['fc0'][0].shape[1]
    Dh = H // num_heads
    cdt = compute_dtype

    # ---- wrapper-side weight prep (layout plumbing only, runs in XLA) ----
    w_qkv, b_qkv = params['qkv']                       # (H, 3H), (1, 3H)
    scale = 1.0 / np.sqrt(Dh)

    def head_w(col0):                                  # -> (NH, H, Dh)
        w = w_qkv[:, col0:col0 + H]
        return jnp.transpose(w.reshape(H, num_heads, Dh), (1, 0, 2))

    def head_b(col0):                                  # -> (NH, 1, Dh)
        return b_qkv[:, col0:col0 + H].reshape(num_heads, 1, Dh)

    w_qh = (head_w(0) * scale).astype(cdt)             # 1/sqrt(Dh) folded in
    b_qh = head_b(0) * scale
    w_kh = head_w(H).astype(cdt)
    b_kh = head_b(H)
    w_vh = head_w(2 * H).astype(cdt)
    b_vh = head_b(2 * H)

    w_ao, b_ao = params['attn_out']                    # (H, H), (1, H)
    w_aoh = w_ao.reshape(num_heads, Dh, H).astype(cdt)

    w_out, b_out = params['out']                       # (FC, 1), (1, 1)
    w_out_b = w_out.reshape(1, 1, FC).astype(cdt)      # row form for A.B^T

    cast = lambda w: w.astype(cdt)
    args = (
        x,
        cast(params['emb'][0]), params['emb'][1],
        w_qh, b_qh, w_kh, b_kh, w_vh, b_vh,
        w_aoh, b_ao,
        params['ln1'][0], params['ln1'][1],
        params['ln2'][0], params['ln2'][1],
        cast(params['ff1'][0]), params['ff1'][1],
        cast(params['ff2'][0]), params['ff2'][1],
        cast(params['fc0'][0]), params['fc0'][1],
        cast(params['fc1'][0]), params['fc1'][1],
        w_out_b, b_out,
    )

    # ---- BlockSpecs: x / out tiled per sequence, weights VMEM-resident ----
    x_spec = pl.BlockSpec((None, S, DIN), lambda b: (b, 0, 0))

    def const_spec(a):
        return pl.BlockSpec(a.shape, lambda b, n=a.ndim: (0,) * n)

    in_specs = [x_spec] + [const_spec(a) for a in args[1:]]
    out_spec = pl.BlockSpec((None, 1, S), lambda b: (b, 0, 0))

    # ---- scoped VMEM budget: resident weights + double-buffered act tiles ----
    weight_bytes = sum(int(a.size) * a.dtype.itemsize for a in args[1:])
    act_tile_bytes = (4 * S * (DIN + 12 * H + 4 * FC)
                      + 4 * num_heads * S * (S + 4 * Dh))
    vmem_limit = int(min(48 * 1024 * 1024,
                         max(16 * 1024 * 1024,
                             4 * weight_bytes + 8 * act_tile_bytes)))

    out = pl.pallas_call(
        functools.partial(discriminator_kernel,
                          num_heads=num_heads, compute_dtype=cdt),
        out_shape=jax.ShapeDtypeStruct((B, 1, S), jnp.float32),
        grid=(B,),
        in_specs=in_specs,
        out_specs=out_spec,
        compiler_params=pltpu.CompilerParams(
            dimension_semantics=("parallel",),
            vmem_limit_bytes=vmem_limit),
    )(*args)
    return out.reshape(B, S, 1)        # module's (B, S, 1) output layout


# ------------------------- pure-JAX reference ------------------------------
def reference_forward(x, params, *, num_heads):
    def lin(v, wb):
        w, b = wb
        return v @ w + b

    H = params['emb'][0].shape[1]
    Dh = H // num_heads
    h = lin(x, params['emb'])
    hn = _layernorm(h, params['ln1'][0], params['ln1'][1])
    qkv = lin(hn, params['qkv'])
    q, k, v = qkv[..., :H], qkv[..., H:2 * H], qkv[..., 2 * H:]
    outs = []
    for hh in range(num_heads):
        sl = slice(hh * Dh, (hh + 1) * Dh)
        s = jnp.einsum('bqd,bkd->bqk', q[..., sl], k[..., sl]) / jnp.sqrt(Dh * 1.0)
        p = jax.nn.softmax(s, axis=-1)
        outs.append(jnp.einsum('bqk,bkd->bqd', p, v[..., sl]))
    h = h + lin(jnp.concatenate(outs, axis=-1), params['attn_out'])
    hn2 = _layernorm(h, params['ln2'][0], params['ln2'][1])
    h = h + lin(jnp.maximum(lin(hn2, params['ff1']), 0.0), params['ff2'])
    f = jnp.maximum(lin(h, params['fc0']), 0.0)
    f = jnp.maximum(lin(f, params['fc1']), 0.0)
    return jax.nn.sigmoid(lin(f, params['out']))


# ------------------------- deterministic params ----------------------------
def make_params(key, din, hidden, fc_dim):
    ks = jax.random.split(key, 8)

    def lin_init(k, fan_in, fan_out):
        kw, kb = jax.random.split(k)
        bound = 1.0 / np.sqrt(fan_in)
        w = jax.random.uniform(kw, (fan_in, fan_out), jnp.float32, -bound, bound)
        b = jax.random.uniform(kb, (1, fan_out), jnp.float32, -bound, bound)
        return (w, b)

    return {
        'emb': lin_init(ks[0], din, hidden),
        'qkv': lin_init(ks[1], hidden, 3 * hidden),
        'attn_out': lin_init(ks[2], hidden, hidden),
        'ln1': (jnp.ones((1, hidden), jnp.float32), jnp.zeros((1, hidden), jnp.float32)),
        'ln2': (jnp.ones((1, hidden), jnp.float32), jnp.zeros((1, hidden), jnp.float32)),
        'ff1': lin_init(ks[3], hidden, hidden),   # dim_feedforward == hidden_dim
        'ff2': lin_init(ks[4], hidden, hidden),
        'fc0': lin_init(ks[5], hidden, fc_dim),
        'fc1': lin_init(ks[6], fc_dim, fc_dim),
        'out': lin_init(ks[7], fc_dim, 1),
    }


if __name__ == "__main__":
    # Small shapes consistent with the module: batch=2, seq=8, input_dim=16,
    # hidden_dim=32, num_heads=4 (head_dim=8), fc_dim=32.
    B, S, DIN, HID, FC, NH = 2, 8, 16, 32, 32, 4
    key = jax.random.PRNGKey(0)
    kx, kp = jax.random.split(key)
    x = jax.random.normal(kx, (B, S, DIN), jnp.float32)
    params = make_params(kp, DIN, HID, FC)

    ref = reference_forward(x, params, num_heads=NH)

    # f32-matmul path: tight correctness check.
    out_f32 = jax.block_until_ready(
        transformer_discriminator(x, params, num_heads=NH,
                                  compute_dtype=jnp.float32))
    np.testing.assert_allclose(np.asarray(out_f32), np.asarray(ref),
                               rtol=5e-3, atol=5e-3)

    # bf16-matmul path (recommended on v6e/v7x): looser check.
    out_bf16 = jax.block_until_ready(
        transformer_discriminator(x, params, num_heads=NH,
                                  compute_dtype=jnp.bfloat16))
    np.testing.assert_allclose(np.asarray(out_bf16), np.asarray(ref),
                               rtol=5e-2, atol=5e-2)

    assert out_f32.shape == (B, S, 1) and out_bf16.shape == (B, S, 1)
    print("KERNEL_OK")
</pallas_src>

<mosaic_0001>
module attributes {stable_mosaic.version = 11 : i64} {
  func.func @discriminator_kernel(%arg0: i32, %arg1: memref<1x8x16xf32, #tpu.memory_space<vmem>>, %arg2: memref<16x32xf32, #tpu.memory_space<vmem>>, %arg3: memref<1x32xf32, #tpu.memory_space<vmem>>, %arg4: memref<4x32x8xf32, #tpu.memory_space<vmem>>, %arg5: memref<4x1x8xf32, #tpu.memory_space<vmem>>, %arg6: memref<4x32x8xf32, #tpu.memory_space<vmem>>, %arg7: memref<4x1x8xf32, #tpu.memory_space<vmem>>, %arg8: memref<4x32x8xf32, #tpu.memory_space<vmem>>, %arg9: memref<4x1x8xf32, #tpu.memory_space<vmem>>, %arg10: memref<4x8x32xf32, #tpu.memory_space<vmem>>, %arg11: memref<1x32xf32, #tpu.memory_space<vmem>>, %arg12: memref<1x32xf32, #tpu.memory_space<vmem>>, %arg13: memref<1x32xf32, #tpu.memory_space<vmem>>, %arg14: memref<1x32xf32, #tpu.memory_space<vmem>>, %arg15: memref<1x32xf32, #tpu.memory_space<vmem>>, %arg16: memref<32x32xf32, #tpu.memory_space<vmem>>, %arg17: memref<1x32xf32, #tpu.memory_space<vmem>>, %arg18: memref<32x32xf32, #tpu.memory_space<vmem>>, %arg19: memref<1x32xf32, #tpu.memory_space<vmem>>, %arg20: memref<32x32xf32, #tpu.memory_space<vmem>>, %arg21: memref<1x32xf32, #tpu.memory_space<vmem>>, %arg22: memref<32x32xf32, #tpu.memory_space<vmem>>, %arg23: memref<1x32xf32, #tpu.memory_space<vmem>>, %arg24: memref<1x1x32xf32, #tpu.memory_space<vmem>>, %arg25: memref<1x1xf32, #tpu.memory_space<vmem>>, %arg26: memref<1x1x8xf32, #tpu.memory_space<vmem>>) attributes {dimension_semantics = [#tpu.dimension_semantics<parallel>], iteration_bounds = array<i64: 2>, scalar_prefetch = 0 : i64, scratch_operands = 0 : i64, tpu.core_type = #tpu.core_type<tc>, window_params = [{transform_indices = @transform_0, window_bounds = array<i64: 1, 8, 16>}, {pipeline_mode = #tpu.pipeline_mode<synchronous>, transform_indices = @transform_1, window_bounds = array<i64: 16, 32>}, {pipeline_mode = #tpu.pipeline_mode<synchronous>, transform_indices = @transform_2, window_bounds = array<i64: 1, 32>}, {pipeline_mode = #tpu.pipeline_mode<synchronous>, transform_indices = @transform_3, window_bounds = array<i64: 4, 32, 8>}, {pipeline_mode = #tpu.pipeline_mode<synchronous>, transform_indices = @transform_4, window_bounds = array<i64: 4, 1, 8>}, {pipeline_mode = #tpu.pipeline_mode<synchronous>, transform_indices = @transform_5, window_bounds = array<i64: 4, 32, 8>}, {pipeline_mode = #tpu.pipeline_mode<synchronous>, transform_indices = @transform_6, window_bounds = array<i64: 4, 1, 8>}, {pipeline_mode = #tpu.pipeline_mode<synchronous>, transform_indices = @transform_7, window_bounds = array<i64: 4, 32, 8>}, {pipeline_mode = #tpu.pipeline_mode<synchronous>, transform_indices = @transform_8, window_bounds = array<i64: 4, 1, 8>}, {pipeline_mode = #tpu.pipeline_mode<synchronous>, transform_indices = @transform_9, window_bounds = array<i64: 4, 8, 32>}, {pipeline_mode = #tpu.pipeline_mode<synchronous>, transform_indices = @transform_10, window_bounds = array<i64: 1, 32>}, {pipeline_mode = #tpu.pipeline_mode<synchronous>, transform_indices = @transform_11, window_bounds = array<i64: 1, 32>}, {pipeline_mode = #tpu.pipeline_mode<synchronous>, transform_indices = @transform_12, window_bounds = array<i64: 1, 32>}, {pipeline_mode = #tpu.pipeline_mode<synchronous>, transform_indices = @transform_13, window_bounds = array<i64: 1, 32>}, {pipeline_mode = #tpu.pipeline_mode<synchronous>, transform_indices = @transform_14, window_bounds = array<i64: 1, 32>}, {pipeline_mode = #tpu.pipeline_mode<synchronous>, transform_indices = @transform_15, window_bounds = array<i64: 32, 32>}, {pipeline_mode = #tpu.pipeline_mode<synchronous>, transform_indices = @transform_16, window_bounds = array<i64: 1, 32>}, {pipeline_mode = #tpu.pipeline_mode<synchronous>, transform_indices = @transform_17, window_bounds = array<i64: 32, 32>}, {pipeline_mode = #tpu.pipeline_mode<synchronous>, transform_indices = @transform_18, window_bounds = array<i64: 1, 32>}, {pipeline_mode = #tpu.pipeline_mode<synchronous>, transform_indices = @transform_19, window_bounds = array<i64: 32, 32>}, {pipeline_mode = #tpu.pipeline_mode<synchronous>, transform_indices = @transform_20, window_bounds = array<i64: 1, 32>}, {pipeline_mode = #tpu.pipeline_mode<synchronous>, transform_indices = @transform_21, window_bounds = array<i64: 32, 32>}, {pipeline_mode = #tpu.pipeline_mode<synchronous>, transform_indices = @transform_22, window_bounds = array<i64: 1, 32>}, {pipeline_mode = #tpu.pipeline_mode<synchronous>, transform_indices = @transform_23, window_bounds = array<i64: 1, 1, 32>}, {pipeline_mode = #tpu.pipeline_mode<synchronous>, transform_indices = @transform_24, window_bounds = array<i64: 1, 1>}, {transform_indices = @transform_25, window_bounds = array<i64: 1, 1, 8>}]} {
    %c0 = arith.constant 0 : index
    %c0_0 = arith.constant 0 : index
    %c0_1 = arith.constant 0 : index
    %0 = vector.load %arg1[%c0, %c0_0, %c0_1] : memref<1x8x16xf32, #tpu.memory_space<vmem>>, vector<1x8x16xf32>
    %1 = vector.shape_cast %0 : vector<1x8x16xf32> to vector<8x16xf32>
    %c0_2 = arith.constant 0 : index
    %c0_3 = arith.constant 0 : index
    %2 = vector.load %arg2[%c0_2, %c0_3] : memref<16x32xf32, #tpu.memory_space<vmem>>, vector<16x32xf32>
    %cst = arith.constant dense<0.000000e+00> : vector<8x32xf32>
    %3 = tpu.matmul %1, %2, %cst {dimension_numbers = #tpu.dot_dimension_numbers<[1], [0], [0], [1], [0, 0, 1, 1], [], []>} : vector<8x16xf32>, vector<16x32xf32>, vector<8x32xf32> -> vector<8x32xf32>
    %c0_4 = arith.constant 0 : index
    %c0_5 = arith.constant 0 : index
    %4 = vector.load %arg3[%c0_4, %c0_5] : memref<1x32xf32, #tpu.memory_space<vmem>>, vector<1x32xf32>
    %5 = vector.broadcast %4 : vector<1x32xf32> to vector<8x32xf32>
    %6 = arith.addf %3, %5 : vector<8x32xf32>
    %c0_6 = arith.constant 0 : index
    %c0_7 = arith.constant 0 : index
    %7 = vector.load %arg12[%c0_6, %c0_7] : memref<1x32xf32, #tpu.memory_space<vmem>>, vector<1x32xf32>
    %c0_8 = arith.constant 0 : index
    %c0_9 = arith.constant 0 : index
    %8 = vector.load %arg13[%c0_8, %c0_9] : memref<1x32xf32, #tpu.memory_space<vmem>>, vector<1x32xf32>
    %cst_10 = arith.constant dense<0.000000e+00> : vector<8xf32>
    %9 = vector.multi_reduction <add>, %6, %cst_10 [1] : vector<8x32xf32> to vector<8xf32>
    %10 = vector.shape_cast %9 : vector<8xf32> to vector<8x1xf32>
    %cst_11 = arith.constant 3.200000e+01 : f32
    %11 = vector.broadcast %cst_11 : f32 to vector<8x1xf32>
    %12 = arith.divf %10, %11 : vector<8x1xf32>
    %13 = vector.broadcast %12 : vector<8x1xf32> to vector<8x32xf32>
    %14 = arith.subf %6, %13 : vector<8x32xf32>
    %15 = arith.mulf %14, %14 : vector<8x32xf32>
    %cst_12 = arith.constant dense<0.000000e+00> : vector<8xf32>
    %16 = vector.multi_reduction <add>, %15, %cst_12 [1] : vector<8x32xf32> to vector<8xf32>
    %17 = vector.shape_cast %16 : vector<8xf32> to vector<8x1xf32>
    %cst_13 = arith.constant 3.200000e+01 : f32
    %18 = vector.broadcast %cst_13 : f32 to vector<8x1xf32>
    %19 = arith.divf %17, %18 : vector<8x1xf32>
    %20 = vector.broadcast %12 : vector<8x1xf32> to vector<8x32xf32>
    %21 = arith.subf %6, %20 : vector<8x32xf32>
    %cst_14 = arith.constant 9.99999974E-6 : f32
    %22 = vector.broadcast %cst_14 : f32 to vector<8x1xf32>
    %23 = arith.addf %19, %22 : vector<8x1xf32>
    %24 = math.rsqrt %23 : vector<8x1xf32>
    %25 = vector.broadcast %24 : vector<8x1xf32> to vector<8x32xf32>
    %26 = arith.mulf %21, %25 : vector<8x32xf32>
    %27 = vector.broadcast %7 : vector<1x32xf32> to vector<8x32xf32>
    %28 = arith.mulf %26, %27 : vector<8x32xf32>
    %29 = vector.broadcast %8 : vector<1x32xf32> to vector<8x32xf32>
    %30 = arith.addf %28, %29 : vector<8x32xf32>
    %31 = vector.shape_cast %30 : vector<8x32xf32> to vector<1x8x32xf32>
    %32 = vector.shape_cast %31 : vector<1x8x32xf32> to vector<1x8x32xf32>
    %33 = vector.broadcast %32 : vector<1x8x32xf32> to vector<4x8x32xf32>
    %c0_15 = arith.constant 0 : index
    %c0_16 = arith.constant 0 : index
    %c0_17 = arith.constant 0 : index
    %34 = vector.load %arg4[%c0_15, %c0_16, %c0_17] : memref<4x32x8xf32, #tpu.memory_space<vmem>>, vector<4x32x8xf32>
    "tpu.trace_start"() <{level = 10 : i32, message = "hsd,hde->hse"}> : () -> ()
    %cst_18 = arith.constant dense<0.000000e+00> : vector<4x8x8xf32>
    %35 = tpu.matmul %33, %34, %cst_18 {dimension_numbers = #tpu.dot_dimension_numbers<[2], [1], [1], [2], [0, 0, 0, 1, 1, 2], [0], [0]>} : vector<4x8x32xf32>, vector<4x32x8xf32>, vector<4x8x8xf32> -> vector<4x8x8xf32>
    "tpu.trace_stop"() : () -> ()
    %c0_19 = arith.constant 0 : index
    %c0_20 = arith.constant 0 : index
    %c0_21 = arith.constant 0 : index
    %36 = vector.load %arg5[%c0_19, %c0_20, %c0_21] : memref<4x1x8xf32, #tpu.memory_space<vmem>>, vector<4x1x8xf32>
    %37 = vector.broadcast %36 : vector<4x1x8xf32> to vector<4x8x8xf32>
    %38 = arith.addf %35, %37 : vector<4x8x8xf32>
    %c0_22 = arith.constant 0 : index
    %c0_23 = arith.constant 0 : index
    %c0_24 = arith.constant 0 : index
    %39 = vector.load %arg6[%c0_22, %c0_23, %c0_24] : memref<4x32x8xf32, #tpu.memory_space<vmem>>, vector<4x32x8xf32>
    "tpu.trace_start"() <{level = 10 : i32, message = "hsd,hde->hse"}> : () -> ()
    %cst_25 = arith.constant dense<0.000000e+00> : vector<4x8x8xf32>
    %40 = tpu.matmul %33, %39, %cst_25 {dimension_numbers = #tpu.dot_dimension_numbers<[2], [1], [1], [2], [0, 0, 0, 1, 1, 2], [0], [0]>} : vector<4x8x32xf32>, vector<4x32x8xf32>, vector<4x8x8xf32> -> vector<4x8x8xf32>
    "tpu.trace_stop"() : () -> ()
    %c0_26 = arith.constant 0 : index
    %c0_27 = arith.constant 0 : index
    %c0_28 = arith.constant 0 : index
    %41 = vector.load %arg7[%c0_26, %c0_27, %c0_28] : memref<4x1x8xf32, #tpu.memory_space<vmem>>, vector<4x1x8xf32>
    %42 = vector.broadcast %41 : vector<4x1x8xf32> to vector<4x8x8xf32>
    %43 = arith.addf %40, %42 : vector<4x8x8xf32>
    %c0_29 = arith.constant 0 : index
    %c0_30 = arith.constant 0 : index
    %c0_31 = arith.constant 0 : index
    %44 = vector.load %arg8[%c0_29, %c0_30, %c0_31] : memref<4x32x8xf32, #tpu.memory_space<vmem>>, vector<4x32x8xf32>
    "tpu.trace_start"() <{level = 10 : i32, message = "hsd,hde->hse"}> : () -> ()
    %cst_32 = arith.constant dense<0.000000e+00> : vector<4x8x8xf32>
    %45 = tpu.matmul %33, %44, %cst_32 {dimension_numbers = #tpu.dot_dimension_numbers<[2], [1], [1], [2], [0, 0, 0, 1, 1, 2], [0], [0]>} : vector<4x8x32xf32>, vector<4x32x8xf32>, vector<4x8x8xf32> -> vector<4x8x8xf32>
    "tpu.trace_stop"() : () -> ()
    %c0_33 = arith.constant 0 : index
    %c0_34 = arith.constant 0 : index
    %c0_35 = arith.constant 0 : index
    %46 = vector.load %arg9[%c0_33, %c0_34, %c0_35] : memref<4x1x8xf32, #tpu.memory_space<vmem>>, vector<4x1x8xf32>
    %47 = vector.broadcast %46 : vector<4x1x8xf32> to vector<4x8x8xf32>
    %48 = arith.addf %45, %47 : vector<4x8x8xf32>
    "tpu.trace_start"() <{level = 10 : i32, message = "hqd,hkd->hqk"}> : () -> ()
    %cst_36 = arith.constant dense<0.000000e+00> : vector<4x8x8xf32>
    %49 = tpu.matmul %38, %43, %cst_36 {dimension_numbers = #tpu.dot_dimension_numbers<[2], [2], [1], [1], [0, 0, 0, 1, 1, 1], [0], [0]>} : vector<4x8x8xf32>, vector<4x8x8xf32>, vector<4x8x8xf32> -> vector<4x8x8xf32>
    "tpu.trace_stop"() : () -> ()
    %cst_37 = arith.constant dense<0xFF800000> : vector<4x8xf32>
    %50 = vector.multi_reduction <maximumf>, %49, %cst_37 [2] : vector<4x8x8xf32> to vector<4x8xf32>
    %51 = vector.shape_cast %50 : vector<4x8xf32> to vector<4x8x1xf32>
    %52 = vector.broadcast %51 : vector<4x8x1xf32> to vector<4x8x8xf32>
    %53 = arith.subf %49, %52 : vector<4x8x8xf32>
    %54 = math.exp %53 : vector<4x8x8xf32>
    %cst_38 = arith.constant dense<0.000000e+00> : vector<4x8xf32>
    %55 = vector.multi_reduction <add>, %54, %cst_38 [2] : vector<4x8x8xf32> to vector<4x8xf32>
    %56 = vector.shape_cast %55 : vector<4x8xf32> to vector<4x8x1xf32>
    %57 = tpu.reciprocal %56 {approx = true} : vector<4x8x1xf32> -> vector<4x8x1xf32>
    %58 = vector.broadcast %57 : vector<4x8x1xf32> to vector<4x8x8xf32>
    %59 = arith.mulf %54, %58 : vector<4x8x8xf32>
    "tpu.trace_start"() <{level = 10 : i32, message = "hqk,hkd->hqd"}> : () -> ()
    %cst_39 = arith.constant dense<0.000000e+00> : vector<4x8x8xf32>
    %60 = tpu.matmul %59, %48, %cst_39 {dimension_numbers = #tpu.dot_dimension_numbers<[2], [1], [1], [2], [0, 0, 0, 1, 1, 2], [0], [0]>} : vector<4x8x8xf32>, vector<4x8x8xf32>, vector<4x8x8xf32> -> vector<4x8x8xf32>
    "tpu.trace_stop"() : () -> ()
    %c0_40 = arith.constant 0 : index
    %c0_41 = arith.constant 0 : index
    %c0_42 = arith.constant 0 : index
    %61 = vector.load %arg10[%c0_40, %c0_41, %c0_42] : memref<4x8x32xf32, #tpu.memory_space<vmem>>, vector<4x8x32xf32>
    "tpu.trace_start"() <{level = 10 : i32, message = "hsd,hde->hse"}> : () -> ()
    %cst_43 = arith.constant dense<0.000000e+00> : vector<4x8x32xf32>
    %62 = tpu.matmul %60, %61, %cst_43 {dimension_numbers = #tpu.dot_dimension_numbers<[2], [1], [1], [2], [0, 0, 0, 1, 1, 2], [0], [0]>} : vector<4x8x8xf32>, vector<4x8x32xf32>, vector<4x8x32xf32> -> vector<4x8x32xf32>
    "tpu.trace_stop"() : () -> ()
    %63 = vector.extract_strided_slice %62 {offsets = [0, 0, 0], sizes = [1, 8, 32], strides = [1, 1, 1]} : vector<4x8x32xf32> to vector<1x8x32xf32>
    %64 = vector.shape_cast %63 : vector<1x8x32xf32> to vector<8x32xf32>
    %65 = vector.extract_strided_slice %62 {offsets = [1, 0, 0], sizes = [1, 8, 32], strides = [1, 1, 1]} : vector<4x8x32xf32> to vector<1x8x32xf32>
    %66 = vector.shape_cast %65 : vector<1x8x32xf32> to vector<8x32xf32>
    %67 = arith.addf %64, %66 : vector<8x32xf32>
    %68 = vector.extract_strided_slice %62 {offsets = [2, 0, 0], sizes = [1, 8, 32], strides = [1, 1, 1]} : vector<4x8x32xf32> to vector<1x8x32xf32>
    %69 = vector.shape_cast %68 : vector<1x8x32xf32> to vector<8x32xf32>
    %70 = arith.addf %67, %69 : vector<8x32xf32>
    %71 = vector.extract_strided_slice %62 {offsets = [3, 0, 0], sizes = [1, 8, 32], strides = [1, 1, 1]} : vector<4x8x32xf32> to vector<1x8x32xf32>
    %72 = vector.shape_cast %71 : vector<1x8x32xf32> to vector<8x32xf32>
    %73 = arith.addf %70, %72 : vector<8x32xf32>
    %74 = arith.addf %6, %73 : vector<8x32xf32>
    %c0_44 = arith.constant 0 : index
    %c0_45 = arith.constant 0 : index
    %75 = vector.load %arg11[%c0_44, %c0_45] : memref<1x32xf32, #tpu.memory_space<vmem>>, vector<1x32xf32>
    %76 = vector.broadcast %75 : vector<1x32xf32> to vector<8x32xf32>
    %77 = arith.addf %74, %76 : vector<8x32xf32>
    %c0_46 = arith.constant 0 : index
    %c0_47 = arith.constant 0 : index
    %78 = vector.load %arg14[%c0_46, %c0_47] : memref<1x32xf32, #tpu.memory_space<vmem>>, vector<1x32xf32>
    %c0_48 = arith.constant 0 : index
    %c0_49 = arith.constant 0 : index
    %79 = vector.load %arg15[%c0_48, %c0_49] : memref<1x32xf32, #tpu.memory_space<vmem>>, vector<1x32xf32>
    %cst_50 = arith.constant dense<0.000000e+00> : vector<8xf32>
    %80 = vector.multi_reduction <add>, %77, %cst_50 [1] : vector<8x32xf32> to vector<8xf32>
    %81 = vector.shape_cast %80 : vector<8xf32> to vector<8x1xf32>
    %cst_51 = arith.constant 3.200000e+01 : f32
    %82 = vector.broadcast %cst_51 : f32 to vector<8x1xf32>
    %83 = arith.divf %81, %82 : vector<8x1xf32>
    %84 = vector.broadcast %83 : vector<8x1xf32> to vector<8x32xf32>
    %85 = arith.subf %77, %84 : vector<8x32xf32>
    %86 = arith.mulf %85, %85 : vector<8x32xf32>
    %cst_52 = arith.constant dense<0.000000e+00> : vector<8xf32>
    %87 = vector.multi_reduction <add>, %86, %cst_52 [1] : vector<8x32xf32> to vector<8xf32>
    %88 = vector.shape_cast %87 : vector<8xf32> to vector<8x1xf32>
    %cst_53 = arith.constant 3.200000e+01 : f32
    %89 = vector.broadcast %cst_53 : f32 to vector<8x1xf32>
    %90 = arith.divf %88, %89 : vector<8x1xf32>
    %91 = vector.broadcast %83 : vector<8x1xf32> to vector<8x32xf32>
    %92 = arith.subf %77, %91 : vector<8x32xf32>
    %cst_54 = arith.constant 9.99999974E-6 : f32
    %93 = vector.broadcast %cst_54 : f32 to vector<8x1xf32>
    %94 = arith.addf %90, %93 : vector<8x1xf32>
    %95 = math.rsqrt %94 : vector<8x1xf32>
    %96 = vector.broadcast %95 : vector<8x1xf32> to vector<8x32xf32>
    %97 = arith.mulf %92, %96 : vector<8x32xf32>
    %98 = vector.broadcast %78 : vector<1x32xf32> to vector<8x32xf32>
    %99 = arith.mulf %97, %98 : vector<8x32xf32>
    %100 = vector.broadcast %79 : vector<1x32xf32> to vector<8x32xf32>
    %101 = arith.addf %99, %100 : vector<8x32xf32>
    %c0_55 = arith.constant 0 : index
    %c0_56 = arith.constant 0 : index
    %102 = vector.load %arg16[%c0_55, %c0_56] : memref<32x32xf32, #tpu.memory_space<vmem>>, vector<32x32xf32>
    %cst_57 = arith.constant dense<0.000000e+00> : vector<8x32xf32>
    %103 = tpu.matmul %101, %102, %cst_57 {dimension_numbers = #tpu.dot_dimension_numbers<[1], [0], [0], [1], [0, 0, 1, 1], [], []>} : vector<8x32xf32>, vector<32x32xf32>, vector<8x32xf32> -> vector<8x32xf32>
    %c0_58 = arith.constant 0 : index
    %c0_59 = arith.constant 0 : index
    %104 = vector.load %arg17[%c0_58, %c0_59] : memref<1x32xf32, #tpu.memory_space<vmem>>, vector<1x32xf32>
    %105 = vector.broadcast %104 : vector<1x32xf32> to vector<8x32xf32>
    %106 = arith.addf %103, %105 : vector<8x32xf32>
    %cst_60 = arith.constant 0.000000e+00 : f32
    %107 = vector.broadcast %cst_60 : f32 to vector<8x32xf32>
    %108 = arith.maximumf %106, %107 : vector<8x32xf32>
    %c0_61 = arith.constant 0 : index
    %c0_62 = arith.constant 0 : index
    %109 = vector.load %arg18[%c0_61, %c0_62] : memref<32x32xf32, #tpu.memory_space<vmem>>, vector<32x32xf32>
    %cst_63 = arith.constant dense<0.000000e+00> : vector<8x32xf32>
    %110 = tpu.matmul %108, %109, %cst_63 {dimension_numbers = #tpu.dot_dimension_numbers<[1], [0], [0], [1], [0, 0, 1, 1], [], []>} : vector<8x32xf32>, vector<32x32xf32>, vector<8x32xf32> -> vector<8x32xf32>
    %c0_64 = arith.constant 0 : index
    %c0_65 = arith.constant 0 : index
    %111 = vector.load %arg19[%c0_64, %c0_65] : memref<1x32xf32, #tpu.memory_space<vmem>>, vector<1x32xf32>
    %112 = vector.broadcast %111 : vector<1x32xf32> to vector<8x32xf32>
    %113 = arith.addf %110, %112 : vector<8x32xf32>
    %114 = arith.addf %77, %113 : vector<8x32xf32>
    %c0_66 = arith.constant 0 : index
    %c0_67 = arith.constant 0 : index
    %115 = vector.load %arg20[%c0_66, %c0_67] : memref<32x32xf32, #tpu.memory_space<vmem>>, vector<32x32xf32>
    %cst_68 = arith.constant dense<0.000000e+00> : vector<8x32xf32>
    %116 = tpu.matmul %114, %115, %cst_68 {dimension_numbers = #tpu.dot_dimension_numbers<[1], [0], [0], [1], [0, 0, 1, 1], [], []>} : vector<8x32xf32>, vector<32x32xf32>, vector<8x32xf32> -> vector<8x32xf32>
    %c0_69 = arith.constant 0 : index
    %c0_70 = arith.constant 0 : index
    %117 = vector.load %arg21[%c0_69, %c0_70] : memref<1x32xf32, #tpu.memory_space<vmem>>, vector<1x32xf32>
    %118 = vector.broadcast %117 : vector<1x32xf32> to vector<8x32xf32>
    %119 = arith.addf %116, %118 : vector<8x32xf32>
    %cst_71 = arith.constant 0.000000e+00 : f32
    %120 = vector.broadcast %cst_71 : f32 to vector<8x32xf32>
    %121 = arith.maximumf %119, %120 : vector<8x32xf32>
    %c0_72 = arith.constant 0 : index
    %c0_73 = arith.constant 0 : index
    %122 = vector.load %arg22[%c0_72, %c0_73] : memref<32x32xf32, #tpu.memory_space<vmem>>, vector<32x32xf32>
    %cst_74 = arith.constant dense<0.000000e+00> : vector<8x32xf32>
    %123 = tpu.matmul %121, %122, %cst_74 {dimension_numbers = #tpu.dot_dimension_numbers<[1], [0], [0], [1], [0, 0, 1, 1], [], []>} : vector<8x32xf32>, vector<32x32xf32>, vector<8x32xf32> -> vector<8x32xf32>
    %c0_75 = arith.constant 0 : index
    %c0_76 = arith.constant 0 : index
    %124 = vector.load %arg23[%c0_75, %c0_76] : memref<1x32xf32, #tpu.memory_space<vmem>>, vector<1x32xf32>
    %125 = vector.broadcast %124 : vector<1x32xf32> to vector<8x32xf32>
    %126 = arith.addf %123, %125 : vector<8x32xf32>
    %cst_77 = arith.constant 0.000000e+00 : f32
    %127 = vector.broadcast %cst_77 : f32 to vector<8x32xf32>
    %128 = arith.maximumf %126, %127 : vector<8x32xf32>
    %c0_78 = arith.constant 0 : index
    %c0_79 = arith.constant 0 : index
    %c0_80 = arith.constant 0 : index
    %129 = vector.load %arg24[%c0_78, %c0_79, %c0_80] : memref<1x1x32xf32, #tpu.memory_space<vmem>>, vector<1x1x32xf32>
    %130 = vector.shape_cast %128 : vector<8x32xf32> to vector<1x8x32xf32>
    "tpu.trace_start"() <{level = 10 : i32, message = "bec,bsc->bes"}> : () -> ()
    %cst_81 = arith.constant dense<0.000000e+00> : vector<1x1x8xf32>
    %131 = tpu.matmul %129, %130, %cst_81 {dimension_numbers = #tpu.dot_dimension_numbers<[2], [2], [1], [1], [0, 0, 0, 1, 1, 1], [0], [0]>} : vector<1x1x32xf32>, vector<1x8x32xf32>, vector<1x1x8xf32> -> vector<1x1x8xf32>
    "tpu.trace_stop"() : () -> ()
    %132 = vector.shape_cast %131 : vector<1x1x8xf32> to vector<1x8xf32>
    %c0_82 = arith.constant 0 : index
    %c0_83 = arith.constant 0 : index
    %133 = vector.load %arg25[%c0_82, %c0_83] : memref<1x1xf32, #tpu.memory_space<vmem>>, vector<1x1xf32>
    %134 = vector.broadcast %133 : vector<1x1xf32> to vector<1x8xf32>
    %135 = arith.addf %132, %134 : vector<1x8xf32>
    %cst_84 = arith.constant 0.000000e+00 : f32
    %136 = vector.broadcast %cst_84 : f32 to vector<1x8xf32>
    %137 = arith.subf %136, %135 : vector<1x8xf32>
    %138 = math.exp %137 : vector<1x8xf32>
    %cst_85 = arith.constant 1.000000e+00 : f32
    %139 = vector.broadcast %cst_85 : f32 to vector<1x8xf32>
    %140 = arith.addf %139, %138 : vector<1x8xf32>
    %141 = tpu.reciprocal %140 {approx = true} : vector<1x8xf32> -> vector<1x8xf32>
    %c0_86 = arith.constant 0 : index
    %c0_87 = arith.constant 0 : index
    %c0_88 = arith.constant 0 : index
    %142 = vector.load %arg26[%c0_86, %c0_87, %c0_88] : memref<1x1x8xf32, #tpu.memory_space<vmem>>, vector<1x1x8xf32>
    %143 = vector.shape_cast %142 : vector<1x1x8xf32> to vector<1x8xf32>
    %144 = vector.shape_cast %141 : vector<1x8xf32> to vector<1x1x8xf32>
    tpu.vector_store %arg26[%c0_86, %c0_87, %c0_88], %144 {strides = array<i32>} : memref<1x1x8xf32, #tpu.memory_space<vmem>>, vector<1x1x8xf32>,
    return
  }
  func.func @transform_0(%arg0: i32) -> (i32, i32, i32) {
    %c0_i32 = arith.constant 0 : i32
    %c0_i32_0 = arith.constant 0 : i32
    %c0_i32_1 = arith.constant 0 : i32
    return %arg0, %c0_i32, %c0_i32_0 : i32, i32, i32
  }
  func.func @transform_1(%arg0: i32) -> (i32, i32) {
    %c0_i32 = arith.constant 0 : i32
    %c0_i32_0 = arith.constant 0 : i32
    %c0_i32_1 = arith.constant 0 : i32
    return %c0_i32, %c0_i32_0 : i32, i32
  }
  func.func @transform_2(%arg0: i32) -> (i32, i32) {
    %c0_i32 = arith.constant 0 : i32
    %c0_i32_0 = arith.constant 0 : i32
    %c0_i32_1 = arith.constant 0 : i32
    return %c0_i32, %c0_i32_0 : i32, i32
  }
  func.func @transform_3(%arg0: i32) -> (i32, i32, i32) {
    %c0_i32 = arith.constant 0 : i32
    %c0_i32_0 = arith.constant 0 : i32
    %c0_i32_1 = arith.constant 0 : i32
    %c0_i32_2 = arith.constant 0 : i32
    return %c0_i32, %c0_i32_0, %c0_i32_1 : i32, i32, i32
  }
  func.func @transform_4(%arg0: i32) -> (i32, i32, i32) {
    %c0_i32 = arith.constant 0 : i32
    %c0_i32_0 = arith.constant 0 : i32
    %c0_i32_1 = arith.constant 0 : i32
    %c0_i32_2 = arith.constant 0 : i32
    return %c0_i32, %c0_i32_0, %c0_i32_1 : i32, i32, i32
  }
  func.func @transform_5(%arg0: i32) -> (i32, i32, i32) {
    %c0_i32 = arith.constant 0 : i32
    %c0_i32_0 = arith.constant 0 : i32
    %c0_i32_1 = arith.constant 0 : i32
    %c0_i32_2 = arith.constant 0 : i32
    return %c0_i32, %c0_i32_0, %c0_i32_1 : i32, i32, i32
  }
  func.func @transform_6(%arg0: i32) -> (i32, i32, i32) {
    %c0_i32 = arith.constant 0 : i32
    %c0_i32_0 = arith.constant 0 : i32
    %c0_i32_1 = arith.constant 0 : i32
    %c0_i32_2 = arith.constant 0 : i32
    return %c0_i32, %c0_i32_0, %c0_i32_1 : i32, i32, i32
  }
  func.func @transform_7(%arg0: i32) -> (i32, i32, i32) {
    %c0_i32 = arith.constant 0 : i32
    %c0_i32_0 = arith.constant 0 : i32
    %c0_i32_1 = arith.constant 0 : i32
    %c0_i32_2 = arith.constant 0 : i32
    return %c0_i32, %c0_i32_0, %c0_i32_1 : i32, i32, i32
  }
  func.func @transform_8(%arg0: i32) -> (i32, i32, i32) {
    %c0_i32 = arith.constant 0 : i32
    %c0_i32_0 = arith.constant 0 : i32
    %c0_i32_1 = arith.constant 0 : i32
    %c0_i32_2 = arith.constant 0 : i32
    return %c0_i32, %c0_i32_0, %c0_i32_1 : i32, i32, i32
  }
  func.func @transform_9(%arg0: i32) -> (i32, i32, i32) {
    %c0_i32 = arith.constant 0 : i32
    %c0_i32_0 = arith.constant 0 : i32
    %c0_i32_1 = arith.constant 0 : i32
    %c0_i32_2 = arith.constant 0 : i32
    return %c0_i32, %c0_i32_0, %c0_i32_1 : i32, i32, i32
  }
  func.func @transform_10(%arg0: i32) -> (i32, i32) {
    %c0_i32 = arith.constant 0 : i32
    %c0_i32_0 = arith.constant 0 : i32
    %c0_i32_1 = arith.constant 0 : i32
    return %c0_i32, %c0_i32_0 : i32, i32
  }
  func.func @transform_11(%arg0: i32) -> (i32, i32) {
    %c0_i32 = arith.constant 0 : i32
    %c0_i32_0 = arith.constant 0 : i32
    %c0_i32_1 = arith.constant 0 : i32
    return %c0_i32, %c0_i32_0 : i32, i32
  }
  func.func @transform_12(%arg0: i32) -> (i32, i32) {
    %c0_i32 = arith.constant 0 : i32
    %c0_i32_0 = arith.constant 0 : i32
    %c0_i32_1 = arith.constant 0 : i32
    return %c0_i32, %c0_i32_0 : i32, i32
  }
  func.func @transform_13(%arg0: i32) -> (i32, i32) {
    %c0_i32 = arith.constant 0 : i32
    %c0_i32_0 = arith.constant 0 : i32
    %c0_i32_1 = arith.constant 0 : i32
    return %c0_i32, %c0_i32_0 : i32, i32
  }
  func.func @transform_14(%arg0: i32) -> (i32, i32) {
    %c0_i32 = arith.constant 0 : i32
    %c0_i32_0 = arith.constant 0 : i32
    %c0_i32_1 = arith.constant 0 : i32
    return %c0_i32, %c0_i32_0 : i32, i32
  }
  func.func @transform_15(%arg0: i32) -> (i32, i32) {
    %c0_i32 = arith.constant 0 : i32
    %c0_i32_0 = arith.constant 0 : i32
    %c0_i32_1 = arith.constant 0 : i32
    return %c0_i32, %c0_i32_0 : i32, i32
  }
  func.func @transform_16(%arg0: i32) -> (i32, i32) {
    %c0_i32 = arith.constant 0 : i32
    %c0_i32_0 = arith.constant 0 : i32
    %c0_i32_1 = arith.constant 0 : i32
    return %c0_i32, %c0_i32_0 : i32, i32
  }
  func.func @transform_17(%arg0: i32) -> (i32, i32) {
    %c0_i32 = arith.constant 0 : i32
    %c0_i32_0 = arith.constant 0 : i32
    %c0_i32_1 = arith.constant 0 : i32
    return %c0_i32, %c0_i32_0 : i32, i32
  }
  func.func @transform_18(%arg0: i32) -> (i32, i32) {
    %c0_i32 = arith.constant 0 : i32
    %c0_i32_0 = arith.constant 0 : i32
    %c0_i32_1 = arith.constant 0 : i32
    return %c0_i32, %c0_i32_0 : i32, i32
  }
  func.func @transform_19(%arg0: i32) -> (i32, i32) {
    %c0_i32 = arith.constant 0 : i32
    %c0_i32_0 = arith.constant 0 : i32
    %c0_i32_1 = arith.constant 0 : i32
    return %c0_i32, %c0_i32_0 : i32, i32
  }
  func.func @transform_20(%arg0: i32) -> (i32, i32) {
    %c0_i32 = arith.constant 0 : i32
    %c0_i32_0 = arith.constant 0 : i32
    %c0_i32_1 = arith.constant 0 : i32
    return %c0_i32, %c0_i32_0 : i32, i32
  }
  func.func @transform_21(%arg0: i32) -> (i32, i32) {
    %c0_i32 = arith.constant 0 : i32
    %c0_i32_0 = arith.constant 0 : i32
    %c0_i32_1 = arith.constant 0 : i32
    return %c0_i32, %c0_i32_0 : i32, i32
  }
  func.func @transform_22(%arg0: i32) -> (i32, i32) {
    %c0_i32 = arith.constant 0 : i32
    %c0_i32_0 = arith.constant 0 : i32
    %c0_i32_1 = arith.constant 0 : i32
    return %c0_i32, %c0_i32_0 : i32, i32
  }
  func.func @transform_23(%arg0: i32) -> (i32, i32, i32) {
    %c0_i32 = arith.constant 0 : i32
    %c0_i32_0 = arith.constant 0 : i32
    %c0_i32_1 = arith.constant 0 : i32
    %c0_i32_2 = arith.constant 0 : i32
    return %c0_i32, %c0_i32_0, %c0_i32_1 : i32, i32, i32
  }
  func.func @transform_24(%arg0: i32) -> (i32, i32) {
    %c0_i32 = arith.constant 0 : i32
    %c0_i32_0 = arith.constant 0 : i32
    %c0_i32_1 = arith.constant 0 : i32
    return %c0_i32, %c0_i32_0 : i32, i32
  }
  func.func @transform_25(%arg0: i32) -> (i32, i32, i32) {
    %c0_i32 = arith.constant 0 : i32
    %c0_i32_0 = arith.constant 0 : i32
    %c0_i32_1 = arith.constant 0 : i32
    return %arg0, %c0_i32, %c0_i32_0 : i32, i32, i32
  }
}

</mosaic_0001>

<llo_original>
// kernel: tpu_custom_call.1
$region0: #{tpu_custom_call.1}
  #allocation0 [shape = 'u32[]', space=smem, size = 0x4, offset = 0x4, fixed_abs, tag = 'smem constant byte address 0x4 - core index']
  #allocation1 [shape = 'u32[144,128]{1,0:T(1,128)}', space=vmem, size = 0x12000, scoped, tag = 'internal scratch']
  #allocation2 [shape = 'f32[1,1]{1,0:T(1,128)S(1)}', space=vmem, size = 0x200, scoped, tag = 'scoped memory for tpu_custom_call.1']
  %s0 = inlined_call_operand.vmem [shape: f32[2,8,16], index: 0, kind: input, shape index: {}]
  %s1 = inlined_call_operand.vmem [shape: f32[16,32], index: 1, kind: input, shape index: {}]
  %s2 = inlined_call_operand.vmem [shape: f32[1,32], index: 2, kind: input, shape index: {}]
  %s3 = inlined_call_operand.vmem [shape: f32[4,32,8], index: 3, kind: input, shape index: {}]
  %s4 = inlined_call_operand.vmem [shape: f32[4,1,8], index: 4, kind: input, shape index: {}]
  %s5 = inlined_call_operand.vmem [shape: f32[4,32,8], index: 5, kind: input, shape index: {}]
  %s6 = inlined_call_operand.vmem [shape: f32[4,1,8], index: 6, kind: input, shape index: {}]
  %s7 = inlined_call_operand.vmem [shape: f32[4,32,8], index: 7, kind: input, shape index: {}]
  %s8 = inlined_call_operand.vmem [shape: f32[4,1,8], index: 8, kind: input, shape index: {}]
  %s9 = inlined_call_operand.vmem [shape: f32[4,8,32], index: 9, kind: input, shape index: {}]
  %s10 = inlined_call_operand.vmem [shape: f32[1,32], index: 10, kind: input, shape index: {}]
  %s11 = inlined_call_operand.vmem [shape: f32[1,32], index: 11, kind: input, shape index: {}]
  %s12 = inlined_call_operand.vmem [shape: f32[1,32], index: 12, kind: input, shape index: {}]
  %s13 = inlined_call_operand.vmem [shape: f32[1,32], index: 13, kind: input, shape index: {}]
  %s14 = inlined_call_operand.vmem [shape: f32[1,32], index: 14, kind: input, shape index: {}]
  %s15 = inlined_call_operand.vmem [shape: f32[32,32], index: 15, kind: input, shape index: {}]
  %s16 = inlined_call_operand.vmem [shape: f32[1,32], index: 16, kind: input, shape index: {}]
  %s17 = inlined_call_operand.vmem [shape: f32[32,32], index: 17, kind: input, shape index: {}]
  %s18 = inlined_call_operand.vmem [shape: f32[1,32], index: 18, kind: input, shape index: {}]
  %s19 = inlined_call_operand.vmem [shape: f32[32,32], index: 19, kind: input, shape index: {}]
  %s20 = inlined_call_operand.vmem [shape: f32[1,32], index: 20, kind: input, shape index: {}]
  %s21 = inlined_call_operand.vmem [shape: f32[32,32], index: 21, kind: input, shape index: {}]
  %s22 = inlined_call_operand.vmem [shape: f32[1,32], index: 22, kind: input, shape index: {}]
  %s23 = inlined_call_operand.vmem [shape: f32[1,1,32], index: 23, kind: input, shape index: {}]
  %s24 = inlined_call_operand.<no memory space> [shape: f32[1,1], index: 24, kind: input, shape index: {}]
  %s25 = inlined_call_operand.hbm [shape: f32[2,1,8], index: 25, kind: output, shape index: {}]
  %s26 = sld [smem:[#allocation0]]
  $region133: #{tpu_custom_call.1} parent=0
    _
  %s28 = ssub.s32 1, %s26
  %s29 = scalar_select 0, %s28, %s26
  %v30 = vstv %s24
  %31 = vst [vmem:[#allocation2] sm:$0x1] %v30
  $region1: #{tpu_custom_call.1} parent=0
    #allocation3 [shape = 'u8[1024]{0}', space=vmem, size = 0x400, scoped, tag = 'output window, operand 0']
    #allocation4 [shape = 's32[2]{0}', space=sflag, size = 0x8, scoped, tag = 'scoped memory for tpu_custom_call.1']
    %32 = vsyncpa [#allocation4], 0
    %s33 = scalar_lea.sflag [#allocation4], 1
    %34 = vsyncpa %s33, 0
    loop: start=0, step=1, limit=4
    $region2: #{tpu_custom_call.1} parent=1 // loop_pre_header
      _
    $region3: #{tpu_custom_call.1} parent=1 // loop_header
      %s36 = sphi 0, %s40
      %p37 = scmp.ge.s32.totalorder %s36, 4
      %s46 = sphi 0, %s48
      %s49 = sphi 0, %s46
      %s50 = sphi 0, %s49
      %s66 = sphi 0, %s50
      %s70 = sphi 0, %s70
      %s72 = sphi 0, %s70
      %s73 = sphi 0, %s72
      %s87 = sphi 0, %s73
      %s91 = sphi 0, %s91
      %s93 = sphi 0, %s91
      %s94 = sphi 0, %s93
      %s108 = sphi 0, %s94
      %s112 = sphi 0, %s112
      %s114 = sphi 0, %s112
      %s115 = sphi 0, %s114
      %s129 = sphi 0, %s115
      %s133 = sphi 0, %s133
      %s135 = sphi 0, %s133
      %s136 = sphi 0, %s135
      %s150 = sphi 0, %s136
      %s154 = sphi 0, %s154
      %s156 = sphi 0, %s154
      %s157 = sphi 0, %s156
      %s171 = sphi 0, %s157
      %s175 = sphi 0, %s175
      %s177 = sphi 0, %s175
      %s178 = sphi 0, %s177
      %s192 = sphi 0, %s178
      %s196 = sphi 0, %s196
      %s198 = sphi 0, %s196
      %s199 = sphi 0, %s198
      %s213 = sphi 0, %s199
      %s217 = sphi 0, %s217
      %s219 = sphi 0, %s217
      %s220 = sphi 0, %s219
      %s234 = sphi 0, %s220
      %s238 = sphi 0, %s238
      %s240 = sphi 0, %s238
      %s241 = sphi 0, %s240
      %s255 = sphi 0, %s241
      %s259 = sphi 0, %s259
      %s261 = sphi 0, %s259
      %s262 = sphi 0, %s261
      %s276 = sphi 0, %s262
      %s280 = sphi 0, %s280
      %s282 = sphi 0, %s280
      %s283 = sphi 0, %s282
      %s297 = sphi 0, %s283
      %s301 = sphi 0, %s301
      %s303 = sphi 0, %s301
      %s304 = sphi 0, %s303
      %s318 = sphi 0, %s304
      %s322 = sphi 0, %s322
      %s324 = sphi 0, %s322
      %s325 = sphi 0, %s324
      %s339 = sphi 0, %s325
      %s343 = sphi 0, %s343
      %s345 = sphi 0, %s343
      %s346 = sphi 0, %s345
      %s360 = sphi 0, %s346
      %s364 = sphi 0, %s364
      %s366 = sphi 0, %s364
      %s367 = sphi 0, %s366
      %s381 = sphi 0, %s367
      %s385 = sphi 0, %s385
      %s387 = sphi 0, %s385
      %s388 = sphi 0, %s387
      %s402 = sphi 0, %s388
      %s406 = sphi 0, %s406
      %s408 = sphi 0, %s406
      %s409 = sphi 0, %s408
      %s423 = sphi 0, %s409
      %s427 = sphi 0, %s427
      %s429 = sphi 0, %s427
      %s430 = sphi 0, %s429
      %s444 = sphi 0, %s430
      %s448 = sphi 0, %s448
      %s450 = sphi 0, %s448
      %s451 = sphi 0, %s450
      %s465 = sphi 0, %s451
      %s469 = sphi 0, %s469
      %s471 = sphi 0, %s469
      %s472 = sphi 0, %s471
      %s486 = sphi 0, %s472
      %s490 = sphi 0, %s490
      %s492 = sphi 0, %s490
      %s493 = sphi 0, %s492
      %s507 = sphi 0, %s493
      %s511 = sphi 0, %s511
      %s513 = sphi 0, %s511
      %s514 = sphi 0, %s513
      %s528 = sphi 0, %s514
      %s532 = sphi 0, %s532
      %s534 = sphi 0, %s532
      %s535 = sphi 0, %s534
      %s549 = sphi 0, %s535
      %s553 = sphi 0, %s553
      %s555 = sphi 0, %s553
      %s556 = sphi 0, %s555
      %s570 = sphi 0, %s556
      %s576 = sphi 0, %s578
      %s579 = sphi 0, %s576
      %s580 = sphi 0, %s579
      %s596 = sphi 0, %s580
    $region4: #{tpu_custom_call.1} parent=1 // loop_header_branch
      %39 = sbr.rel (%p37) target = $region8
    $region5: #{tpu_custom_call.1} parent=1 // loop_body
      %s41 = ssub.s32 %s36, 1
      %s42 = ssub.s32 %s36, 2
      %s43 = sadd.s32 %s36, 1
      %s44 = ssub.s32 %s36, %s43
      %p45 = scmp.eq.s32.totalorder %s44, 0
      %s47 = sadd.s32 %s46, 1
      %s48 = scalar_select %p45, %s46, %s47
      %p51 = pneg %p45
      %p52 = scmp.eq.s32.totalorder %s36, 1
      %p53 = por %p51, %p52
      %p54 = scmp.ne.s32.totalorder %s46, %s49
      %p55 = scmp.eq.s32.totalorder %s36, 0
      %p56 = por %p54, %p55
      %p57 = scmp.ne.s32.totalorder %s46, %s49
      %p58 = scmp.eq.s32.totalorder %s41, 1
      %p59 = por %p57, %p58
      %p60 = scmp.ne.s32.totalorder %s49, %s50
      %p61 = scmp.eq.s32.totalorder %s41, 0
      %p62 = por %p60, %p61
      %p63 = scmp.ne.s32.totalorder %s49, %s50
      %p64 = scmp.eq.s32.totalorder %s42, 1
      %p65 = por %p63, %p64
      %p67 = scmp.ne.s32.totalorder %s50, %s66
      %p68 = scmp.eq.s32.totalorder %s42, 0
      %p69 = por %p67, %p68
      %s71 = sadd.s32 %s70, 1
      %p74 = scmp.eq.s32.totalorder %s36, 1
      %p75 = scmp.ne.s32.totalorder %s70, %s72
      %p76 = scmp.eq.s32.totalorder %s36, 0
      %p77 = por %p75, %p76
      %p78 = scmp.ne.s32.totalorder %s70, %s72
      %p79 = scmp.eq.s32.totalorder %s41, 1
      %p80 = por %p78, %p79
      %p81 = scmp.ne.s32.totalorder %s72, %s73
      %p82 = scmp.eq.s32.totalorder %s41, 0
      %p83 = por %p81, %p82
      %p84 = scmp.ne.s32.totalorder %s72, %s73
      %p85 = scmp.eq.s32.totalorder %s42, 1
      %p86 = por %p84, %p85
      %p88 = scmp.ne.s32.totalorder %s73, %s87
      %p89 = scmp.eq.s32.totalorder %s42, 0
      %p90 = por %p88, %p89
      %s92 = sadd.s32 %s91, 1
      %p95 = scmp.eq.s32.totalorder %s36, 1
      %p96 = scmp.ne.s32.totalorder %s91, %s93
      %p97 = scmp.eq.s32.totalorder %s36, 0
      %p98 = por %p96, %p97
      %p99 = scmp.ne.s32.totalorder %s91, %s93
      %p100 = scmp.eq.s32.totalorder %s41, 1
      %p101 = por %p99, %p100
      %p102 = scmp.ne.s32.totalorder %s93, %s94
      %p103 = scmp.eq.s32.totalorder %s41, 0
      %p104 = por %p102, %p103
      %p105 = scmp.ne.s32.totalorder %s93, %s94
      %p106 = scmp.eq.s32.totalorder %s42, 1
      %p107 = por %p105, %p106
      %p109 = scmp.ne.s32.totalorder %s94, %s108
      %p110 = scmp.eq.s32.totalorder %s42, 0
      %p111 = por %p109, %p110
      %s113 = sadd.s32 %s112, 1
      %p116 = scmp.eq.s32.totalorder %s36, 1
      %p117 = scmp.ne.s32.totalorder %s112, %s114
      %p118 = scmp.eq.s32.totalorder %s36, 0
      %p119 = por %p117, %p118
      %p120 = scmp.ne.s32.totalorder %s112, %s114
      %p121 = scmp.eq.s32.totalorder %s41, 1
      %p122 = por %p120, %p121
      %p123 = scmp.ne.s32.totalorder %s114, %s115
      %p124 = scmp.eq.s32.totalorder %s41, 0
      %p125 = por %p123, %p124
      %p126 = scmp.ne.s32.totalorder %s114, %s115
      %p127 = scmp.eq.s32.totalorder %s42, 1
      %p128 = por %p126, %p127
      %p130 = scmp.ne.s32.totalorder %s115, %s129
      %p131 = scmp.eq.s32.totalorder %s42, 0
      %p132 = por %p130, %p131
      %s134 = sadd.s32 %s133, 1
      %p137 = scmp.eq.s32.totalorder %s36, 1
      %p138 = scmp.ne.s32.totalorder %s133, %s135
      %p139 = scmp.eq.s32.totalorder %s36, 0
      %p140 = por %p138, %p139
      %p141 = scmp.ne.s32.totalorder %s133, %s135
      %p142 = scmp.eq.s32.totalorder %s41, 1
      %p143 = por %p141, %p142
      %p144 = scmp.ne.s32.totalorder %s135, %s136
      %p145 = scmp.eq.s32.totalorder %s41, 0
      %p146 = por %p144, %p145
      %p147 = scmp.ne.s32.totalorder %s135, %s136
      %p148 = scmp.eq.s32.totalorder %s42, 1
      %p149 = por %p147, %p148
      %p151 = scmp.ne.s32.totalorder %s136, %s150
      %p152 = scmp.eq.s32.totalorder %s42, 0
      %p153 = por %p151, %p152
      %s155 = sadd.s32 %s154, 1
      %p158 = scmp.eq.s32.totalorder %s36, 1
      %p159 = scmp.ne.s32.totalorder %s154, %s156
      %p160 = scmp.eq.s32.totalorder %s36, 0
      %p161 = por %p159, %p160
      %p162 = scmp.ne.s32.totalorder %s154, %s156
      %p163 = scmp.eq.s32.totalorder %s41, 1
      %p164 = por %p162, %p163
      %p165 = scmp.ne.s32.totalorder %s156, %s157
      %p166 = scmp.eq.s32.totalorder %s41, 0
      %p167 = por %p165, %p166
      %p168 = scmp.ne.s32.totalorder %s156, %s157
      %p169 = scmp.eq.s32.totalorder %s42, 1
      %p170 = por %p168, %p169
      %p172 = scmp.ne.s32.totalorder %s157, %s171
      %p173 = scmp.eq.s32.totalorder %s42, 0
      %p174 = por %p172, %p173
      %s176 = sadd.s32 %s175, 1
      %p179 = scmp.eq.s32.totalorder %s36, 1
      %p180 = scmp.ne.s32.totalorder %s175, %s177
      %p181 = scmp.eq.s32.totalorder %s36, 0
      %p182 = por %p180, %p181
      %p183 = scmp.ne.s32.totalorder %s175, %s177
      %p184 = scmp.eq.s32.totalorder %s41, 1
      %p185 = por %p183, %p184
      %p186 = scmp.ne.s32.totalorder %s177, %s178
      %p187 = scmp.eq.s32.totalorder %s41, 0
      %p188 = por %p186, %p187
      %p189 = scmp.ne.s32.totalorder %s177, %s178
      %p190 = scmp.eq.s32.totalorder %s42, 1
      %p191 = por %p189, %p190
      %p193 = scmp.ne.s32.totalorder %s178, %s192
      %p194 = scmp.eq.s32.totalorder %s42, 0
      %p195 = por %p193, %p194
      %s197 = sadd.s32 %s196, 1
      %p200 = scmp.eq.s32.totalorder %s36, 1
      %p201 = scmp.ne.s32.totalorder %s196, %s198
      %p202 = scmp.eq.s32.totalorder %s36, 0
      %p203 = por %p201, %p202
      %p204 = scmp.ne.s32.totalorder %s196, %s198
      %p205 = scmp.eq.s32.totalorder %s41, 1
      %p206 = por %p204, %p205
      %p207 = scmp.ne.s32.totalorder %s198, %s199
      %p208 = scmp.eq.s32.totalorder %s41, 0
      %p209 = por %p207, %p208
      %p210 = scmp.ne.s32.totalorder %s198, %s199
      %p211 = scmp.eq.s32.totalorder %s42, 1
      %p212 = por %p210, %p211
      %p214 = scmp.ne.s32.totalorder %s199, %s213
      %p215 = scmp.eq.s32.totalorder %s42, 0
      %p216 = por %p214, %p215
      %s218 = sadd.s32 %s217, 1
      %p221 = scmp.eq.s32.totalorder %s36, 1
      %p222 = scmp.ne.s32.totalorder %s217, %s219
      %p223 = scmp.eq.s32.totalorder %s36, 0
      %p224 = por %p222, %p223
      %p225 = scmp.ne.s32.totalorder %s217, %s219
      %p226 = scmp.eq.s32.totalorder %s41, 1
      %p227 = por %p225, %p226
      %p228 = scmp.ne.s32.totalorder %s219, %s220
      %p229 = scmp.eq.s32.totalorder %s41, 0
      %p230 = por %p228, %p229
      %p231 = scmp.ne.s32.totalorder %s219, %s220
      %p232 = scmp.eq.s32.totalorder %s42, 1
      %p233 = por %p231, %p232
      %p235 = scmp.ne.s32.totalorder %s220, %s234
      %p236 = scmp.eq.s32.totalorder %s42, 0
      %p237 = por %p235, %p236
      %s239 = sadd.s32 %s238, 1
      %p242 = scmp.eq.s32.totalorder %s36, 1
      %p243 = scmp.ne.s32.totalorder %s238, %s240
      %p244 = scmp.eq.s32.totalorder %s36, 0
      %p245 = por %p243, %p244
      %p246 = scmp.ne.s32.totalorder %s238, %s240
      %p247 = scmp.eq.s32.totalorder %s41, 1
      %p248 = por %p246, %p247
      %p249 = scmp.ne.s32.totalorder %s240, %s241
      %p250 = scmp.eq.s32.totalorder %s41, 0
      %p251 = por %p249, %p250
      %p252 = scmp.ne.s32.totalorder %s240, %s241
      %p253 = scmp.eq.s32.totalorder %s42, 1
      %p254 = por %p252, %p253
      %p256 = scmp.ne.s32.totalorder %s241, %s255
      %p257 = scmp.eq.s32.totalorder %s42, 0
      %p258 = por %p256, %p257
      %s260 = sadd.s32 %s259, 1
      %p263 = scmp.eq.s32.totalorder %s36, 1
      %p264 = scmp.ne.s32.totalorder %s259, %s261
      %p265 = scmp.eq.s32.totalorder %s36, 0
      %p266 = por %p264, %p265
      %p267 = scmp.ne.s32.totalorder %s259, %s261
      %p268 = scmp.eq.s32.totalorder %s41, 1
      %p269 = por %p267, %p268
      %p270 = scmp.ne.s32.totalorder %s261, %s262
      %p271 = scmp.eq.s32.totalorder %s41, 0
      %p272 = por %p270, %p271
      %p273 = scmp.ne.s32.totalorder %s261, %s262
      %p274 = scmp.eq.s32.totalorder %s42, 1
      %p275 = por %p273, %p274
      %p277 = scmp.ne.s32.totalorder %s262, %s276
      %p278 = scmp.eq.s32.totalorder %s42, 0
      %p279 = por %p277, %p278
      %s281 = sadd.s32 %s280, 1
      %p284 = scmp.eq.s32.totalorder %s36, 1
      %p285 = scmp.ne.s32.totalorder %s280, %s282
      %p286 = scmp.eq.s32.totalorder %s36, 0
      %p287 = por %p285, %p286
      %p288 = scmp.ne.s32.totalorder %s280, %s282
      %p289 = scmp.eq.s32.totalorder %s41, 1
      %p290 = por %p288, %p289
      %p291 = scmp.ne.s32.totalorder %s282, %s283
      %p292 = scmp.eq.s32.totalorder %s41, 0
      %p293 = por %p291, %p292
      %p294 = scmp.ne.s32.totalorder %s282, %s283
      %p295 = scmp.eq.s32.totalorder %s42, 1
      %p296 = por %p294, %p295
      %p298 = scmp.ne.s32.totalorder %s283, %s297
      %p299 = scmp.eq.s32.totalorder %s42, 0
      %p300 = por %p298, %p299
      %s302 = sadd.s32 %s301, 1
      %p305 = scmp.eq.s32.totalorder %s36, 1
      %p306 = scmp.ne.s32.totalorder %s301, %s303
      %p307 = scmp.eq.s32.totalorder %s36, 0
      %p308 = por %p306, %p307
      %p309 = scmp.ne.s32.totalorder %s301, %s303
      %p310 = scmp.eq.s32.totalorder %s41, 1
      %p311 = por %p309, %p310
      %p312 = scmp.ne.s32.totalorder %s303, %s304
      %p313 = scmp.eq.s32.totalorder %s41, 0
      %p314 = por %p312, %p313
      %p315 = scmp.ne.s32.totalorder %s303, %s304
      %p316 = scmp.eq.s32.totalorder %s42, 1
      %p317 = por %p315, %p316
      %p319 = scmp.ne.s32.totalorder %s304, %s318
      %p320 = scmp.eq.s32.totalorder %s42, 0
      %p321 = por %p319, %p320
      %s323 = sadd.s32 %s322, 1
      %p326 = scmp.eq.s32.totalorder %s36, 1
      %p327 = scmp.ne.s32.totalorder %s322, %s324
      %p328 = scmp.eq.s32.totalorder %s36, 0
      %p329 = por %p327, %p328
      %p330 = scmp.ne.s32.totalorder %s322, %s324
      %p331 = scmp.eq.s32.totalorder %s41, 1
      %p332 = por %p330, %p331
      %p333 = scmp.ne.s32.totalorder %s324, %s325
      %p334 = scmp.eq.s32.totalorder %s41, 0
      %p335 = por %p333, %p334
      %p336 = scmp.ne.s32.totalorder %s324, %s325
      %p337 = scmp.eq.s32.totalorder %s42, 1
      %p338 = por %p336, %p337
      %p340 = scmp.ne.s32.totalorder %s325, %s339
      %p341 = scmp.eq.s32.totalorder %s42, 0
      %p342 = por %p340, %p341
      %s344 = sadd.s32 %s343, 1
      %p347 = scmp.eq.s32.totalorder %s36, 1
      %p348 = scmp.ne.s32.totalorder %s343, %s345
      %p349 = scmp.eq.s32.totalorder %s36, 0
      %p350 = por %p348, %p349
      %p351 = scmp.ne.s32.totalorder %s343, %s345
      %p352 = scmp.eq.s32.totalorder %s41, 1
      %p353 = por %p351, %p352
      %p354 = scmp.ne.s32.totalorder %s345, %s346
      %p355 = scmp.eq.s32.totalorder %s41, 0
      %p356 = por %p354, %p355
      %p357 = scmp.ne.s32.totalorder %s345, %s346
      %p358 = scmp.eq.s32.totalorder %s42, 1
      %p359 = por %p357, %p358
      %p361 = scmp.ne.s32.totalorder %s346, %s360
      %p362 = scmp.eq.s32.totalorder %s42, 0
      %p363 = por %p361, %p362
      %s365 = sadd.s32 %s364, 1
      %p368 = scmp.eq.s32.totalorder %s36, 1
      %p369 = scmp.ne.s32.totalorder %s364, %s366
      %p370 = scmp.eq.s32.totalorder %s36, 0
      %p371 = por %p369, %p370
      %p372 = scmp.ne.s32.totalorder %s364, %s366
      %p373 = scmp.eq.s32.totalorder %s41, 1
      %p374 = por %p372, %p373
      %p375 = scmp.ne.s32.totalorder %s366, %s367
      %p376 = scmp.eq.s32.totalorder %s41, 0
      %p377 = por %p375, %p376
      %p378 = scmp.ne.s32.totalorder %s366, %s367
      %p379 = scmp.eq.s32.totalorder %s42, 1
      %p380 = por %p378, %p379
      %p382 = scmp.ne.s32.totalorder %s367, %s381
      %p383 = scmp.eq.s32.totalorder %s42, 0
      %p384 = por %p382, %p383
      %s386 = sadd.s32 %s385, 1
      %p389 = scmp.eq.s32.totalorder %s36, 1
      %p390 = scmp.ne.s32.totalorder %s385, %s387
      %p391 = scmp.eq.s32.totalorder %s36, 0
      %p392 = por %p390, %p391
      %p393 = scmp.ne.s32.totalorder %s385, %s387
      %p394 = scmp.eq.s32.totalorder %s41, 1
      %p395 = por %p393, %p394
      %p396 = scmp.ne.s32.totalorder %s387, %s388
      %p397 = scmp.eq.s32.totalorder %s41, 0
      %p398 = por %p396, %p397
      %p399 = scmp.ne.s32.totalorder %s387, %s388
      %p400 = scmp.eq.s32.totalorder %s42, 1
      %p401 = por %p399, %p400
      %p403 = scmp.ne.s32.totalorder %s388, %s402
      %p404 = scmp.eq.s32.totalorder %s42, 0
      %p405 = por %p403, %p404
      %s407 = sadd.s32 %s406, 1
      %p410 = scmp.eq.s32.totalorder %s36, 1
      %p411 = scmp.ne.s32.totalorder %s406, %s408
      %p412 = scmp.eq.s32.totalorder %s36, 0
      %p413 = por %p411, %p412
      %p414 = scmp.ne.s32.totalorder %s406, %s408
      %p415 = scmp.eq.s32.totalorder %s41, 1
      %p416 = por %p414, %p415
      %p417 = scmp.ne.s32.totalorder %s408, %s409
      %p418 = scmp.eq.s32.totalorder %s41, 0
      %p419 = por %p417, %p418
      %p420 = scmp.ne.s32.totalorder %s408, %s409
      %p421 = scmp.eq.s32.totalorder %s42, 1
      %p422 = por %p420, %p421
      %p424 = scmp.ne.s32.totalorder %s409, %s423
      %p425 = scmp.eq.s32.totalorder %s42, 0
      %p426 = por %p424, %p425
      %s428 = sadd.s32 %s427, 1
      %p431 = scmp.eq.s32.totalorder %s36, 1
      %p432 = scmp.ne.s32.totalorder %s427, %s429
      %p433 = scmp.eq.s32.totalorder %s36, 0
      %p434 = por %p432, %p433
      %p435 = scmp.ne.s32.totalorder %s427, %s429
      %p436 = scmp.eq.s32.totalorder %s41, 1
      %p437 = por %p435, %p436
      %p438 = scmp.ne.s32.totalorder %s429, %s430
      %p439 = scmp.eq.s32.totalorder %s41, 0
      %p440 = por %p438, %p439
      %p441 = scmp.ne.s32.totalorder %s429, %s430
      %p442 = scmp.eq.s32.totalorder %s42, 1
      %p443 = por %p441, %p442
      %p445 = scmp.ne.s32.totalorder %s430, %s444
      %p446 = scmp.eq.s32.totalorder %s42, 0
      %p447 = por %p445, %p446
      %s449 = sadd.s32 %s448, 1
      %p452 = scmp.eq.s32.totalorder %s36, 1
      %p453 = scmp.ne.s32.totalorder %s448, %s450
      %p454 = scmp.eq.s32.totalorder %s36, 0
      %p455 = por %p453, %p454
      %p456 = scmp.ne.s32.totalorder %s448, %s450
      %p457 = scmp.eq.s32.totalorder %s41, 1
      %p458 = por %p456, %p457
      %p459 = scmp.ne.s32.totalorder %s450, %s451
      %p460 = scmp.eq.s32.totalorder %s41, 0
      %p461 = por %p459, %p460
      %p462 = scmp.ne.s32.totalorder %s450, %s451
      %p463 = scmp.eq.s32.totalorder %s42, 1
      %p464 = por %p462, %p463
      %p466 = scmp.ne.s32.totalorder %s451, %s465
      %p467 = scmp.eq.s32.totalorder %s42, 0
      %p468 = por %p466, %p467
      %s470 = sadd.s32 %s469, 1
      %p473 = scmp.eq.s32.totalorder %s36, 1
      %p474 = scmp.ne.s32.totalorder %s469, %s471
      %p475 = scmp.eq.s32.totalorder %s36, 0
      %p476 = por %p474, %p475
      %p477 = scmp.ne.s32.totalorder %s469, %s471
      %p478 = scmp.eq.s32.totalorder %s41, 1
      %p479 = por %p477, %p478
      %p480 = scmp.ne.s32.totalorder %s471, %s472
      %p481 = scmp.eq.s32.totalorder %s41, 0
      %p482 = por %p480, %p481
      %p483 = scmp.ne.s32.totalorder %s471, %s472
      %p484 = scmp.eq.s32.totalorder %s42, 1
      %p485 = por %p483, %p484
      %p487 = scmp.ne.s32.totalorder %s472, %s486
      %p488 = scmp.eq.s32.totalorder %s42, 0
      %p489 = por %p487, %p488
      %s491 = sadd.s32 %s490, 1
      %p494 = scmp.eq.s32.totalorder %s36, 1
      %p495 = scmp.ne.s32.totalorder %s490, %s492
      %p496 = scmp.eq.s32.totalorder %s36, 0
      %p497 = por %p495, %p496
      %p498 = scmp.ne.s32.totalorder %s490, %s492
      %p499 = scmp.eq.s32.totalorder %s41, 1
      %p500 = por %p498, %p499
      %p501 = scmp.ne.s32.totalorder %s492, %s493
      %p502 = scmp.eq.s32.totalorder %s41, 0
      %p503 = por %p501, %p502
      %p504 = scmp.ne.s32.totalorder %s492, %s493
      %p505 = scmp.eq.s32.totalorder %s42, 1
      %p506 = por %p504, %p505
      %p508 = scmp.ne.s32.totalorder %s493, %s507
      %p509 = scmp.eq.s32.totalorder %s42, 0
      %p510 = por %p508, %p509
      %s512 = sadd.s32 %s511, 1
      %p515 = scmp.eq.s32.totalorder %s36, 1
      %p516 = scmp.ne.s32.totalorder %s511, %s513
      %p517 = scmp.eq.s32.totalorder %s36, 0
      %p518 = por %p516, %p517
      %p519 = scmp.ne.s32.totalorder %s511, %s513
      %p520 = scmp.eq.s32.totalorder %s41, 1
      %p521 = por %p519, %p520
      %p522 = scmp.ne.s32.totalorder %s513, %s514
      %p523 = scmp.eq.s32.totalorder %s41, 0
      %p524 = por %p522, %p523
      %p525 = scmp.ne.s32.totalorder %s513, %s514
      %p526 = scmp.eq.s32.totalorder %s42, 1
      %p527 = por %p525, %p526
      %p529 = scmp.ne.s32.totalorder %s514, %s528
      %p530 = scmp.eq.s32.totalorder %s42, 0
      %p531 = por %p529, %p530
      %s533 = sadd.s32 %s532, 1
      %p536 = scmp.eq.s32.totalorder %s36, 1
      %p537 = scmp.ne.s32.totalorder %s532, %s534
      %p538 = scmp.eq.s32.totalorder %s36, 0
      %p539 = por %p537, %p538
      %p540 = scmp.ne.s32.totalorder %s532, %s534
      %p541 = scmp.eq.s32.totalorder %s41, 1
      %p542 = por %p540, %p541
      %p543 = scmp.ne.s32.totalorder %s534, %s535
      %p544 = scmp.eq.s32.totalorder %s41, 0
      %p545 = por %p543, %p544
      %p546 = scmp.ne.s32.totalorder %s534, %s535
      %p547 = scmp.eq.s32.totalorder %s42, 1
      %p548 = por %p546, %p547
      %p550 = scmp.ne.s32.totalorder %s535, %s549
      %p551 = scmp.eq.s32.totalorder %s42, 0
      %p552 = por %p550, %p551
      %s554 = sadd.s32 %s553, 1
      %p557 = scmp.eq.s32.totalorder %s36, 1
      %p558 = scmp.ne.s32.totalorder %s553, %s555
      %p559 = scmp.eq.s32.totalorder %s36, 0
      %p560 = por %p558, %p559
      %p561 = scmp.ne.s32.totalorder %s553, %s555
      %p562 = scmp.eq.s32.totalorder %s41, 1
      %p563 = por %p561, %p562
      %p564 = scmp.ne.s32.totalorder %s555, %s556
      %p565 = scmp.eq.s32.totalorder %s41, 0
      %p566 = por %p564, %p565
      %p567 = scmp.ne.s32.totalorder %s555, %s556
      %p568 = scmp.eq.s32.totalorder %s42, 1
      %p569 = por %p567, %p568
      %p571 = scmp.ne.s32.totalorder %s556, %s570
      %p572 = scmp.eq.s32.totalorder %s42, 0
      %p573 = por %p571, %p572
      %s574 = ssub.s32 %s36, %s43
      %p575 = scmp.eq.s32.totalorder %s574, 0
      %s577 = sadd.s32 %s576, 1
      %s578 = scalar_select %p575, %s576, %s577
      %p581 = pneg %p575
      %p582 = scmp.eq.s32.totalorder %s36, 1
      %p583 = por %p581, %p582
      %p584 = scmp.ne.s32.totalorder %s576, %s579
      %p585 = scmp.eq.s32.totalorder %s36, 0
      %p586 = por %p584, %p585
      %p587 = scmp.ne.s32.totalorder %s576, %s579
      %p588 = scmp.eq.s32.totalorder %s41, 1
      %p589 = por %p587, %p588
      %p590 = scmp.ne.s32.totalorder %s579, %s580
      %p591 = scmp.eq.s32.totalorder %s41, 0
      %p592 = por %p590, %p591
      %p593 = scmp.ne.s32.totalorder %s579, %s580
      %p594 = scmp.eq.s32.totalorder %s42, 1
      %p595 = por %p593, %p594
      %p597 = scmp.ne.s32.totalorder %s580, %s596
      %p598 = scmp.eq.s32.totalorder %s42, 0
      %p599 = por %p597, %p598
      %p600 = scmp.le.s32.totalorder 1, %s36
      %p601 = scmp.lt.s32.totalorder %s36, 3
      %p602 = pnand %p600, %p601
      %p603 = pneg %p602
      // Predicated region
      $region9: #{tpu_custom_call.1} parent=5 // pred_check
        _
      $region10: #{tpu_custom_call.1} parent=5 // pred_check_branch
        %605 = sbr.rel (%p602) target = $region12
      $region11: #{tpu_custom_call.1} parent=5 // pred_region
        %s606 = ssub.s32 %s36, 1
        // Predicated region
        $region13: #{tpu_custom_call.1} parent=11 // pred_check
          %p607 = pneg %p83
        $region14: #{tpu_custom_call.1} parent=11 // pred_check_branch
          %609 = sbr.rel (%p607) target = $region16
        $region15: #{tpu_custom_call.1} parent=11 // pred_region
          _
        $region16: #{tpu_custom_call.1} parent=11 // pred_fallthru
          _
        // Predicated region
        $region17: #{tpu_custom_call.1} parent=11 // pred_check
          %p610 = pneg %p104
        $region18: #{tpu_custom_call.1} parent=11 // pred_check_branch
          %612 = sbr.rel (%p610) target = $region20
        $region19: #{tpu_custom_call.1} parent=11 // pred_region
          _
        $region20: #{tpu_custom_call.1} parent=11 // pred_fallthru
          _
        // Predicated region
        $region21: #{tpu_custom_call.1} parent=11 // pred_check
          %p613 = pneg %p125
        $region22: #{tpu_custom_call.1} parent=11 // pred_check_branch
          %615 = sbr.rel (%p613) target = $region24
        $region23: #{tpu_custom_call.1} parent=11 // pred_region
          _
        $region24: #{tpu_custom_call.1} parent=11 // pred_fallthru
          _
        // Predicated region
        $region25: #{tpu_custom_call.1} parent=11 // pred_check
          %p616 = pneg %p146
        $region26: #{tpu_custom_call.1} parent=11 // pred_check_branch
          %618 = sbr.rel (%p616) target = $region28
        $region27: #{tpu_custom_call.1} parent=11 // pred_region
          _
        $region28: #{tpu_custom_call.1} parent=11 // pred_fallthru
          _
        // Predicated region
        $region29: #{tpu_custom_call.1} parent=11 // pred_check
          %p619 = pneg %p167
        $region30: #{tpu_custom_call.1} parent=11 // pred_check_branch
          %621 = sbr.rel (%p619) target = $region32
        $region31: #{tpu_custom_call.1} parent=11 // pred_region
          _
        $region32: #{tpu_custom_call.1} parent=11 // pred_fallthru
          _
        // Predicated region
        $region33: #{tpu_custom_call.1} parent=11 // pred_check
          %p622 = pneg %p188
        $region34: #{tpu_custom_call.1} parent=11 // pred_check_branch
          %624 = sbr.rel (%p622) target = $region36
        $region35: #{tpu_custom_call.1} parent=11 // pred_region
          _
        $region36: #{tpu_custom_call.1} parent=11 // pred_fallthru
          _
        // Predicated region
        $region37: #{tpu_custom_call.1} parent=11 // pred_check
          %p625 = pneg %p209
        $region38: #{tpu_custom_call.1} parent=11 // pred_check_branch
          %627 = sbr.rel (%p625) target = $region40
        $region39: #{tpu_custom_call.1} parent=11 // pred_region
          _
        $region40: #{tpu_custom_call.1} parent=11 // pred_fallthru
          _
        // Predicated region
        $region41: #{tpu_custom_call.1} parent=11 // pred_check
          %p628 = pneg %p230
        $region42: #{tpu_custom_call.1} parent=11 // pred_check_branch
          %630 = sbr.rel (%p628) target = $region44
        $region43: #{tpu_custom_call.1} parent=11 // pred_region
          _
        $region44: #{tpu_custom_call.1} parent=11 // pred_fallthru
          _
        // Predicated region
        $region45: #{tpu_custom_call.1} parent=11 // pred_check
          %p631 = pneg %p251
        $region46: #{tpu_custom_call.1} parent=11 // pred_check_branch
          %633 = sbr.rel (%p631) target = $region48
        $region47: #{tpu_custom_call.1} parent=11 // pred_region
          _
        $region48: #{tpu_custom_call.1} parent=11 // pred_fallthru
          _
        // Predicated region
        $region49: #{tpu_custom_call.1} parent=11 // pred_check
          %p634 = pneg %p272
        $region50: #{tpu_custom_call.1} parent=11 // pred_check_branch
          %636 = sbr.rel (%p634) target = $region52
        $region51: #{tpu_custom_call.1} parent=11 // pred_region
          _
        $region52: #{tpu_custom_call.1} parent=11 // pred_fallthru
          _
        // Predicated region
        $region53: #{tpu_custom_call.1} parent=11 // pred_check
          %p637 = pneg %p293
        $region54: #{tpu_custom_call.1} parent=11 // pred_check_branch
          %639 = sbr.rel (%p637) target = $region56
        $region55: #{tpu_custom_call.1} parent=11 // pred_region
          _
        $region56: #{tpu_custom_call.1} parent=11 // pred_fallthru
          _
        // Predicated region
        $region57: #{tpu_custom_call.1} parent=11 // pred_check
          %p640 = pneg %p314
        $region58: #{tpu_custom_call.1} parent=11 // pred_check_branch
          %642 = sbr.rel (%p640) target = $region60
        $region59: #{tpu_custom_call.1} parent=11 // pred_region
          _
        $region60: #{tpu_custom_call.1} parent=11 // pred_fallthru
          _
        // Predicated region
        $region61: #{tpu_custom_call.1} parent=11 // pred_check
          %p643 = pneg %p335
        $region62: #{tpu_custom_call.1} parent=11 // pred_check_branch
          %645 = sbr.rel (%p643) target = $region64
        $region63: #{tpu_custom_call.1} parent=11 // pred_region
          _
        $region64: #{tpu_custom_call.1} parent=11 // pred_fallthru
          _
        // Predicated region
        $region65: #{tpu_custom_call.1} parent=11 // pred_check
          %p646 = pneg %p356
        $region66: #{tpu_custom_call.1} parent=11 // pred_check_branch
          %648 = sbr.rel (%p646) target = $region68
        $region67: #{tpu_custom_call.1} parent=11 // pred_region
          _
        $region68: #{tpu_custom_call.1} parent=11 // pred_fallthru
          _
        // Predicated region
        $region69: #{tpu_custom_call.1} parent=11 // pred_check
          %p649 = pneg %p377
        $region70: #{tpu_custom_call.1} parent=11 // pred_check_branch
          %651 = sbr.rel (%p649) target = $region72
        $region71: #{tpu_custom_call.1} parent=11 // pred_region
          _
        $region72: #{tpu_custom_call.1} parent=11 // pred_fallthru
          _
        // Predicated region
        $region73: #{tpu_custom_call.1} parent=11 // pred_check
          %p652 = pneg %p398
        $region74: #{tpu_custom_call.1} parent=11 // pred_check_branch
          %654 = sbr.rel (%p652) target = $region76
        $region75: #{tpu_custom_call.1} parent=11 // pred_region
          _
        $region76: #{tpu_custom_call.1} parent=11 // pred_fallthru
          _
        // Predicated region
        $region77: #{tpu_custom_call.1} parent=11 // pred_check
          %p655 = pneg %p419
        $region78: #{tpu_custom_call.1} parent=11 // pred_check_branch
          %657 = sbr.rel (%p655) target = $region80
        $region79: #{tpu_custom_call.1} parent=11 // pred_region
          _
        $region80: #{tpu_custom_call.1} parent=11 // pred_fallthru
          _
        // Predicated region
        $region81: #{tpu_custom_call.1} parent=11 // pred_check
          %p658 = pneg %p440
        $region82: #{tpu_custom_call.1} parent=11 // pred_check_branch
          %660 = sbr.rel (%p658) target = $region84
        $region83: #{tpu_custom_call.1} parent=11 // pred_region
          _
        $region84: #{tpu_custom_call.1} parent=11 // pred_fallthru
          _
        // Predicated region
        $region85: #{tpu_custom_call.1} parent=11 // pred_check
          %p661 = pneg %p461
        $region86: #{tpu_custom_call.1} parent=11 // pred_check_branch
          %663 = sbr.rel (%p661) target = $region88
        $region87: #{tpu_custom_call.1} parent=11 // pred_region
          _
        $region88: #{tpu_custom_call.1} parent=11 // pred_fallthru
          _
        // Predicated region
        $region89: #{tpu_custom_call.1} parent=11 // pred_check
          %p664 = pneg %p482
        $region90: #{tpu_custom_call.1} parent=11 // pred_check_branch
          %666 = sbr.rel (%p664) target = $region92
        $region91: #{tpu_custom_call.1} parent=11 // pred_region
          _
        $region92: #{tpu_custom_call.1} parent=11 // pred_fallthru
          _
        // Predicated region
        $region93: #{tpu_custom_call.1} parent=11 // pred_check
          %p667 = pneg %p503
        $region94: #{tpu_custom_call.1} parent=11 // pred_check_branch
          %669 = sbr.rel (%p667) target = $region96
        $region95: #{tpu_custom_call.1} parent=11 // pred_region
          _
        $region96: #{tpu_custom_call.1} parent=11 // pred_fallthru
          _
        // Predicated region
        $region97: #{tpu_custom_call.1} parent=11 // pred_check
          %p670 = pneg %p524
        $region98: #{tpu_custom_call.1} parent=11 // pred_check_branch
          %672 = sbr.rel (%p670) target = $region100
        $region99: #{tpu_custom_call.1} parent=11 // pred_region
          _
        $region100: #{tpu_custom_call.1} parent=11 // pred_fallthru
          _
        // Predicated region
        $region101: #{tpu_custom_call.1} parent=11 // pred_check
          %p673 = pneg %p545
        $region102: #{tpu_custom_call.1} parent=11 // pred_check_branch
          %675 = sbr.rel (%p673) target = $region104
        $region103: #{tpu_custom_call.1} parent=11 // pred_region
          _
        $region104: #{tpu_custom_call.1} parent=11 // pred_fallthru
          _
        // Predicated region
        $region105: #{tpu_custom_call.1} parent=11 // pred_check
          %p676 = pneg %p566
        $region106: #{tpu_custom_call.1} parent=11 // pred_check_branch
          %678 = sbr.rel (%p676) target = $region108
        $region107: #{tpu_custom_call.1} parent=11 // pred_region
          _
        $region108: #{tpu_custom_call.1} parent=11 // pred_fallthru
          _
      $region12: #{tpu_custom_call.1} parent=5 // pred_fallthru
        _
      %p679 = scmp.lt.s32.totalorder %s36, 2
      // Predicated region
      $region109: #{tpu_custom_call.1} parent=5 // pred_check
        %p680 = pneg %p679
      $region110: #{tpu_custom_call.1} parent=5 // pred_check_branch
        %682 = sbr.rel (%p680) target = $region112
      $region111: #{tpu_custom_call.1} parent=5 // pred_region
        // Predicated region
        $region113: #{tpu_custom_call.1} parent=111 // pred_check
          %p683 = pneg %p56
        $region114: #{tpu_custom_call.1} parent=111 // pred_check_branch
          %685 = sbr.rel (%p683) target = $region116
        $region115: #{tpu_custom_call.1} parent=111 // pred_region
          %p686 = scmp.lt.s32.totalorder %s36, 1
          %s687 = scalar_select %p686, %s36, 1
          %s688 = smul.addr %s687, 8
          %s689 = scalar_lea.vmem %s0, %s688
        $region116: #{tpu_custom_call.1} parent=111 // pred_fallthru
          _
      $region112: #{tpu_custom_call.1} parent=5 // pred_fallthru
        _
      %p690 = scmp.le.s32.totalorder 1, %s36
      %p691 = scmp.lt.s32.totalorder %s36, 3
      %p692 = pnand %p690, %p691
      %p693 = pneg %p692
      // Predicated region
      $region117: #{tpu_custom_call.1} parent=5 // pred_check
        _
      $region118: #{tpu_custom_call.1} parent=5 // pred_check_branch
        %695 = sbr.rel (%p692) target = $region120
      $region119: #{tpu_custom_call.1} parent=5 // pred_region
        %s696 = ssub.s32 %s36, 1
        %p697 = scmp.lt.s32.totalorder %s41, 1
        %s698 = scalar_select %p697, %s41, 1
        %s699 = smul.addr %s698, 8
        %s700 = scalar_lea.vmem %s0, %s699
        %p701 = pneg %p62
        %p702 = pneg %p59
        %p703 = pneg %p83
        %p704 = pneg %p80
        %p705 = pneg %p104
        %p706 = pneg %p101
        %p707 = pneg %p125
        %p708 = pneg %p122
        %p709 = pneg %p146
        %p710 = pneg %p143
        %p711 = pneg %p167
        %p712 = pneg %p164
        %p713 = pneg %p188
        %p714 = pneg %p185
        %p715 = pneg %p209
        %p716 = pneg %p206
        %p717 = pneg %p230
        %p718 = pneg %p227
        %p719 = pneg %p251
        %p720 = pneg %p248
        %p721 = pneg %p272
        %p722 = pneg %p269
        %p723 = pneg %p293
        %p724 = pneg %p290
        %p725 = pneg %p314
        %p726 = pneg %p311
        %p727 = pneg %p335
        %p728 = pneg %p332
        %p729 = pneg %p356
        %p730 = pneg %p353
        %p731 = pneg %p377
        %p732 = pneg %p374
        %p733 = pneg %p398
        %p734 = pneg %p395
        %p735 = pneg %p419
        %p736 = pneg %p416
        %p737 = pneg %p440
        %p738 = pneg %p437
        %p739 = pneg %p461
        %p740 = pneg %p458
        %p741 = pneg %p482
        %p742 = pneg %p479
        %p743 = pneg %p503
        %p744 = pneg %p500
        %p745 = pneg %p524
        %p746 = pneg %p521
        %p747 = pneg %p545
        %p748 = pneg %p542
        %p749 = pneg %p566
        %p750 = pneg %p563
        %p751 = pneg %p592
        %p752 = pneg %p589
        %s753 = sand.u32 %s579, 1
        %s754 = scalar_lea.sflag [#allocation4], %s753
        %s755 = sand.u32 %s579, 1
        %s756 = scalar_lea.vmem [#allocation3], %s755
        %p757 = scmp.lt.s32.totalorder %s41, 1
        %s758 = scalar_select %p757, %s41, 1
        %s759 = smul.addr %s758, 8
        %s760 = scalar_lea.vmem %s0, %s759
        %v761 = vld [vmem:[%s760] sm:$0xff]
        %v762 = vld [vmem:[%s1] sm:$0xff]
        %v763 = vld [vmem:[%s1 + $0x8] sm:$0xff]
        %v764 = vld [vmem:[%s2] sm:$0x1]
        %v766 = vlaneseq
        %v767 = vshrl.u32 %v766, 7
        %v768 = vsub.s32 0, %v767
        %v769 = vrot.slane %v764, %v768
        %vm771 = vcmask 130048
        %v773 = vsel %vm771, %v761, 0
        %775 = vmatprep.subr.mxu0 0.0
        %776 = vmatpush1.msra.mxu0 0.0
        %777 = vmatprep.subr.mxu0 0.0
        %778 = vmatpush1.msra.mxu0 0.0
        %779 = vmatprep.subr.mxu0 0.0
        %780 = vmatpush1.msra.mxu0 0.0
        %781 = vmatprep.subr.mxu0 0.0
        %782 = vmatpush1.msra.mxu0 0.0
        %783 = vmatprep.subr.mxu0 0.0
        %784 = vmatpush1.msra.mxu0 0.0
        %785 = vmatprep.subr.mxu0 0.0
        %786 = vmatpush1.msra.mxu0 0.0
        %787 = vmatprep.subr.mxu0 0.0
        %788 = vmatpush1.msra.mxu0 0.0
        %789 = vmatprep.subr.mxu0 0.0
        %790 = vmatpush1.msra.mxu0 0.0
        %791 = vmatprep.subr.mxu0 0.0
        %792 = vmatpush1.msra.mxu0 0.0
        %793 = vmatprep.subr.mxu0 0.0
        %794 = vmatpush1.msra.mxu0 0.0
        %795 = vmatprep.subr.mxu0 0.0
        %796 = vmatpush1.msra.mxu0 0.0
        %797 = vmatprep.subr.mxu0 0.0
        %798 = vmatpush1.msra.mxu0 0.0
        %799 = vmatprep.subr.mxu0 0.0
        %800 = vmatpush1.msra.mxu0 0.0
        %801 = vmatprep.subr.mxu0 0.0
        %802 = vmatpush1.msra.mxu0 0.0
        %803 = vmatprep.subr.mxu0 0.0
        %804 = vmatpush1.msra.mxu0 %v763
        %805 = vmatprep.subr.mxu0 0.0
        %806 = vmatpush1.msra.mxu0 %v762
        %807 = vmatprep.subr.mxu0 0.0
        %808 = vmatpush2.msra.mxu0 0.0
        %809 = vmatprep.subr.mxu0 0.0
        %810 = vmatpush2.msra.mxu0 0.0
        %811 = vmatprep.subr.mxu0 0.0
        %812 = vmatpush2.msra.mxu0 0.0
        %813 = vmatprep.subr.mxu0 0.0
        %814 = vmatpush2.msra.mxu0 0.0
        %815 = vmatprep.subr.mxu0 0.0
        %816 = vmatpush2.msra.mxu0 0.0
        %817 = vmatprep.subr.mxu0 0.0
        %818 = vmatpush2.msra.mxu0 0.0
        %819 = vmatprep.subr.mxu0 0.0
        %820 = vmatpush2.msra.mxu0 0.0
        %821 = vmatprep.subr.mxu0 0.0
        %822 = vmatpush2.msra.mxu0 0.0
        %823 = vmatprep.subr.mxu0 0.0
        %824 = vmatpush2.msra.mxu0 0.0
        %825 = vmatprep.subr.mxu0 0.0
        %826 = vmatpush2.msra.mxu0 0.0
        %827 = vmatprep.subr.mxu0 0.0
        %828 = vmatpush2.msra.mxu0 0.0
        %829 = vmatprep.subr.mxu0 0.0
        %830 = vmatpush2.msra.mxu0 0.0
        %831 = vmatprep.subr.mxu0 0.0
        %832 = vmatpush2.msra.mxu0 0.0
        %833 = vmatprep.subr.mxu0 0.0
        %834 = vmatpush2.msra.mxu0 0.0
        %835 = vmatprep.subr.mxu0 0.0
        %836 = vmatpush2.msra.mxu0 0.0
        %837 = vmatprep.subr.mxu0 0.0
        %838 = vmatpush2.msra.mxu0 0.0
        %839 = vmatprep.mubr.f32.mxu0 0.0
        %840 = vmatmul.mubr.f32.gmra.mxu0 %v773
        %v841 = vpop.f32.mrf.mxu0
        %v842 = vadd.f32 %v769, %v841
        %v843 = vpop.f32.mrf.mxu0
        %844 = vdwg.mxu0
        %v845 = vld [vmem:[%s11] sm:$0x1]
        %v846 = vld [vmem:[%s12] sm:$0x1]
        %vm847 = vcmask 261120
        %v848 = vsel %vm847, %v842, 0.0
        %849 = vadd.xlane.f32.xlu0 %v848
        %v850 = vpop.xlane.xlu0 %849
        %v851 = vrcp.pop 32.0
        %v852 = vmul.f32 %v850, %v851
        %v853 = vsub.f32 %v842, %v852
        %v854 = vmul.f32 %v853, %v853
        %v855 = vsel %vm847, %v854, 0.0
        %856 = vadd.xlane.f32.xlu0 %v855
        %v857 = vpop.xlane.xlu0 %856
        %v858 = vmul.f32 %v857, %v851
        %v859 = vadd.f32 %v858, 1e-05
        %v860 = vrsqrt.pop %v859
        %v861 = vmul.f32 %v853, %v860
        %v863 = vlaneseq
        %v864 = vshrl.u32 %v863, 7
        %v865 = vsub.s32 0, %v864
        %v866 = vrot.slane %v845, %v865
        %v868 = vmul.f32 %v861, %v866
        %v870 = vlaneseq
        %v871 = vshrl.u32 %v870, 7
        %v872 = vsub.s32 0, %v871
        %v873 = vrot.slane %v846, %v872
        %v875 = vadd.f32 %v868, %v873
        %v876 = vld [vmem:[%s3] sm:$0xff]
        %v877 = vld [vmem:[%s3 + $0x8] sm:$0xff]
        %v878 = vld [vmem:[%s3 + $0x10] sm:$0xff]
        %v879 = vld [vmem:[%s3 + $0x18] sm:$0xff]
        %v880 = vld [vmem:[%s3 + $0x20] sm:$0xff]
        %v881 = vld [vmem:[%s3 + $0x28] sm:$0xff]
        %v882 = vld [vmem:[%s3 + $0x30] sm:$0xff]
        %v883 = vld [vmem:[%s3 + $0x38] sm:$0xff]
        %v884 = vld [vmem:[%s3 + $0x40] sm:$0xff]
        %v885 = vld [vmem:[%s3 + $0x48] sm:$0xff]
        %v886 = vld [vmem:[%s3 + $0x50] sm:$0xff]
        %v887 = vld [vmem:[%s3 + $0x58] sm:$0xff]
        %v888 = vld [vmem:[%s3 + $0x60] sm:$0xff]
        %v889 = vld [vmem:[%s3 + $0x68] sm:$0xff]
        %v890 = vld [vmem:[%s3 + $0x70] sm:$0xff]
        %v891 = vld [vmem:[%s3 + $0x78] sm:$0xff]
        %v892 = vld [vmem:[%s4] sm:$0x1]
        %v893 = vld [vmem:[%s4 + $0x1] sm:$0x1]
        %v894 = vld [vmem:[%s4 + $0x2] sm:$0x1]
        %v895 = vld [vmem:[%s4 + $0x3] sm:$0x1]
        %v900 = vlaneseq
        %v901 = vshrl.u32 %v900, 7
        %v902 = vsub.s32 0, %v901
        %v903 = vrot.slane %v892, %v902
        %v904 = vlaneseq
        %v905 = vshrl.u32 %v904, 7
        %v906 = vsub.s32 0, %v905
        %v907 = vrot.slane %v893, %v906
        %v908 = vlaneseq
        %v909 = vshrl.u32 %v908, 7
        %v910 = vsub.s32 0, %v909
        %v911 = vrot.slane %v894, %v910
        %v912 = vlaneseq
        %v913 = vshrl.u32 %v912, 7
        %v914 = vsub.s32 0, %v913
        %v915 = vrot.slane %v895, %v914
        %v921 = vsel %vm847, %v875, 0
        %923 = vmatprep.subr.mxu0 0.0
        %924 = vmatpush1.msra.mxu0 0.0
        %925 = vmatprep.subr.mxu0 0.0
        %926 = vmatpush1.msra.mxu0 0.0
        %927 = vmatprep.subr.mxu0 0.0
        %928 = vmatpush1.msra.mxu0 0.0
        %929 = vmatprep.subr.mxu0 0.0
        %930 = vmatpush1.msra.mxu0 0.0
        %931 = vmatprep.subr.mxu0 0.0
        %932 = vmatpush1.msra.mxu0 0.0
        %933 = vmatprep.subr.mxu0 0.0
        %934 = vmatpush1.msra.mxu0 0.0
        %935 = vmatprep.subr.mxu0 0.0
        %936 = vmatpush1.msra.mxu0 0.0
        %937 = vmatprep.subr.mxu0 0.0
        %938 = vmatpush1.msra.mxu0 0.0
        %939 = vmatprep.subr.mxu0 0.0
        %940 = vmatpush1.msra.mxu0 0.0
        %941 = vmatprep.subr.mxu0 0.0
        %942 = vmatpush1.msra.mxu0 0.0
        %943 = vmatprep.subr.mxu0 0.0
        %944 = vmatpush1.msra.mxu0 0.0
        %945 = vmatprep.subr.mxu0 0.0
        %946 = vmatpush1.msra.mxu0 0.0
        %947 = vmatprep.subr.mxu0 0.0
        %948 = vmatpush1.msra.mxu0 %v879
        %949 = vmatprep.subr.mxu0 0.0
        %950 = vmatpush1.msra.mxu0 %v878
        %951 = vmatprep.subr.mxu0 0.0
        %952 = vmatpush1.msra.mxu0 %v877
        %953 = vmatprep.subr.mxu0 0.0
        %954 = vmatpush1.msra.mxu0 %v876
        %955 = vmatprep.subr.mxu0 0.0
        %956 = vmatpush2.msra.mxu0 0.0
        %957 = vmatprep.subr.mxu0 0.0
        %958 = vmatpush2.msra.mxu0 0.0
        %959 = vmatprep.subr.mxu0 0.0
        %960 = vmatpush2.msra.mxu0 0.0
        %961 = vmatprep.subr.mxu0 0.0
        %962 = vmatpush2.msra.mxu0 0.0
        %963 = vmatprep.subr.mxu0 0.0
        %964 = vmatpush2.msra.mxu0 0.0
        %965 = vmatprep.subr.mxu0 0.0
        %966 = vmatpush2.msra.mxu0 0.0
        %967 = vmatprep.subr.mxu0 0.0
        %968 = vmatpush2.msra.mxu0 0.0
        %969 = vmatprep.subr.mxu0 0.0
        %970 = vmatpush2.msra.mxu0 0.0
        %971 = vmatprep.subr.mxu0 0.0
        %972 = vmatpush2.msra.mxu0 0.0
        %973 = vmatprep.subr.mxu0 0.0
        %974 = vmatpush2.msra.mxu0 0.0
        %975 = vmatprep.subr.mxu0 0.0
        %976 = vmatpush2.msra.mxu0 0.0
        %977 = vmatprep.subr.mxu0 0.0
        %978 = vmatpush2.msra.mxu0 0.0
        %979 = vmatprep.subr.mxu0 0.0
        %980 = vmatpush2.msra.mxu0 0.0
        %981 = vmatprep.subr.mxu0 0.0
        %982 = vmatpush2.msra.mxu0 0.0
        %983 = vmatprep.subr.mxu0 0.0
        %984 = vmatpush2.msra.mxu0 0.0
        %985 = vmatprep.subr.mxu0 0.0
        %986 = vmatpush2.msra.mxu0 0.0
        %987 = vmatprep.mubr.f32.mxu0 0.0
        %988 = vmatmul.mubr.f32.gmra.mxu0 %v921
        %v989 = vpop.f32.mrf.mxu0
        %v990 = vadd.f32 %v903, %v989
        %v991 = vpop.f32.mrf.mxu0
        %992 = vdwg.mxu0
        %993 = vmatprep.subr.mxu0 0.0
        %994 = vmatpush1.msra.mxu0 0.0
        %995 = vmatprep.subr.mxu0 0.0
        %996 = vmatpush1.msra.mxu0 0.0
        %997 = vmatprep.subr.mxu0 0.0
        %998 = vmatpush1.msra.mxu0 0.0
        %999 = vmatprep.subr.mxu0 0.0
        %1000 = vmatpush1.msra.mxu0 0.0
        %1001 = vmatprep.subr.mxu0 0.0
        %1002 = vmatpush1.msra.mxu0 0.0
        %1003 = vmatprep.subr.mxu0 0.0
        %1004 = vmatpush1.msra.mxu0 0.0
        %1005 = vmatprep.subr.mxu0 0.0
        %1006 = vmatpush1.msra.mxu0 0.0
        %1007 = vmatprep.subr.mxu0 0.0
        %1008 = vmatpush1.msra.mxu0 0.0
        %1009 = vmatprep.subr.mxu0 0.0
        %1010 = vmatpush1.msra.mxu0 0.0
        %1011 = vmatprep.subr.mxu0 0.0
        %1012 = vmatpush1.msra.mxu0 0.0
        %1013 = vmatprep.subr.mxu0 0.0
        %1014 = vmatpush1.msra.mxu0 0.0
        %1015 = vmatprep.subr.mxu0 0.0
        %1016 = vmatpush1.msra.mxu0 0.0
        %1017 = vmatprep.subr.mxu0 0.0
        %1018 = vmatpush1.msra.mxu0 %v883
        %1019 = vmatprep.subr.mxu0 0.0
        %1020 = vmatpush1.msra.mxu0 %v882
        %1021 = vmatprep.subr.mxu0 0.0
        %1022 = vmatpush1.msra.mxu0 %v881
        %1023 = vmatprep.subr.mxu0 0.0
        %1024 = vmatpush1.msra.mxu0 %v880
        %1025 = vmatprep.subr.mxu0 0.0
        %1026 = vmatpush2.msra.mxu0 0.0
        %1027 = vmatprep.subr.mxu0 0.0
        %1028 = vmatpush2.msra.mxu0 0.0
        %1029 = vmatprep.subr.mxu0 0.0
        %1030 = vmatpush2.msra.mxu0 0.0
        %1031 = vmatprep.subr.mxu0 0.0
        %1032 = vmatpush2.msra.mxu0 0.0
        %1033 = vmatprep.subr.mxu0 0.0
        %1034 = vmatpush2.msra.mxu0 0.0
        %1035 = vmatprep.subr.mxu0 0.0
        %1036 = vmatpush2.msra.mxu0 0.0
        %1037 = vmatprep.subr.mxu0 0.0
        %1038 = vmatpush2.msra.mxu0 0.0
        %1039 = vmatprep.subr.mxu0 0.0
        %1040 = vmatpush2.msra.mxu0 0.0
        %1041 = vmatprep.subr.mxu0 0.0
        %1042 = vmatpush2.msra.mxu0 0.0
        %1043 = vmatprep.subr.mxu0 0.0
        %1044 = vmatpush2.msra.mxu0 0.0
        %1045 = vmatprep.subr.mxu0 0.0
        %1046 = vmatpush2.msra.mxu0 0.0
        %1047 = vmatprep.subr.mxu0 0.0
        %1048 = vmatpush2.msra.mxu0 0.0
        %1049 = vmatprep.subr.mxu0 0.0
        %1050 = vmatpush2.msra.mxu0 0.0
        %1051 = vmatprep.subr.mxu0 0.0
        %1052 = vmatpush2.msra.mxu0 0.0
        %1053 = vmatprep.subr.mxu0 0.0
        %1054 = vmatpush2.msra.mxu0 0.0
        %1055 = vmatprep.subr.mxu0 0.0
        %1056 = vmatpush2.msra.mxu0 0.0
        %1057 = vmatprep.mubr.f32.mxu0 0.0
        %1058 = vmatmul.mubr.f32.gmra.mxu0 %v921
        %v1059 = vpop.f32.mrf.mxu0
        %v1060 = vadd.f32 %v907, %v1059
        %v1061 = vpop.f32.mrf.mxu0
        %1062 = vdwg.mxu0
        %1063 = vmatprep.subr.mxu0 0.0
        %1064 = vmatpush1.msra.mxu0 0.0
        %1065 = vmatprep.subr.mxu0 0.0
        %1066 = vmatpush1.msra.mxu0 0.0
        %1067 = vmatprep.subr.mxu0 0.0
        %1068 = vmatpush1.msra.mxu0 0.0
        %1069 = vmatprep.subr.mxu0 0.0
        %1070 = vmatpush1.msra.mxu0 0.0
        %1071 = vmatprep.subr.mxu0 0.0
        %1072 = vmatpush1.msra.mxu0 0.0
        %1073 = vmatprep.subr.mxu0 0.0
        %1074 = vmatpush1.msra.mxu0 0.0
        %1075 = vmatprep.subr.mxu0 0.0
        %1076 = vmatpush1.msra.mxu0 0.0
        %1077 = vmatprep.subr.mxu0 0.0
        %1078 = vmatpush1.msra.mxu0 0.0
        %1079 = vmatprep.subr.mxu0 0.0
        %1080 = vmatpush1.msra.mxu0 0.0
        %1081 = vmatprep.subr.mxu0 0.0
        %1082 = vmatpush1.msra.mxu0 0.0
        %1083 = vmatprep.subr.mxu0 0.0
        %1084 = vmatpush1.msra.mxu0 0.0
        %1085 = vmatprep.subr.mxu0 0.0
        %1086 = vmatpush1.msra.mxu0 0.0
        %1087 = vmatprep.subr.mxu0 0.0
        %1088 = vmatpush1.msra.mxu0 %v887
        %1089 = vmatprep.subr.mxu0 0.0
        %1090 = vmatpush1.msra.mxu0 %v886
        %1091 = vmatprep.subr.mxu0 0.0
        %1092 = vmatpush1.msra.mxu0 %v885
        %1093 = vmatprep.subr.mxu0 0.0
        %1094 = vmatpush1.msra.mxu0 %v884
        %1095 = vmatprep.subr.mxu0 0.0
        %1096 = vmatpush2.msra.mxu0 0.0
        %1097 = vmatprep.subr.mxu0 0.0
        %1098 = vmatpush2.msra.mxu0 0.0
        %1099 = vmatprep.subr.mxu0 0.0
        %1100 = vmatpush2.msra.mxu0 0.0
        %1101 = vmatprep.subr.mxu0 0.0
        %1102 = vmatpush2.msra.mxu0 0.0
        %1103 = vmatprep.subr.mxu0 0.0
        %1104 = vmatpush2.msra.mxu0 0.0
        %1105 = vmatprep.subr.mxu0 0.0
        %1106 = vmatpush2.msra.mxu0 0.0
        %1107 = vmatprep.subr.mxu0 0.0
        %1108 = vmatpush2.msra.mxu0 0.0
        %1109 = vmatprep.subr.mxu0 0.0
        %1110 = vmatpush2.msra.mxu0 0.0
        %1111 = vmatprep.subr.mxu0 0.0
        %1112 = vmatpush2.msra.mxu0 0.0
        %1113 = vmatprep.subr.mxu0 0.0
        %1114 = vmatpush2.msra.mxu0 0.0
        %1115 = vmatprep.subr.mxu0 0.0
        %1116 = vmatpush2.msra.mxu0 0.0
        %1117 = vmatprep.subr.mxu0 0.0
        %1118 = vmatpush2.msra.mxu0 0.0
        %1119 = vmatprep.subr.mxu0 0.0
        %1120 = vmatpush2.msra.mxu0 0.0
        %1121 = vmatprep.subr.mxu0 0.0
        %1122 = vmatpush2.msra.mxu0 0.0
        %1123 = vmatprep.subr.mxu0 0.0
        %1124 = vmatpush2.msra.mxu0 0.0
        %1125 = vmatprep.subr.mxu0 0.0
        %1126 = vmatpush2.msra.mxu0 0.0
        %1127 = vmatprep.mubr.f32.mxu0 0.0
        %1128 = vmatmul.mubr.f32.gmra.mxu0 %v921
        %v1129 = vpop.f32.mrf.mxu0
        %v1130 = vadd.f32 %v911, %v1129
        %v1131 = vpop.f32.mrf.mxu0
        %1132 = vdwg.mxu0
        %1133 = vmatprep.subr.mxu0 0.0
        %1134 = vmatpush1.msra.mxu0 0.0
        %1135 = vmatprep.subr.mxu0 0.0
        %1136 = vmatpush1.msra.mxu0 0.0
        %1137 = vmatprep.subr.mxu0 0.0
        %1138 = vmatpush1.msra.mxu0 0.0
        %1139 = vmatprep.subr.mxu0 0.0
        %1140 = vmatpush1.msra.mxu0 0.0
        %1141 = vmatprep.subr.mxu0 0.0
        %1142 = vmatpush1.msra.mxu0 0.0
        %1143 = vmatprep.subr.mxu0 0.0
        %1144 = vmatpush1.msra.mxu0 0.0
        %1145 = vmatprep.subr.mxu0 0.0
        %1146 = vmatpush1.msra.mxu0 0.0
        %1147 = vmatprep.subr.mxu0 0.0
        %1148 = vmatpush1.msra.mxu0 0.0
        %1149 = vmatprep.subr.mxu0 0.0
        %1150 = vmatpush1.msra.mxu0 0.0
        %1151 = vmatprep.subr.mxu0 0.0
        %1152 = vmatpush1.msra.mxu0 0.0
        %1153 = vmatprep.subr.mxu0 0.0
        %1154 = vmatpush1.msra.mxu0 0.0
        %1155 = vmatprep.subr.mxu0 0.0
        %1156 = vmatpush1.msra.mxu0 0.0
        %1157 = vmatprep.subr.mxu0 0.0
        %1158 = vmatpush1.msra.mxu0 %v891
        %1159 = vmatprep.subr.mxu0 0.0
        %1160 = vmatpush1.msra.mxu0 %v890
        %1161 = vmatprep.subr.mxu0 0.0
        %1162 = vmatpush1.msra.mxu0 %v889
        %1163 = vmatprep.subr.mxu0 0.0
        %1164 = vmatpush1.msra.mxu0 %v888
        %1165 = vmatprep.subr.mxu0 0.0
        %1166 = vmatpush2.msra.mxu0 0.0
        %1167 = vmatprep.subr.mxu0 0.0
        %1168 = vmatpush2.msra.mxu0 0.0
        %1169 = vmatprep.subr.mxu0 0.0
        %1170 = vmatpush2.msra.mxu0 0.0
        %1171 = vmatprep.subr.mxu0 0.0
        %1172 = vmatpush2.msra.mxu0 0.0
        %1173 = vmatprep.subr.mxu0 0.0
        %1174 = vmatpush2.msra.mxu0 0.0
        %1175 = vmatprep.subr.mxu0 0.0
        %1176 = vmatpush2.msra.mxu0 0.0
        %1177 = vmatprep.subr.mxu0 0.0
        %1178 = vmatpush2.msra.mxu0 0.0
        %1179 = vmatprep.subr.mxu0 0.0
        %1180 = vmatpush2.msra.mxu0 0.0
        %1181 = vmatprep.subr.mxu0 0.0
        %1182 = vmatpush2.msra.mxu0 0.0
        %1183 = vmatprep.subr.mxu0 0.0
        %1184 = vmatpush2.msra.mxu0 0.0
        %1185 = vmatprep.subr.mxu0 0.0
        %1186 = vmatpush2.msra.mxu0 0.0
        %1187 = vmatprep.subr.mxu0 0.0
        %1188 = vmatpush2.msra.mxu0 0.0
        %1189 = vmatprep.subr.mxu0 0.0
        %1190 = vmatpush2.msra.mxu0 0.0
        %1191 = vmatprep.subr.mxu0 0.0
        %1192 = vmatpush2.msra.mxu0 0.0
        %1193 = vmatprep.subr.mxu0 0.0
        %1194 = vmatpush2.msra.mxu0 0.0
        %1195 = vmatprep.subr.mxu0 0.0
        %1196 = vmatpush2.msra.mxu0 0.0
        %1197 = vmatprep.mubr.f32.mxu0 0.0
        %1198 = vmatmul.mubr.f32.gmra.mxu0 %v921
        %v1199 = vpop.f32.mrf.mxu0
        %v1200 = vadd.f32 %v915, %v1199
        %v1201 = vpop.f32.mrf.mxu0
        %1202 = vdwg.mxu0
        %v1203 = vld [vmem:[%s5] sm:$0xff]
        %v1204 = vld [vmem:[%s5 + $0x8] sm:$0xff]
        %v1205 = vld [vmem:[%s5 + $0x10] sm:$0xff]
        %v1206 = vld [vmem:[%s5 + $0x18] sm:$0xff]
        %v1207 = vld [vmem:[%s5 + $0x20] sm:$0xff]
        %v1208 = vld [vmem:[%s5 + $0x28] sm:$0xff]
        %v1209 = vld [vmem:[%s5 + $0x30] sm:$0xff]
        %v1210 = vld [vmem:[%s5 + $0x38] sm:$0xff]
        %v1211 = vld [vmem:[%s5 + $0x40] sm:$0xff]
        %v1212 = vld [vmem:[%s5 + $0x48] sm:$0xff]
        %v1213 = vld [vmem:[%s5 + $0x50] sm:$0xff]
        %v1214 = vld [vmem:[%s5 + $0x58] sm:$0xff]
        %v1215 = vld [vmem:[%s5 + $0x60] sm:$0xff]
        %v1216 = vld [vmem:[%s5 + $0x68] sm:$0xff]
        %v1217 = vld [vmem:[%s5 + $0x70] sm:$0xff]
        %v1218 = vld [vmem:[%s5 + $0x78] sm:$0xff]
        %v1219 = vld [vmem:[%s6] sm:$0x1]
        %v1220 = vld [vmem:[%s6 + $0x1] sm:$0x1]
        %v1221 = vld [vmem:[%s6 + $0x2] sm:$0x1]
        %v1222 = vld [vmem:[%s6 + $0x3] sm:$0x1]
        %v1227 = vlaneseq
        %v1228 = vshrl.u32 %v1227, 7
        %v1229 = vsub.s32 0, %v1228
        %v1230 = vrot.slane %v1219, %v1229
        %v1231 = vlaneseq
        %v1232 = vshrl.u32 %v1231, 7
        %v1233 = vsub.s32 0, %v1232
        %v1234 = vrot.slane %v1220, %v1233
        %v1235 = vlaneseq
        %v1236 = vshrl.u32 %v1235, 7
        %v1237 = vsub.s32 0, %v1236
        %v1238 = vrot.slane %v1221, %v1237
        %v1239 = vlaneseq
        %v1240 = vshrl.u32 %v1239, 7
        %v1241 = vsub.s32 0, %v1240
        %v1242 = vrot.slane %v1222, %v1241
        %1247 = vmatprep.subr.mxu0 0.0
        %1248 = vmatpush1.msra.mxu0 0.0
        %1249 = vmatprep.subr.mxu0 0.0
        %1250 = vmatpush1.msra.mxu0 0.0
        %1251 = vmatprep.subr.mxu0 0.0
        %1252 = vmatpush1.msra.mxu0 0.0
        %1253 = vmatprep.subr.mxu0 0.0
        %1254 = vmatpush1.msra.mxu0 0.0
        %1255 = vmatprep.subr.mxu0 0.0
        %1256 = vmatpush1.msra.mxu0 0.0
        %1257 = vmatprep.subr.mxu0 0.0
        %1258 = vmatpush1.msra.mxu0 0.0
        %1259 = vmatprep.subr.mxu0 0.0
        %1260 = vmatpush1.msra.mxu0 0.0
        %1261 = vmatprep.subr.mxu0 0.0
        %1262 = vmatpush1.msra.mxu0 0.0
        %1263 = vmatprep.subr.mxu0 0.0
        %1264 = vmatpush1.msra.mxu0 0.0
        %1265 = vmatprep.subr.mxu0 0.0
        %1266 = vmatpush1.msra.mxu0 0.0
        %1267 = vmatprep.subr.mxu0 0.0
        %1268 = vmatpush1.msra.mxu0 0.0
        %1269 = vmatprep.subr.mxu0 0.0
        %1270 = vmatpush1.msra.mxu0 0.0
        %1271 = vmatprep.subr.mxu0 0.0
        %1272 = vmatpush1.msra.mxu0 %v1206
        %1273 = vmatprep.subr.mxu0 0.0
        %1274 = vmatpush1.msra.mxu0 %v1205
        %1275 = vmatprep.subr.mxu0 0.0
        %1276 = vmatpush1.msra.mxu0 %v1204
        %1277 = vmatprep.subr.mxu0 0.0
        %1278 = vmatpush1.msra.mxu0 %v1203
        %1279 = vmatprep.subr.mxu0 0.0
        %1280 = vmatpush2.msra.mxu0 0.0
        %1281 = vmatprep.subr.mxu0 0.0
        %1282 = vmatpush2.msra.mxu0 0.0
        %1283 = vmatprep.subr.mxu0 0.0
        %1284 = vmatpush2.msra.mxu0 0.0
        %1285 = vmatprep.subr.mxu0 0.0
        %1286 = vmatpush2.msra.mxu0 0.0
        %1287 = vmatprep.subr.mxu0 0.0
        %1288 = vmatpush2.msra.mxu0 0.0
        %1289 = vmatprep.subr.mxu0 0.0
        %1290 = vmatpush2.msra.mxu0 0.0
        %1291 = vmatprep.subr.mxu0 0.0
        %1292 = vmatpush2.msra.mxu0 0.0
        %1293 = vmatprep.subr.mxu0 0.0
        %1294 = vmatpush2.msra.mxu0 0.0
        %1295 = vmatprep.subr.mxu0 0.0
        %1296 = vmatpush2.msra.mxu0 0.0
        %1297 = vmatprep.subr.mxu0 0.0
        %1298 = vmatpush2.msra.mxu0 0.0
        %1299 = vmatprep.subr.mxu0 0.0
        %1300 = vmatpush2.msra.mxu0 0.0
        %1301 = vmatprep.subr.mxu0 0.0
        %1302 = vmatpush2.msra.mxu0 0.0
        %1303 = vmatprep.subr.mxu0 0.0
        %1304 = vmatpush2.msra.mxu0 0.0
        %1305 = vmatprep.subr.mxu0 0.0
        %1306 = vmatpush2.msra.mxu0 0.0
        %1307 = vmatprep.subr.mxu0 0.0
        %1308 = vmatpush2.msra.mxu0 0.0
        %1309 = vmatprep.subr.mxu0 0.0
        %1310 = vmatpush2.msra.mxu0 0.0
        %1311 = vmatprep.mubr.f32.mxu0 0.0
        %1312 = vmatmul.mubr.f32.gmra.mxu0 %v921
        %v1313 = vpop.f32.mrf.mxu0
        %v1314 = vadd.f32 %v1230, %v1313
        %v1315 = vpop.f32.mrf.mxu0
        %1316 = vdwg.mxu0
        %1317 = vmatprep.subr.mxu0 0.0
        %1318 = vmatpush1.msra.mxu0 0.0
        %1319 = vmatprep.subr.mxu0 0.0
        %1320 = vmatpush1.msra.mxu0 0.0
        %1321 = vmatprep.subr.mxu0 0.0
        %1322 = vmatpush1.msra.mxu0 0.0
        %1323 = vmatprep.subr.mxu0 0.0
        %1324 = vmatpush1.msra.mxu0 0.0
        %1325 = vmatprep.subr.mxu0 0.0
        %1326 = vmatpush1.msra.mxu0 0.0
        %1327 = vmatprep.subr.mxu0 0.0
        %1328 = vmatpush1.msra.mxu0 0.0
        %1329 = vmatprep.subr.mxu0 0.0
        %1330 = vmatpush1.msra.mxu0 0.0
        %1331 = vmatprep.subr.mxu0 0.0
        %1332 = vmatpush1.msra.mxu0 0.0
        %1333 = vmatprep.subr.mxu0 0.0
        %1334 = vmatpush1.msra.mxu0 0.0
        %1335 = vmatprep.subr.mxu0 0.0
        %1336 = vmatpush1.msra.mxu0 0.0
        %1337 = vmatprep.subr.mxu0 0.0
        %1338 = vmatpush1.msra.mxu0 0.0
        %1339 = vmatprep.subr.mxu0 0.0
        %1340 = vmatpush1.msra.mxu0 0.0
        %1341 = vmatprep.subr.mxu0 0.0
        %1342 = vmatpush1.msra.mxu0 %v1210
        %1343 = vmatprep.subr.mxu0 0.0
        %1344 = vmatpush1.msra.mxu0 %v1209
        %1345 = vmatprep.subr.mxu0 0.0
        %1346 = vmatpush1.msra.mxu0 %v1208
        %1347 = vmatprep.subr.mxu0 0.0
        %1348 = vmatpush1.msra.mxu0 %v1207
        %1349 = vmatprep.subr.mxu0 0.0
        %1350 = vmatpush2.msra.mxu0 0.0
        %1351 = vmatprep.subr.mxu0 0.0
        %1352 = vmatpush2.msra.mxu0 0.0
        %1353 = vmatprep.subr.mxu0 0.0
        %1354 = vmatpush2.msra.mxu0 0.0
        %1355 = vmatprep.subr.mxu0 0.0
        %1356 = vmatpush2.msra.mxu0 0.0
        %1357 = vmatprep.subr.mxu0 0.0
        %1358 = vmatpush2.msra.mxu0 0.0
        %1359 = vmatprep.subr.mxu0 0.0
        %1360 = vmatpush2.msra.mxu0 0.0
        %1361 = vmatprep.subr.mxu0 0.0
        %1362 = vmatpush2.msra.mxu0 0.0
        %1363 = vmatprep.subr.mxu0 0.0
        %1364 = vmatpush2.msra.mxu0 0.0
        %1365 = vmatprep.subr.mxu0 0.0
        %1366 = vmatpush2.msra.mxu0 0.0
        %1367 = vmatprep.subr.mxu0 0.0
        %1368 = vmatpush2.msra.mxu0 0.0
        %1369 = vmatprep.subr.mxu0 0.0
        %1370 = vmatpush2.msra.mxu0 0.0
        %1371 = vmatprep.subr.mxu0 0.0
        %1372 = vmatpush2.msra.mxu0 0.0
        %1373 = vmatprep.subr.mxu0 0.0
        %1374 = vmatpush2.msra.mxu0 0.0
        %1375 = vmatprep.subr.mxu0 0.0
        %1376 = vmatpush2.msra.mxu0 0.0
        %1377 = vmatprep.subr.mxu0 0.0
        %1378 = vmatpush2.msra.mxu0 0.0
        %1379 = vmatprep.subr.mxu0 0.0
        %1380 = vmatpush2.msra.mxu0 0.0
        %1381 = vmatprep.mubr.f32.mxu0 0.0
        %1382 = vmatmul.mubr.f32.gmra.mxu0 %v921
        %v1383 = vpop.f32.mrf.mxu0
        %v1384 = vadd.f32 %v1234, %v1383
        %v1385 = vpop.f32.mrf.mxu0
        %1386 = vdwg.mxu0
        %1387 = vmatprep.subr.mxu0 0.0
        %1388 = vmatpush1.msra.mxu0 0.0
        %1389 = vmatprep.subr.mxu0 0.0
        %1390 = vmatpush1.msra.mxu0 0.0
        %1391 = vmatprep.subr.mxu0 0.0
        %1392 = vmatpush1.msra.mxu0 0.0
        %1393 = vmatprep.subr.mxu0 0.0
        %1394 = vmatpush1.msra.mxu0 0.0
        %1395 = vmatprep.subr.mxu0 0.0
        %1396 = vmatpush1.msra.mxu0 0.0
        %1397 = vmatprep.subr.mxu0 0.0
        %1398 = vmatpush1.msra.mxu0 0.0
        %1399 = vmatprep.subr.mxu0 0.0
        %1400 = vmatpush1.msra.mxu0 0.0
        %1401 = vmatprep.subr.mxu0 0.0
        %1402 = vmatpush1.msra.mxu0 0.0
        %1403 = vmatprep.subr.mxu0 0.0
        %1404 = vmatpush1.msra.mxu0 0.0
        %1405 = vmatprep.subr.mxu0 0.0
        %1406 = vmatpush1.msra.mxu0 0.0
        %1407 = vmatprep.subr.mxu0 0.0
        %1408 = vmatpush1.msra.mxu0 0.0
        %1409 = vmatprep.subr.mxu0 0.0
        %1410 = vmatpush1.msra.mxu0 0.0
        %1411 = vmatprep.subr.mxu0 0.0
        %1412 = vmatpush1.msra.mxu0 %v1214
        %1413 = vmatprep.subr.mxu0 0.0
        %1414 = vmatpush1.msra.mxu0 %v1213
        %1415 = vmatprep.subr.mxu0 0.0
        %1416 = vmatpush1.msra.mxu0 %v1212
        %1417 = vmatprep.subr.mxu0 0.0
        %1418 = vmatpush1.msra.mxu0 %v1211
        %1419 = vmatprep.subr.mxu0 0.0
        %1420 = vmatpush2.msra.mxu0 0.0
        %1421 = vmatprep.subr.mxu0 0.0
        %1422 = vmatpush2.msra.mxu0 0.0
        %1423 = vmatprep.subr.mxu0 0.0
        %1424 = vmatpush2.msra.mxu0 0.0
        %1425 = vmatprep.subr.mxu0 0.0
        %1426 = vmatpush2.msra.mxu0 0.0
        %1427 = vmatprep.subr.mxu0 0.0
        %1428 = vmatpush2.msra.mxu0 0.0
        %1429 = vmatprep.subr.mxu0 0.0
        %1430 = vmatpush2.msra.mxu0 0.0
        %1431 = vmatprep.subr.mxu0 0.0
        %1432 = vmatpush2.msra.mxu0 0.0
        %1433 = vmatprep.subr.mxu0 0.0
        %1434 = vmatpush2.msra.mxu0 0.0
        %1435 = vmatprep.subr.mxu0 0.0
        %1436 = vmatpush2.msra.mxu0 0.0
        %1437 = vmatprep.subr.mxu0 0.0
        %1438 = vmatpush2.msra.mxu0 0.0
        %1439 = vmatprep.subr.mxu0 0.0
        %1440 = vmatpush2.msra.mxu0 0.0
        %1441 = vmatprep.subr.mxu0 0.0
        %1442 = vmatpush2.msra.mxu0 0.0
        %1443 = vmatprep.subr.mxu0 0.0
        %1444 = vmatpush2.msra.mxu0 0.0
        %1445 = vmatprep.subr.mxu0 0.0
        %1446 = vmatpush2.msra.mxu0 0.0
        %1447 = vmatprep.subr.mxu0 0.0
        %1448 = vmatpush2.msra.mxu0 0.0
        %1449 = vmatprep.subr.mxu0 0.0
        %1450 = vmatpush2.msra.mxu0 0.0
        %1451 = vmatprep.mubr.f32.mxu0 0.0
        %1452 = vmatmul.mubr.f32.gmra.mxu0 %v921
        %v1453 = vpop.f32.mrf.mxu0
        %v1454 = vadd.f32 %v1238, %v1453
        %v1455 = vpop.f32.mrf.mxu0
        %1456 = vdwg.mxu0
        %1457 = vmatprep.subr.mxu0 0.0
        %1458 = vmatpush1.msra.mxu0 0.0
        %1459 = vmatprep.subr.mxu0 0.0
        %1460 = vmatpush1.msra.mxu0 0.0
        %1461 = vmatprep.subr.mxu0 0.0
        %1462 = vmatpush1.msra.mxu0 0.0
        %1463 = vmatprep.subr.mxu0 0.0
        %1464 = vmatpush1.msra.mxu0 0.0
        %1465 = vmatprep.subr.mxu0 0.0
        %1466 = vmatpush1.msra.mxu0 0.0
        %1467 = vmatprep.subr.mxu0 0.0
        %1468 = vmatpush1.msra.mxu0 0.0
        %1469 = vmatprep.subr.mxu0 0.0
        %1470 = vmatpush1.msra.mxu0 0.0
        %1471 = vmatprep.subr.mxu0 0.0
        %1472 = vmatpush1.msra.mxu0 0.0
        %1473 = vmatprep.subr.mxu0 0.0
        %1474 = vmatpush1.msra.mxu0 0.0
        %1475 = vmatprep.subr.mxu0 0.0
        %1476 = vmatpush1.msra.mxu0 0.0
        %1477 = vmatprep.subr.mxu0 0.0
        %1478 = vmatpush1.msra.mxu0 0.0
        %1479 = vmatprep.subr.mxu0 0.0
        %1480 = vmatpush1.msra.mxu0 0.0
        %1481 = vmatprep.subr.mxu0 0.0
        %1482 = vmatpush1.msra.mxu0 %v1218
        %1483 = vmatprep.subr.mxu0 0.0
        %1484 = vmatpush1.msra.mxu0 %v1217
        %1485 = vmatprep.subr.mxu0 0.0
        %1486 = vmatpush1.msra.mxu0 %v1216
        %1487 = vmatprep.subr.mxu0 0.0
        %1488 = vmatpush1.msra.mxu0 %v1215
        %1489 = vmatprep.subr.mxu0 0.0
        %1490 = vmatpush2.msra.mxu0 0.0
        %1491 = vmatprep.subr.mxu0 0.0
        %1492 = vmatpush2.msra.mxu0 0.0
        %1493 = vmatprep.subr.mxu0 0.0
        %1494 = vmatpush2.msra.mxu0 0.0
        %1495 = vmatprep.subr.mxu0 0.0
        %1496 = vmatpush2.msra.mxu0 0.0
        %1497 = vmatprep.subr.mxu0 0.0
        %1498 = vmatpush2.msra.mxu0 0.0
        %1499 = vmatprep.subr.mxu0 0.0
        %1500 = vmatpush2.msra.mxu0 0.0
        %1501 = vmatprep.subr.mxu0 0.0
        %1502 = vmatpush2.msra.mxu0 0.0
        %1503 = vmatprep.subr.mxu0 0.0
        %1504 = vmatpush2.msra.mxu0 0.0
        %1505 = vmatprep.subr.mxu0 0.0
        %1506 = vmatpush2.msra.mxu0 0.0
        %1507 = vmatprep.subr.mxu0 0.0
        %1508 = vmatpush2.msra.mxu0 0.0
        %1509 = vmatprep.subr.mxu0 0.0
        %1510 = vmatpush2.msra.mxu0 0.0
        %1511 = vmatprep.subr.mxu0 0.0
        %1512 = vmatpush2.msra.mxu0 0.0
        %1513 = vmatprep.subr.mxu0 0.0
        %1514 = vmatpush2.msra.mxu0 0.0
        %1515 = vmatprep.subr.mxu0 0.0
        %1516 = vmatpush2.msra.mxu0 0.0
        %1517 = vmatprep.subr.mxu0 0.0
        %1518 = vmatpush2.msra.mxu0 0.0
        %1519 = vmatprep.subr.mxu0 0.0
        %1520 = vmatpush2.msra.mxu0 0.0
        %1521 = vmatprep.mubr.f32.mxu0 0.0
        %1522 = vmatmul.mubr.f32.gmra.mxu0 %v921
        %v1523 = vpop.f32.mrf.mxu0
        %v1524 = vadd.f32 %v1242, %v1523
        %v1525 = vpop.f32.mrf.mxu0
        %1526 = vdwg.mxu0
        %v1527 = vld [vmem:[%s7] sm:$0xff]
        %v1528 = vld [vmem:[%s7 + $0x8] sm:$0xff]
        %v1529 = vld [vmem:[%s7 + $0x10] sm:$0xff]
        %v1530 = vld [vmem:[%s7 + $0x18] sm:$0xff]
        %v1531 = vld [vmem:[%s7 + $0x20] sm:$0xff]
        %v1532 = vld [vmem:[%s7 + $0x28] sm:$0xff]
        %v1533 = vld [vmem:[%s7 + $0x30] sm:$0xff]
        %v1534 = vld [vmem:[%s7 + $0x38] sm:$0xff]
        %v1535 = vld [vmem:[%s7 + $0x40] sm:$0xff]
        %v1536 = vld [vmem:[%s7 + $0x48] sm:$0xff]
        %v1537 = vld [vmem:[%s7 + $0x50] sm:$0xff]
        %v1538 = vld [vmem:[%s7 + $0x58] sm:$0xff]
        %v1539 = vld [vmem:[%s7 + $0x60] sm:$0xff]
        %v1540 = vld [vmem:[%s7 + $0x68] sm:$0xff]
        %v1541 = vld [vmem:[%s7 + $0x70] sm:$0xff]
        %v1542 = vld [vmem:[%s7 + $0x78] sm:$0xff]
        %v1543 = vld [vmem:[%s8] sm:$0x1]
        %v1544 = vld [vmem:[%s8 + $0x1] sm:$0x1]
        %v1545 = vld [vmem:[%s8 + $0x2] sm:$0x1]
        %v1546 = vld [vmem:[%s8 + $0x3] sm:$0x1]
        %v1551 = vlaneseq
        %v1552 = vshrl.u32 %v1551, 7
        %v1553 = vsub.s32 0, %v1552
        %v1554 = vrot.slane %v1543, %v1553
        %v1555 = vlaneseq
        %v1556 = vshrl.u32 %v1555, 7
        %v1557 = vsub.s32 0, %v1556
        %v1558 = vrot.slane %v1544, %v1557
        %v1559 = vlaneseq
        %v1560 = vshrl.u32 %v1559, 7
        %v1561 = vsub.s32 0, %v1560
        %v1562 = vrot.slane %v1545, %v1561
        %v1563 = vlaneseq
        %v1564 = vshrl.u32 %v1563, 7
        %v1565 = vsub.s32 0, %v1564
        %v1566 = vrot.slane %v1546, %v1565
        %1571 = vmatprep.subr.mxu0 0.0
        %1572 = vmatpush1.msra.mxu0 0.0
        %1573 = vmatprep.subr.mxu0 0.0
        %1574 = vmatpush1.msra.mxu0 0.0
        %1575 = vmatprep.subr.mxu0 0.0
        %1576 = vmatpush1.msra.mxu0 0.0
        %1577 = vmatprep.subr.mxu0 0.0
        %1578 = vmatpush1.msra.mxu0 0.0
        %1579 = vmatprep.subr.mxu0 0.0
        %1580 = vmatpush1.msra.mxu0 0.0
        %1581 = vmatprep.subr.mxu0 0.0
        %1582 = vmatpush1.msra.mxu0 0.0
        %1583 = vmatprep.subr.mxu0 0.0
        %1584 = vmatpush1.msra.mxu0 0.0
        %1585 = vmatprep.subr.mxu0 0.0
        %1586 = vmatpush1.msra.mxu0 0.0
        %1587 = vmatprep.subr.mxu0 0.0
        %1588 = vmatpush1.msra.mxu0 0.0
        %1589 = vmatprep.subr.mxu0 0.0
        %1590 = vmatpush1.msra.mxu0 0.0
        %1591 = vmatprep.subr.mxu0 0.0
        %1592 = vmatpush1.msra.mxu0 0.0
        %1593 = vmatprep.subr.mxu0 0.0
        %1594 = vmatpush1.msra.mxu0 0.0
        %1595 = vmatprep.subr.mxu0 0.0
        %1596 = vmatpush1.msra.mxu0 %v1530
        %1597 = vmatprep.subr.mxu0 0.0
        %1598 = vmatpush1.msra.mxu0 %v1529
        %1599 = vmatprep.subr.mxu0 0.0
        %1600 = vmatpush1.msra.mxu0 %v1528
        %1601 = vmatprep.subr.mxu0 0.0
        %1602 = vmatpush1.msra.mxu0 %v1527
        %1603 = vmatprep.subr.mxu0 0.0
        %1604 = vmatpush2.msra.mxu0 0.0
        %1605 = vmatprep.subr.mxu0 0.0
        %1606 = vmatpush2.msra.mxu0 0.0
        %1607 = vmatprep.subr.mxu0 0.0
        %1608 = vmatpush2.msra.mxu0 0.0
        %1609 = vmatprep.subr.mxu0 0.0
        %1610 = vmatpush2.msra.mxu0 0.0
        %1611 = vmatprep.subr.mxu0 0.0
        %1612 = vmatpush2.msra.mxu0 0.0
        %1613 = vmatprep.subr.mxu0 0.0
        %1614 = vmatpush2.msra.mxu0 0.0
        %1615 = vmatprep.subr.mxu0 0.0
        %1616 = vmatpush2.msra.mxu0 0.0
        %1617 = vmatprep.subr.mxu0 0.0
        %1618 = vmatpush2.msra.mxu0 0.0
        %1619 = vmatprep.subr.mxu0 0.0
        %1620 = vmatpush2.msra.mxu0 0.0
        %1621 = vmatprep.subr.mxu0 0.0
        %1622 = vmatpush2.msra.mxu0 0.0
        %1623 = vmatprep.subr.mxu0 0.0
        %1624 = vmatpush2.msra.mxu0 0.0
        %1625 = vmatprep.subr.mxu0 0.0
        %1626 = vmatpush2.msra.mxu0 0.0
        %1627 = vmatprep.subr.mxu0 0.0
        %1628 = vmatpush2.msra.mxu0 0.0
        %1629 = vmatprep.subr.mxu0 0.0
        %1630 = vmatpush2.msra.mxu0 0.0
        %1631 = vmatprep.subr.mxu0 0.0
        %1632 = vmatpush2.msra.mxu0 0.0
        %1633 = vmatprep.subr.mxu0 0.0
        %1634 = vmatpush2.msra.mxu0 0.0
        %1635 = vmatprep.mubr.f32.mxu0 0.0
        %1636 = vmatmul.mubr.f32.gmra.mxu0 %v921
        %v1637 = vpop.f32.mrf.mxu0
        %v1638 = vadd.f32 %v1554, %v1637
        %v1639 = vpop.f32.mrf.mxu0
        %1640 = vdwg.mxu0
        %1641 = vmatprep.subr.mxu0 0.0
        %1642 = vmatpush1.msra.mxu0 0.0
        %1643 = vmatprep.subr.mxu0 0.0
        %1644 = vmatpush1.msra.mxu0 0.0
        %1645 = vmatprep.subr.mxu0 0.0
        %1646 = vmatpush1.msra.mxu0 0.0
        %1647 = vmatprep.subr.mxu0 0.0
        %1648 = vmatpush1.msra.mxu0 0.0
        %1649 = vmatprep.subr.mxu0 0.0
        %1650 = vmatpush1.msra.mxu0 0.0
        %1651 = vmatprep.subr.mxu0 0.0
        %1652 = vmatpush1.msra.mxu0 0.0
        %1653 = vmatprep.subr.mxu0 0.0
        %1654 = vmatpush1.msra.mxu0 0.0
        %1655 = vmatprep.subr.mxu0 0.0
        %1656 = vmatpush1.msra.mxu0 0.0
        %1657 = vmatprep.subr.mxu0 0.0
        %1658 = vmatpush1.msra.mxu0 0.0
        %1659 = vmatprep.subr.mxu0 0.0
        %1660 = vmatpush1.msra.mxu0 0.0
        %1661 = vmatprep.subr.mxu0 0.0
        %1662 = vmatpush1.msra.mxu0 0.0
        %1663 = vmatprep.subr.mxu0 0.0
        %1664 = vmatpush1.msra.mxu0 0.0
        %1665 = vmatprep.subr.mxu0 0.0
        %1666 = vmatpush1.msra.mxu0 %v1534
        %1667 = vmatprep.subr.mxu0 0.0
        %1668 = vmatpush1.msra.mxu0 %v1533
        %1669 = vmatprep.subr.mxu0 0.0
        %1670 = vmatpush1.msra.mxu0 %v1532
        %1671 = vmatprep.subr.mxu0 0.0
        %1672 = vmatpush1.msra.mxu0 %v1531
        %1673 = vmatprep.subr.mxu0 0.0
        %1674 = vmatpush2.msra.mxu0 0.0
        %1675 = vmatprep.subr.mxu0 0.0
        %1676 = vmatpush2.msra.mxu0 0.0
        %1677 = vmatprep.subr.mxu0 0.0
        %1678 = vmatpush2.msra.mxu0 0.0
        %1679 = vmatprep.subr.mxu0 0.0
        %1680 = vmatpush2.msra.mxu0 0.0
        %1681 = vmatprep.subr.mxu0 0.0
        %1682 = vmatpush2.msra.mxu0 0.0
        %1683 = vmatprep.subr.mxu0 0.0
        %1684 = vmatpush2.msra.mxu0 0.0
        %1685 = vmatprep.subr.mxu0 0.0
        %1686 = vmatpush2.msra.mxu0 0.0
        %1687 = vmatprep.subr.mxu0 0.0
        %1688 = vmatpush2.msra.mxu0 0.0
        %1689 = vmatprep.subr.mxu0 0.0
        %1690 = vmatpush2.msra.mxu0 0.0
        %1691 = vmatprep.subr.mxu0 0.0
        %1692 = vmatpush2.msra.mxu0 0.0
        %1693 = vmatprep.subr.mxu0 0.0
        %1694 = vmatpush2.msra.mxu0 0.0
        %1695 = vmatprep.subr.mxu0 0.0
        %1696 = vmatpush2.msra.mxu0 0.0
        %1697 = vmatprep.subr.mxu0 0.0
        %1698 = vmatpush2.msra.mxu0 0.0
        %1699 = vmatprep.subr.mxu0 0.0
        %1700 = vmatpush2.msra.mxu0 0.0
        %1701 = vmatprep.subr.mxu0 0.0
        %1702 = vmatpush2.msra.mxu0 0.0
        %1703 = vmatprep.subr.mxu0 0.0
        %1704 = vmatpush2.msra.mxu0 0.0
        %1705 = vmatprep.mubr.f32.mxu0 0.0
        %1706 = vmatmul.mubr.f32.gmra.mxu0 %v921
        %v1707 = vpop.f32.mrf.mxu0
        %v1708 = vadd.f32 %v1558, %v1707
        %v1709 = vpop.f32.mrf.mxu0
        %1710 = vdwg.mxu0
        %1711 = vmatprep.subr.mxu0 0.0
        %1712 = vmatpush1.msra.mxu0 0.0
        %1713 = vmatprep.subr.mxu0 0.0
        %1714 = vmatpush1.msra.mxu0 0.0
        %1715 = vmatprep.subr.mxu0 0.0
        %1716 = vmatpush1.msra.mxu0 0.0
        %1717 = vmatprep.subr.mxu0 0.0
        %1718 = vmatpush1.msra.mxu0 0.0
        %1719 = vmatprep.subr.mxu0 0.0
        %1720 = vmatpush1.msra.mxu0 0.0
        %1721 = vmatprep.subr.mxu0 0.0
        %1722 = vmatpush1.msra.mxu0 0.0
        %1723 = vmatprep.subr.mxu0 0.0
        %1724 = vmatpush1.msra.mxu0 0.0
        %1725 = vmatprep.subr.mxu0 0.0
        %1726 = vmatpush1.msra.mxu0 0.0
        %1727 = vmatprep.subr.mxu0 0.0
        %1728 = vmatpush1.msra.mxu0 0.0
        %1729 = vmatprep.subr.mxu0 0.0
        %1730 = vmatpush1.msra.mxu0 0.0
        %1731 = vmatprep.subr.mxu0 0.0
        %1732 = vmatpush1.msra.mxu0 0.0
        %1733 = vmatprep.subr.mxu0 0.0
        %1734 = vmatpush1.msra.mxu0 0.0
        %1735 = vmatprep.subr.mxu0 0.0
        %1736 = vmatpush1.msra.mxu0 %v1538
        %1737 = vmatprep.subr.mxu0 0.0
        %1738 = vmatpush1.msra.mxu0 %v1537
        %1739 = vmatprep.subr.mxu0 0.0
        %1740 = vmatpush1.msra.mxu0 %v1536
        %1741 = vmatprep.subr.mxu0 0.0
        %1742 = vmatpush1.msra.mxu0 %v1535
        %1743 = vmatprep.subr.mxu0 0.0
        %1744 = vmatpush2.msra.mxu0 0.0
        %1745 = vmatprep.subr.mxu0 0.0
        %1746 = vmatpush2.msra.mxu0 0.0
        %1747 = vmatprep.subr.mxu0 0.0
        %1748 = vmatpush2.msra.mxu0 0.0
        %1749 = vmatprep.subr.mxu0 0.0
        %1750 = vmatpush2.msra.mxu0 0.0
        %1751 = vmatprep.subr.mxu0 0.0
        %1752 = vmatpush2.msra.mxu0 0.0
        %1753 = vmatprep.subr.mxu0 0.0
        %1754 = vmatpush2.msra.mxu0 0.0
        %1755 = vmatprep.subr.mxu0 0.0
        %1756 = vmatpush2.msra.mxu0 0.0
        %1757 = vmatprep.subr.mxu0 0.0
        %1758 = vmatpush2.msra.mxu0 0.0
        %1759 = vmatprep.subr.mxu0 0.0
        %1760 = vmatpush2.msra.mxu0 0.0
        %1761 = vmatprep.subr.mxu0 0.0
        %1762 = vmatpush2.msra.mxu0 0.0
        %1763 = vmatprep.subr.mxu0 0.0
        %1764 = vmatpush2.msra.mxu0 0.0
        %1765 = vmatprep.subr.mxu0 0.0
        %1766 = vmatpush2.msra.mxu0 0.0
        %1767 = vmatprep.subr.mxu0 0.0
        %1768 = vmatpush2.msra.mxu0 0.0
        %1769 = vmatprep.subr.mxu0 0.0
        %1770 = vmatpush2.msra.mxu0 0.0
        %1771 = vmatprep.subr.mxu0 0.0
        %1772 = vmatpush2.msra.mxu0 0.0
        %1773 = vmatprep.subr.mxu0 0.0
        %1774 = vmatpush2.msra.mxu0 0.0
        %1775 = vmatprep.mubr.f32.mxu0 0.0
        %1776 = vmatmul.mubr.f32.gmra.mxu0 %v921
        %v1777 = vpop.f32.mrf.mxu0
        %v1778 = vadd.f32 %v1562, %v1777
        %v1779 = vpop.f32.mrf.mxu0
        %1780 = vdwg.mxu0
        %1781 = vmatprep.subr.mxu0 0.0
        %1782 = vmatpush1.msra.mxu0 0.0
        %1783 = vmatprep.subr.mxu0 0.0
        %1784 = vmatpush1.msra.mxu0 0.0
        %1785 = vmatprep.subr.mxu0 0.0
        %1786 = vmatpush1.msra.mxu0 0.0
        %1787 = vmatprep.subr.mxu0 0.0
        %1788 = vmatpush1.msra.mxu0 0.0
        %1789 = vmatprep.subr.mxu0 0.0
        %1790 = vmatpush1.msra.mxu0 0.0
        %1791 = vmatprep.subr.mxu0 0.0
        %1792 = vmatpush1.msra.mxu0 0.0
        %1793 = vmatprep.subr.mxu0 0.0
        %1794 = vmatpush1.msra.mxu0 0.0
        %1795 = vmatprep.subr.mxu0 0.0
        %1796 = vmatpush1.msra.mxu0 0.0
        %1797 = vmatprep.subr.mxu0 0.0
        %1798 = vmatpush1.msra.mxu0 0.0
        %1799 = vmatprep.subr.mxu0 0.0
        %1800 = vmatpush1.msra.mxu0 0.0
        %1801 = vmatprep.subr.mxu0 0.0
        %1802 = vmatpush1.msra.mxu0 0.0
        %1803 = vmatprep.subr.mxu0 0.0
        %1804 = vmatpush1.msra.mxu0 0.0
        %1805 = vmatprep.subr.mxu0 0.0
        %1806 = vmatpush1.msra.mxu0 %v1542
        %1807 = vmatprep.subr.mxu0 0.0
        %1808 = vmatpush1.msra.mxu0 %v1541
        %1809 = vmatprep.subr.mxu0 0.0
        %1810 = vmatpush1.msra.mxu0 %v1540
        %1811 = vmatprep.subr.mxu0 0.0
        %1812 = vmatpush1.msra.mxu0 %v1539
        %1813 = vmatprep.subr.mxu0 0.0
        %1814 = vmatpush2.msra.mxu0 0.0
        %1815 = vmatprep.subr.mxu0 0.0
        %1816 = vmatpush2.msra.mxu0 0.0
        %1817 = vmatprep.subr.mxu0 0.0
        %1818 = vmatpush2.msra.mxu0 0.0
        %1819 = vmatprep.subr.mxu0 0.0
        %1820 = vmatpush2.msra.mxu0 0.0
        %1821 = vmatprep.subr.mxu0 0.0
        %1822 = vmatpush2.msra.mxu0 0.0
        %1823 = vmatprep.subr.mxu0 0.0
        %1824 = vmatpush2.msra.mxu0 0.0
        %1825 = vmatprep.subr.mxu0 0.0
        %1826 = vmatpush2.msra.mxu0 0.0
        %1827 = vmatprep.subr.mxu0 0.0
        %1828 = vmatpush2.msra.mxu0 0.0
        %1829 = vmatprep.subr.mxu0 0.0
        %1830 = vmatpush2.msra.mxu0 0.0
        %1831 = vmatprep.subr.mxu0 0.0
        %1832 = vmatpush2.msra.mxu0 0.0
        %1833 = vmatprep.subr.mxu0 0.0
        %1834 = vmatpush2.msra.mxu0 0.0
        %1835 = vmatprep.subr.mxu0 0.0
        %1836 = vmatpush2.msra.mxu0 0.0
        %1837 = vmatprep.subr.mxu0 0.0
        %1838 = vmatpush2.msra.mxu0 0.0
        %1839 = vmatprep.subr.mxu0 0.0
        %1840 = vmatpush2.msra.mxu0 0.0
        %1841 = vmatprep.subr.mxu0 0.0
        %1842 = vmatpush2.msra.mxu0 0.0
        %1843 = vmatprep.subr.mxu0 0.0
        %1844 = vmatpush2.msra.mxu0 0.0
        %1845 = vmatprep.mubr.f32.mxu0 0.0
        %1846 = vmatmul.mubr.f32.gmra.mxu0 %v921
        %v1847 = vpop.f32.mrf.mxu0
        %v1848 = vadd.f32 %v1566, %v1847
        %v1849 = vpop.f32.mrf.mxu0
        %1850 = vdwg.mxu0
        %vm1851 = vcmask 64512
        %v1853 = vsel %vm1851, %v990, 0
        %v1856 = vsel %vm1851, %v1314, 0
        %1858 = vmatprep.subr.mxu0 0.0
        %1859 = vmatpush1.xpose.msra.mxu0 0.0
        %1860 = vmatprep.subr.mxu0 0.0
        %1861 = vmatpush1.xpose.msra.mxu0 0.0
        %1862 = vmatprep.subr.mxu0 0.0
        %1863 = vmatpush1.xpose.msra.mxu0 0.0
        %1864 = vmatprep.subr.mxu0 0.0
        %1865 = vmatpush1.xpose.msra.mxu0 0.0
        %1866 = vmatprep.subr.mxu0 0.0
        %1867 = vmatpush1.xpose.msra.mxu0 0.0
        %1868 = vmatprep.subr.mxu0 0.0
        %1869 = vmatpush1.xpose.msra.mxu0 0.0
        %1870 = vmatprep.subr.mxu0 0.0
        %1871 = vmatpush1.xpose.msra.mxu0 0.0
        %1872 = vmatprep.subr.mxu0 0.0
        %1873 = vmatpush1.xpose.msra.mxu0 0.0
        %1874 = vmatprep.subr.mxu0 0.0
        %1875 = vmatpush1.xpose.msra.mxu0 0.0
        %1876 = vmatprep.subr.mxu0 0.0
        %1877 = vmatpush1.xpose.msra.mxu0 0.0
        %1878 = vmatprep.subr.mxu0 0.0
        %1879 = vmatpush1.xpose.msra.mxu0 0.0
        %1880 = vmatprep.subr.mxu0 0.0
        %1881 = vmatpush1.xpose.msra.mxu0 0.0
        %1882 = vmatprep.subr.mxu0 0.0
        %1883 = vmatpush1.xpose.msra.mxu0 0.0
        %1884 = vmatprep.subr.mxu0 0.0
        %1885 = vmatpush1.xpose.msra.mxu0 0.0
        %1886 = vmatprep.subr.mxu0 0.0
        %1887 = vmatpush1.xpose.msra.mxu0 0.0
        %1888 = vmatprep.subr.mxu0 0.0
        %1889 = vmatpush1.xpose.msra.mxu0 %v1856
        %1890 = vmatprep.subr.mxu0 0.0
        %1891 = vmatpush2.xpose.msra.mxu0 0.0
        %1892 = vmatprep.subr.mxu0 0.0
        %1893 = vmatpush2.xpose.msra.mxu0 0.0
        %1894 = vmatprep.subr.mxu0 0.0
        %1895 = vmatpush2.xpose.msra.mxu0 0.0
        %1896 = vmatprep.subr.mxu0 0.0
        %1897 = vmatpush2.xpose.msra.mxu0 0.0
        %1898 = vmatprep.subr.mxu0 0.0
        %1899 = vmatpush2.xpose.msra.mxu0 0.0
        %1900 = vmatprep.subr.mxu0 0.0
        %1901 = vmatpush2.xpose.msra.mxu0 0.0
        %1902 = vmatprep.subr.mxu0 0.0
        %1903 = vmatpush2.xpose.msra.mxu0 0.0
        %1904 = vmatprep.subr.mxu0 0.0
        %1905 = vmatpush2.xpose.msra.mxu0 0.0
        %1906 = vmatprep.subr.mxu0 0.0
        %1907 = vmatpush2.xpose.msra.mxu0 0.0
        %1908 = vmatprep.subr.mxu0 0.0
        %1909 = vmatpush2.xpose.msra.mxu0 0.0
        %1910 = vmatprep.subr.mxu0 0.0
        %1911 = vmatpush2.xpose.msra.mxu0 0.0
        %1912 = vmatprep.subr.mxu0 0.0
        %1913 = vmatpush2.xpose.msra.mxu0 0.0
        %1914 = vmatprep.subr.mxu0 0.0
        %1915 = vmatpush2.xpose.msra.mxu0 0.0
        %1916 = vmatprep.subr.mxu0 0.0
        %1917 = vmatpush2.xpose.msra.mxu0 0.0
        %1918 = vmatprep.subr.mxu0 0.0
        %1919 = vmatpush2.xpose.msra.mxu0 0.0
        %1920 = vmatprep.subr.mxu0 0.0
        %1921 = vmatpush2.xpose.msra.mxu0 0.0
        %1922 = vmatprep.mubr.f32.mxu0 0.0
        %1923 = vmatmul.mubr.f32.gmra.mxu0 %v1853
        %v1924 = vpop.f32.mrf.mxu0
        %v1925 = vadd.f32 0.0, %v1924
        %v1926 = vpop.f32.mrf.mxu0
        %1927 = vdwg.mxu0
        %v1929 = vsel %vm1851, %v1060, 0
        %v1932 = vsel %vm1851, %v1384, 0
        %1934 = vmatprep.subr.mxu0 0.0
        %1935 = vmatpush1.xpose.msra.mxu0 0.0
        %1936 = vmatprep.subr.mxu0 0.0
        %1937 = vmatpush1.xpose.msra.mxu0 0.0
        %1938 = vmatprep.subr.mxu0 0.0
        %1939 = vmatpush1.xpose.msra.mxu0 0.0
        %1940 = vmatprep.subr.mxu0 0.0
        %1941 = vmatpush1.xpose.msra.mxu0 0.0
        %1942 = vmatprep.subr.mxu0 0.0
        %1943 = vmatpush1.xpose.msra.mxu0 0.0
        %1944 = vmatprep.subr.mxu0 0.0
        %1945 = vmatpush1.xpose.msra.mxu0 0.0
        %1946 = vmatprep.subr.mxu0 0.0
        %1947 = vmatpush1.xpose.msra.mxu0 0.0
        %1948 = vmatprep.subr.mxu0 0.0
        %1949 = vmatpush1.xpose.msra.mxu0 0.0
        %1950 = vmatprep.subr.mxu0 0.0
        %1951 = vmatpush1.xpose.msra.mxu0 0.0
        %1952 = vmatprep.subr.mxu0 0.0
        %1953 = vmatpush1.xpose.msra.mxu0 0.0
        %1954 = vmatprep.subr.mxu0 0.0
        %1955 = vmatpush1.xpose.msra.mxu0 0.0
        %1956 = vmatprep.subr.mxu0 0.0
        %1957 = vmatpush1.xpose.msra.mxu0 0.0
        %1958 = vmatprep.subr.mxu0 0.0
        %1959 = vmatpush1.xpose.msra.mxu0 0.0
        %1960 = vmatprep.subr.mxu0 0.0
        %1961 = vmatpush1.xpose.msra.mxu0 0.0
        %1962 = vmatprep.subr.mxu0 0.0
        %1963 = vmatpush1.xpose.msra.mxu0 0.0
        %1964 = vmatprep.subr.mxu0 0.0
        %1965 = vmatpush1.xpose.msra.mxu0 %v1932
        %1966 = vmatprep.subr.mxu0 0.0
        %1967 = vmatpush2.xpose.msra.mxu0 0.0
        %1968 = vmatprep.subr.mxu0 0.0
        %1969 = vmatpush2.xpose.msra.mxu0 0.0
        %1970 = vmatprep.subr.mxu0 0.0
        %1971 = vmatpush2.xpose.msra.mxu0 0.0
        %1972 = vmatprep.subr.mxu0 0.0
        %1973 = vmatpush2.xpose.msra.mxu0 0.0
        %1974 = vmatprep.subr.mxu0 0.0
        %1975 = vmatpush2.xpose.msra.mxu0 0.0
        %1976 = vmatprep.subr.mxu0 0.0
        %1977 = vmatpush2.xpose.msra.mxu0 0.0
        %1978 = vmatprep.subr.mxu0 0.0
        %1979 = vmatpush2.xpose.msra.mxu0 0.0
        %1980 = vmatprep.subr.mxu0 0.0
        %1981 = vmatpush2.xpose.msra.mxu0 0.0
        %1982 = vmatprep.subr.mxu0 0.0
        %1983 = vmatpush2.xpose.msra.mxu0 0.0
        %1984 = vmatprep.subr.mxu0 0.0
        %1985 = vmatpush2.xpose.msra.mxu0 0.0
        %1986 = vmatprep.subr.mxu0 0.0
        %1987 = vmatpush2.xpose.msra.mxu0 0.0
        %1988 = vmatprep.subr.mxu0 0.0
        %1989 = vmatpush2.xpose.msra.mxu0 0.0
        %1990 = vmatprep.subr.mxu0 0.0
        %1991 = vmatpush2.xpose.msra.mxu0 0.0
        %1992 = vmatprep.subr.mxu0 0.0
        %1993 = vmatpush2.xpose.msra.mxu0 0.0
        %1994 = vmatprep.subr.mxu0 0.0
        %1995 = vmatpush2.xpose.msra.mxu0 0.0
        %1996 = vmatprep.subr.mxu0 0.0
        %1997 = vmatpush2.xpose.msra.mxu0 0.0
        %1998 = vmatprep.mubr.f32.mxu0 0.0
        %1999 = vmatmul.mubr.f32.gmra.mxu0 %v1929
        %v2000 = vpop.f32.mrf.mxu0
        %v2001 = vadd.f32 0.0, %v2000
        %v2002 = vpop.f32.mrf.mxu0
        %2003 = vdwg.mxu0
        %v2005 = vsel %vm1851, %v1130, 0
        %v2008 = vsel %vm1851, %v1454, 0
        %2010 = vmatprep.subr.mxu0 0.0
        %2011 = vmatpush1.xpose.msra.mxu0 0.0
        %2012 = vmatprep.subr.mxu0 0.0
        %2013 = vmatpush1.xpose.msra.mxu0 0.0
        %2014 = vmatprep.subr.mxu0 0.0
        %2015 = vmatpush1.xpose.msra.mxu0 0.0
        %2016 = vmatprep.subr.mxu0 0.0
        %2017 = vmatpush1.xpose.msra.mxu0 0.0
        %2018 = vmatprep.subr.mxu0 0.0
        %2019 = vmatpush1.xpose.msra.mxu0 0.0
        %2020 = vmatprep.subr.mxu0 0.0
        %2021 = vmatpush1.xpose.msra.mxu0 0.0
        %2022 = vmatprep.subr.mxu0 0.0
        %2023 = vmatpush1.xpose.msra.mxu0 0.0
        %2024 = vmatprep.subr.mxu0 0.0
        %2025 = vmatpush1.xpose.msra.mxu0 0.0
        %2026 = vmatprep.subr.mxu0 0.0
        %2027 = vmatpush1.xpose.msra.mxu0 0.0
        %2028 = vmatprep.subr.mxu0 0.0
        %2029 = vmatpush1.xpose.msra.mxu0 0.0
        %2030 = vmatprep.subr.mxu0 0.0
        %2031 = vmatpush1.xpose.msra.mxu0 0.0
        %2032 = vmatprep.subr.mxu0 0.0
        %2033 = vmatpush1.xpose.msra.mxu0 0.0
        %2034 = vmatprep.subr.mxu0 0.0
        %2035 = vmatpush1.xpose.msra.mxu0 0.0
        %2036 = vmatprep.subr.mxu0 0.0
        %2037 = vmatpush1.xpose.msra.mxu0 0.0
        %2038 = vmatprep.subr.mxu0 0.0
        %2039 = vmatpush1.xpose.msra.mxu0 0.0
        %2040 = vmatprep.subr.mxu0 0.0
        %2041 = vmatpush1.xpose.msra.mxu0 %v2008
        %2042 = vmatprep.subr.mxu0 0.0
        %2043 = vmatpush2.xpose.msra.mxu0 0.0
        %2044 = vmatprep.subr.mxu0 0.0
        %2045 = vmatpush2.xpose.msra.mxu0 0.0
        %2046 = vmatprep.subr.mxu0 0.0
        %2047 = vmatpush2.xpose.msra.mxu0 0.0
        %2048 = vmatprep.subr.mxu0 0.0
        %2049 = vmatpush2.xpose.msra.mxu0 0.0
        %2050 = vmatprep.subr.mxu0 0.0
        %2051 = vmatpush2.xpose.msra.mxu0 0.0
        %2052 = vmatprep.subr.mxu0 0.0
        %2053 = vmatpush2.xpose.msra.mxu0 0.0
        %2054 = vmatprep.subr.mxu0 0.0
        %2055 = vmatpush2.xpose.msra.mxu0 0.0
        %2056 = vmatprep.subr.mxu0 0.0
        %2057 = vmatpush2.xpose.msra.mxu0 0.0
        %2058 = vmatprep.subr.mxu0 0.0
        %2059 = vmatpush2.xpose.msra.mxu0 0.0
        %2060 = vmatprep.subr.mxu0 0.0
        %2061 = vmatpush2.xpose.msra.mxu0 0.0
        %2062 = vmatprep.subr.mxu0 0.0
        %2063 = vmatpush2.xpose.msra.mxu0 0.0
        %2064 = vmatprep.subr.mxu0 0.0
        %2065 = vmatpush2.xpose.msra.mxu0 0.0
        %2066 = vmatprep.subr.mxu0 0.0
        %2067 = vmatpush2.xpose.msra.mxu0 0.0
        %2068 = vmatprep.subr.mxu0 0.0
        %2069 = vmatpush2.xpose.msra.mxu0 0.0
        %2070 = vmatprep.subr.mxu0 0.0
        %2071 = vmatpush2.xpose.msra.mxu0 0.0
        %2072 = vmatprep.subr.mxu0 0.0
        %2073 = vmatpush2.xpose.msra.mxu0 0.0
        %2074 = vmatprep.mubr.f32.mxu0 0.0
        %2075 = vmatmul.mubr.f32.gmra.mxu0 %v2005
        %v2076 = vpop.f32.mrf.mxu0
        %v2077 = vadd.f32 0.0, %v2076
        %v2078 = vpop.f32.mrf.mxu0
        %2079 = vdwg.mxu0
        %v2081 = vsel %vm1851, %v1200, 0
        %v2084 = vsel %vm1851, %v1524, 0
        %2086 = vmatprep.subr.mxu0 0.0
        %2087 = vmatpush1.xpose.msra.mxu0 0.0
        %2088 = vmatprep.subr.mxu0 0.0
        %2089 = vmatpush1.xpose.msra.mxu0 0.0
        %2090 = vmatprep.subr.mxu0 0.0
        %2091 = vmatpush1.xpose.msra.mxu0 0.0
        %2092 = vmatprep.subr.mxu0 0.0
        %2093 = vmatpush1.xpose.msra.mxu0 0.0
        %2094 = vmatprep.subr.mxu0 0.0
        %2095 = vmatpush1.xpose.msra.mxu0 0.0
        %2096 = vmatprep.subr.mxu0 0.0
        %2097 = vmatpush1.xpose.msra.mxu0 0.0
        %2098 = vmatprep.subr.mxu0 0.0
        %2099 = vmatpush1.xpose.msra.mxu0 0.0
        %2100 = vmatprep.subr.mxu0 0.0
        %2101 = vmatpush1.xpose.msra.mxu0 0.0
        %2102 = vmatprep.subr.mxu0 0.0
        %2103 = vmatpush1.xpose.msra.mxu0 0.0
        %2104 = vmatprep.subr.mxu0 0.0
        %2105 = vmatpush1.xpose.msra.mxu0 0.0
        %2106 = vmatprep.subr.mxu0 0.0
        %2107 = vmatpush1.xpose.msra.mxu0 0.0
        %2108 = vmatprep.subr.mxu0 0.0
        %2109 = vmatpush1.xpose.msra.mxu0 0.0
        %2110 = vmatprep.subr.mxu0 0.0
        %2111 = vmatpush1.xpose.msra.mxu0 0.0
        %2112 = vmatprep.subr.mxu0 0.0
        %2113 = vmatpush1.xpose.msra.mxu0 0.0
        %2114 = vmatprep.subr.mxu0 0.0
        %2115 = vmatpush1.xpose.msra.mxu0 0.0
        %2116 = vmatprep.subr.mxu0 0.0
        %2117 = vmatpush1.xpose.msra.mxu0 %v2084
        %2118 = vmatprep.subr.mxu0 0.0
        %2119 = vmatpush2.xpose.msra.mxu0 0.0
        %2120 = vmatprep.subr.mxu0 0.0
        %2121 = vmatpush2.xpose.msra.mxu0 0.0
        %2122 = vmatprep.subr.mxu0 0.0
        %2123 = vmatpush2.xpose.msra.mxu0 0.0
        %2124 = vmatprep.subr.mxu0 0.0
        %2125 = vmatpush2.xpose.msra.mxu0 0.0
        %2126 = vmatprep.subr.mxu0 0.0
        %2127 = vmatpush2.xpose.msra.mxu0 0.0
        %2128 = vmatprep.subr.mxu0 0.0
        %2129 = vmatpush2.xpose.msra.mxu0 0.0
        %2130 = vmatprep.subr.mxu0 0.0
        %2131 = vmatpush2.xpose.msra.mxu0 0.0
        %2132 = vmatprep.subr.mxu0 0.0
        %2133 = vmatpush2.xpose.msra.mxu0 0.0
        %2134 = vmatprep.subr.mxu0 0.0
        %2135 = vmatpush2.xpose.msra.mxu0 0.0
        %2136 = vmatprep.subr.mxu0 0.0
        %2137 = vmatpush2.xpose.msra.mxu0 0.0
        %2138 = vmatprep.subr.mxu0 0.0
        %2139 = vmatpush2.xpose.msra.mxu0 0.0
        %2140 = vmatprep.subr.mxu0 0.0
        %2141 = vmatpush2.xpose.msra.mxu0 0.0
        %2142 = vmatprep.subr.mxu0 0.0
        %2143 = vmatpush2.xpose.msra.mxu0 0.0
        %2144 = vmatprep.subr.mxu0 0.0
        %2145 = vmatpush2.xpose.msra.mxu0 0.0
        %2146 = vmatprep.subr.mxu0 0.0
        %2147 = vmatpush2.xpose.msra.mxu0 0.0
        %2148 = vmatprep.subr.mxu0 0.0
        %2149 = vmatpush2.xpose.msra.mxu0 0.0
        %2150 = vmatprep.mubr.f32.mxu0 0.0
        %2151 = vmatmul.mubr.f32.gmra.mxu0 %v2081
        %v2152 = vpop.f32.mrf.mxu0
        %v2153 = vadd.f32 0.0, %v2152
        %v2154 = vpop.f32.mrf.mxu0
        %2155 = vdwg.mxu0
        %v2156 = vsel %vm1851, %v1925, -inf
        %2157 = vmax.xlane.f32.xlu0 %v2156
        %v2158 = vpop.xlane.xlu0 %2157
        %v2159 = vsel %vm1851, %v2001, -inf
        %2160 = vmax.xlane.f32.xlu0 %v2159
        %v2161 = vpop.xlane.xlu0 %2160
        %v2162 = vsel %vm1851, %v2077, -inf
        %2163 = vmax.xlane.f32.xlu0 %v2162
        %v2164 = vpop.xlane.xlu0 %2163
        %v2165 = vsel %vm1851, %v2153, -inf
        %2166 = vmax.xlane.f32.xlu0 %v2165
        %v2167 = vpop.xlane.xlu0 %2166
        %v2168 = vsub.f32 %v1925, %v2158
        %v2169 = vsub.f32 %v2001, %v2161
        %v2170 = vsub.f32 %v2077, %v2164
        %v2171 = vsub.f32 %v2153, %v2167
        %v2172 = vmul.f32 %v2168, 1.442695
        %v2173 = vpow.pop %v2172
        %v2174 = vmul.f32 %v2169, 1.442695
        %v2175 = vpow.pop %v2174
        %v2176 = vmul.f32 %v2170, 1.442695
        %v2177 = vpow.pop %v2176
        %v2178 = vmul.f32 %v2171, 1.442695
        %v2179 = vpow.pop %v2178
        %v2180 = vsel %vm1851, %v2173, 0.0
        %2181 = vadd.xlane.f32.xlu0 %v2180
        %v2182 = vpop.xlane.xlu0 %2181
        %v2183 = vsel %vm1851, %v2175, 0.0
        %2184 = vadd.xlane.f32.xlu0 %v2183
        %v2185 = vpop.xlane.xlu0 %2184
        %v2186 = vsel %vm1851, %v2177, 0.0
        %2187 = vadd.xlane.f32.xlu0 %v2186
        %v2188 = vpop.xlane.xlu0 %2187
        %v2189 = vsel %vm1851, %v2179, 0.0
        %2190 = vadd.xlane.f32.xlu0 %v2189
        %v2191 = vpop.xlane.xlu0 %2190
        %v2192 = vrcp.pop %v2182
        %v2193 = vrcp.pop %v2185
        %v2194 = vrcp.pop %v2188
        %v2195 = vrcp.pop %v2191
        %v2196 = vmul.f32 %v2173, %v2192
        %v2197 = vmul.f32 %v2175, %v2193
        %v2198 = vmul.f32 %v2177, %v2194
        %v2199 = vmul.f32 %v2179, %v2195
        %v2201 = vsel %vm1851, %v2196, 0
        %2203 = vmatprep.subr.mxu0 0.0
        %2204 = vmatpush1.msra.mxu0 0.0
        %2205 = vmatprep.subr.mxu0 0.0
        %2206 = vmatpush1.msra.mxu0 0.0
        %2207 = vmatprep.subr.mxu0 0.0
        %2208 = vmatpush1.msra.mxu0 0.0
        %2209 = vmatprep.subr.mxu0 0.0
        %2210 = vmatpush1.msra.mxu0 0.0
        %2211 = vmatprep.subr.mxu0 0.0
        %2212 = vmatpush1.msra.mxu0 0.0
        %2213 = vmatprep.subr.mxu0 0.0
        %2214 = vmatpush1.msra.mxu0 0.0
        %2215 = vmatprep.subr.mxu0 0.0
        %2216 = vmatpush1.msra.mxu0 0.0
        %2217 = vmatprep.subr.mxu0 0.0
        %2218 = vmatpush1.msra.mxu0 0.0
        %2219 = vmatprep.subr.mxu0 0.0
        %2220 = vmatpush1.msra.mxu0 0.0
        %2221 = vmatprep.subr.mxu0 0.0
        %2222 = vmatpush1.msra.mxu0 0.0
        %2223 = vmatprep.subr.mxu0 0.0
        %2224 = vmatpush1.msra.mxu0 0.0
        %2225 = vmatprep.subr.mxu0 0.0
        %2226 = vmatpush1.msra.mxu0 0.0
        %2227 = vmatprep.subr.mxu0 0.0
        %2228 = vmatpush1.msra.mxu0 0.0
        %2229 = vmatprep.subr.mxu0 0.0
        %2230 = vmatpush1.msra.mxu0 0.0
        %2231 = vmatprep.subr.mxu0 0.0
        %2232 = vmatpush1.msra.mxu0 0.0
        %2233 = vmatprep.subr.mxu0 0.0
        %2234 = vmatpush1.msra.mxu0 %v1638
        %2235 = vmatprep.subr.mxu0 0.0
        %2236 = vmatpush2.msra.mxu0 0.0
        %2237 = vmatprep.subr.mxu0 0.0
        %2238 = vmatpush2.msra.mxu0 0.0
        %2239 = vmatprep.subr.mxu0 0.0
        %2240 = vmatpush2.msra.mxu0 0.0
        %2241 = vmatprep.subr.mxu0 0.0
        %2242 = vmatpush2.msra.mxu0 0.0
        %2243 = vmatprep.subr.mxu0 0.0
        %2244 = vmatpush2.msra.mxu0 0.0
        %2245 = vmatprep.subr.mxu0 0.0
        %2246 = vmatpush2.msra.mxu0 0.0
        %2247 = vmatprep.subr.mxu0 0.0
        %2248 = vmatpush2.msra.mxu0 0.0
        %2249 = vmatprep.subr.mxu0 0.0
        %2250 = vmatpush2.msra.mxu0 0.0
        %2251 = vmatprep.subr.mxu0 0.0
        %2252 = vmatpush2.msra.mxu0 0.0
        %2253 = vmatprep.subr.mxu0 0.0
        %2254 = vmatpush2.msra.mxu0 0.0
        %2255 = vmatprep.subr.mxu0 0.0
        %2256 = vmatpush2.msra.mxu0 0.0
        %2257 = vmatprep.subr.mxu0 0.0
        %2258 = vmatpush2.msra.mxu0 0.0
        %2259 = vmatprep.subr.mxu0 0.0
        %2260 = vmatpush2.msra.mxu0 0.0
        %2261 = vmatprep.subr.mxu0 0.0
        %2262 = vmatpush2.msra.mxu0 0.0
        %2263 = vmatprep.subr.mxu0 0.0
        %2264 = vmatpush2.msra.mxu0 0.0
        %2265 = vmatprep.subr.mxu0 0.0
        %2266 = vmatpush2.msra.mxu0 0.0
        %2267 = vmatprep.mubr.f32.mxu0 0.0
        %2268 = vmatmul.mubr.f32.gmra.mxu0 %v2201
        %v2269 = vpop.f32.mrf.mxu0
        %v2270 = vadd.f32 0.0, %v2269
        %v2271 = vpop.f32.mrf.mxu0
        %2272 = vdwg.mxu0
        %v2274 = vsel %vm1851, %v2197, 0
        %2276 = vmatprep.subr.mxu0 0.0
        %2277 = vmatpush1.msra.mxu0 0.0
        %2278 = vmatprep.subr.mxu0 0.0
        %2279 = vmatpush1.msra.mxu0 0.0
        %2280 = vmatprep.subr.mxu0 0.0
        %2281 = vmatpush1.msra.mxu0 0.0
        %2282 = vmatprep.subr.mxu0 0.0
        %2283 = vmatpush1.msra.mxu0 0.0
        %2284 = vmatprep.subr.mxu0 0.0
        %2285 = vmatpush1.msra.mxu0 0.0
        %2286 = vmatprep.subr.mxu0 0.0
        %2287 = vmatpush1.msra.mxu0 0.0
        %2288 = vmatprep.subr.mxu0 0.0
        %2289 = vmatpush1.msra.mxu0 0.0
        %2290 = vmatprep.subr.mxu0 0.0
        %2291 = vmatpush1.msra.mxu0 0.0
        %2292 = vmatprep.subr.mxu0 0.0
        %2293 = vmatpush1.msra.mxu0 0.0
        %2294 = vmatprep.subr.mxu0 0.0
        %2295 = vmatpush1.msra.mxu0 0.0
        %2296 = vmatprep.subr.mxu0 0.0
        %2297 = vmatpush1.msra.mxu0 0.0
        %2298 = vmatprep.subr.mxu0 0.0
        %2299 = vmatpush1.msra.mxu0 0.0
        %2300 = vmatprep.subr.mxu0 0.0
        %2301 = vmatpush1.msra.mxu0 0.0
        %2302 = vmatprep.subr.mxu0 0.0
        %2303 = vmatpush1.msra.mxu0 0.0
        %2304 = vmatprep.subr.mxu0 0.0
        %2305 = vmatpush1.msra.mxu0 0.0
        %2306 = vmatprep.subr.mxu0 0.0
        %2307 = vmatpush1.msra.mxu0 %v1708
        %2308 = vmatprep.subr.mxu0 0.0
        %2309 = vmatpush2.msra.mxu0 0.0
        %2310 = vmatprep.subr.mxu0 0.0
        %2311 = vmatpush2.msra.mxu0 0.0
        %2312 = vmatprep.subr.mxu0 0.0
        %2313 = vmatpush2.msra.mxu0 0.0
        %2314 = vmatprep.subr.mxu0 0.0
        %2315 = vmatpush2.msra.mxu0 0.0
        %2316 = vmatprep.subr.mxu0 0.0
        %2317 = vmatpush2.msra.mxu0 0.0
        %2318 = vmatprep.subr.mxu0 0.0
        %2319 = vmatpush2.msra.mxu0 0.0
        %2320 = vmatprep.subr.mxu0 0.0
        %2321 = vmatpush2.msra.mxu0 0.0
        %2322 = vmatprep.subr.mxu0 0.0
        %2323 = vmatpush2.msra.mxu0 0.0
        %2324 = vmatprep.subr.mxu0 0.0
        %2325 = vmatpush2.msra.mxu0 0.0
        %2326 = vmatprep.subr.mxu0 0.0
        %2327 = vmatpush2.msra.mxu0 0.0
        %2328 = vmatprep.subr.mxu0 0.0
        %2329 = vmatpush2.msra.mxu0 0.0
        %2330 = vmatprep.subr.mxu0 0.0
        %2331 = vmatpush2.msra.mxu0 0.0
        %2332 = vmatprep.subr.mxu0 0.0
        %2333 = vmatpush2.msra.mxu0 0.0
        %2334 = vmatprep.subr.mxu0 0.0
        %2335 = vmatpush2.msra.mxu0 0.0
        %2336 = vmatprep.subr.mxu0 0.0
        %2337 = vmatpush2.msra.mxu0 0.0
        %2338 = vmatprep.subr.mxu0 0.0
        %2339 = vmatpush2.msra.mxu0 0.0
        %2340 = vmatprep.mubr.f32.mxu0 0.0
        %2341 = vmatmul.mubr.f32.gmra.mxu0 %v2274
        %v2342 = vpop.f32.mrf.mxu0
        %v2343 = vadd.f32 0.0, %v2342
        %v2344 = vpop.f32.mrf.mxu0
        %2345 = vdwg.mxu0
        %v2347 = vsel %vm1851, %v2198, 0
        %2349 = vmatprep.subr.mxu0 0.0
        %2350 = vmatpush1.msra.mxu0 0.0
        %2351 = vmatprep.subr.mxu0 0.0
        %2352 = vmatpush1.msra.mxu0 0.0
        %2353 = vmatprep.subr.mxu0 0.0
        %2354 = vmatpush1.msra.mxu0 0.0
        %2355 = vmatprep.subr.mxu0 0.0
        %2356 = vmatpush1.msra.mxu0 0.0
        %2357 = vmatprep.subr.mxu0 0.0
        %2358 = vmatpush1.msra.mxu0 0.0
        %2359 = vmatprep.subr.mxu0 0.0
        %2360 = vmatpush1.msra.mxu0 0.0
        %2361 = vmatprep.subr.mxu0 0.0
        %2362 = vmatpush1.msra.mxu0 0.0
        %2363 = vmatprep.subr.mxu0 0.0
        %2364 = vmatpush1.msra.mxu0 0.0
        %2365 = vmatprep.subr.mxu0 0.0
        %2366 = vmatpush1.msra.mxu0 0.0
        %2367 = vmatprep.subr.mxu0 0.0
        %2368 = vmatpush1.msra.mxu0 0.0
        %2369 = vmatprep.subr.mxu0 0.0
        %2370 = vmatpush1.msra.mxu0 0.0
        %2371 = vmatprep.subr.mxu0 0.0
        %2372 = vmatpush1.msra.mxu0 0.0
        %2373 = vmatprep.subr.mxu0 0.0
        %2374 = vmatpush1.msra.mxu0 0.0
        %2375 = vmatprep.subr.mxu0 0.0
        %2376 = vmatpush1.msra.mxu0 0.0
        %2377 = vmatprep.subr.mxu0 0.0
        %2378 = vmatpush1.msra.mxu0 0.0
        %2379 = vmatprep.subr.mxu0 0.0
        %2380 = vmatpush1.msra.mxu0 %v1778
        %2381 = vmatprep.subr.mxu0 0.0
        %2382 = vmatpush2.msra.mxu0 0.0
        %2383 = vmatprep.subr.mxu0 0.0
        %2384 = vmatpush2.msra.mxu0 0.0
        %2385 = vmatprep.subr.mxu0 0.0
        %2386 = vmatpush2.msra.mxu0 0.0
        %2387 = vmatprep.subr.mxu0 0.0
        %2388 = vmatpush2.msra.mxu0 0.0
        %2389 = vmatprep.subr.mxu0 0.0
        %2390 = vmatpush2.msra.mxu0 0.0
        %2391 = vmatprep.subr.mxu0 0.0
        %2392 = vmatpush2.msra.mxu0 0.0
        %2393 = vmatprep.subr.mxu0 0.0
        %2394 = vmatpush2.msra.mxu0 0.0
        %2395 = vmatprep.subr.mxu0 0.0
        %2396 = vmatpush2.msra.mxu0 0.0
        %2397 = vmatprep.subr.mxu0 0.0
        %2398 = vmatpush2.msra.mxu0 0.0
        %2399 = vmatprep.subr.mxu0 0.0
        %2400 = vmatpush2.msra.mxu0 0.0
        %2401 = vmatprep.subr.mxu0 0.0
        %2402 = vmatpush2.msra.mxu0 0.0
        %2403 = vmatprep.subr.mxu0 0.0
        %2404 = vmatpush2.msra.mxu0 0.0
        %2405 = vmatprep.subr.mxu0 0.0
        %2406 = vmatpush2.msra.mxu0 0.0
        %2407 = vmatprep.subr.mxu0 0.0
        %2408 = vmatpush2.msra.mxu0 0.0
        %2409 = vmatprep.subr.mxu0 0.0
        %2410 = vmatpush2.msra.mxu0 0.0
        %2411 = vmatprep.subr.mxu0 0.0
        %2412 = vmatpush2.msra.mxu0 0.0
        %2413 = vmatprep.mubr.f32.mxu0 0.0
        %2414 = vmatmul.mubr.f32.gmra.mxu0 %v2347
        %v2415 = vpop.f32.mrf.mxu0
        %v2416 = vadd.f32 0.0, %v2415
        %v2417 = vpop.f32.mrf.mxu0
        %2418 = vdwg.mxu0
        %v2420 = vsel %vm1851, %v2199, 0
        %2422 = vmatprep.subr.mxu0 0.0
        %2423 = vmatpush1.msra.mxu0 0.0
        %2424 = vmatprep.subr.mxu0 0.0
        %2425 = vmatpush1.msra.mxu0 0.0
        %2426 = vmatprep.subr.mxu0 0.0
        %2427 = vmatpush1.msra.mxu0 0.0
        %2428 = vmatprep.subr.mxu0 0.0
        %2429 = vmatpush1.msra.mxu0 0.0
        %2430 = vmatprep.subr.mxu0 0.0
        %2431 = vmatpush1.msra.mxu0 0.0
        %2432 = vmatprep.subr.mxu0 0.0
        %2433 = vmatpush1.msra.mxu0 0.0
        %2434 = vmatprep.subr.mxu0 0.0
        %2435 = vmatpush1.msra.mxu0 0.0
        %2436 = vmatprep.subr.mxu0 0.0
        %2437 = vmatpush1.msra.mxu0 0.0
        %2438 = vmatprep.subr.mxu0 0.0
        %2439 = vmatpush1.msra.mxu0 0.0
        %2440 = vmatprep.subr.mxu0 0.0
        %2441 = vmatpush1.msra.mxu0 0.0
        %2442 = vmatprep.subr.mxu0 0.0
        %2443 = vmatpush1.msra.mxu0 0.0
        %2444 = vmatprep.subr.mxu0 0.0
        %2445 = vmatpush1.msra.mxu0 0.0
        %2446 = vmatprep.subr.mxu0 0.0
        %2447 = vmatpush1.msra.mxu0 0.0
        %2448 = vmatprep.subr.mxu0 0.0
        %2449 = vmatpush1.msra.mxu0 0.0
        %2450 = vmatprep.subr.mxu0 0.0
        %2451 = vmatpush1.msra.mxu0 0.0
        %2452 = vmatprep.subr.mxu0 0.0
        %2453 = vmatpush1.msra.mxu0 %v1848
        %2454 = vmatprep.subr.mxu0 0.0
        %2455 = vmatpush2.msra.mxu0 0.0
        %2456 = vmatprep.subr.mxu0 0.0
        %2457 = vmatpush2.msra.mxu0 0.0
        %2458 = vmatprep.subr.mxu0 0.0
        %2459 = vmatpush2.msra.mxu0 0.0
        %2460 = vmatprep.subr.mxu0 0.0
        %2461 = vmatpush2.msra.mxu0 0.0
        %2462 = vmatprep.subr.mxu0 0.0
        %2463 = vmatpush2.msra.mxu0 0.0
        %2464 = vmatprep.subr.mxu0 0.0
        %2465 = vmatpush2.msra.mxu0 0.0
        %2466 = vmatprep.subr.mxu0 0.0
        %2467 = vmatpush2.msra.mxu0 0.0
        %2468 = vmatprep.subr.mxu0 0.0
        %2469 = vmatpush2.msra.mxu0 0.0
        %2470 = vmatprep.subr.mxu0 0.0
        %2471 = vmatpush2.msra.mxu0 0.0
        %2472 = vmatprep.subr.mxu0 0.0
        %2473 = vmatpush2.msra.mxu0 0.0
        %2474 = vmatprep.subr.mxu0 0.0
        %2475 = vmatpush2.msra.mxu0 0.0
        %2476 = vmatprep.subr.mxu0 0.0
        %2477 = vmatpush2.msra.mxu0 0.0
        %2478 = vmatprep.subr.mxu0 0.0
        %2479 = vmatpush2.msra.mxu0 0.0
        %2480 = vmatprep.subr.mxu0 0.0
        %2481 = vmatpush2.msra.mxu0 0.0
        %2482 = vmatprep.subr.mxu0 0.0
        %2483 = vmatpush2.msra.mxu0 0.0
        %2484 = vmatprep.subr.mxu0 0.0
        %2485 = vmatpush2.msra.mxu0 0.0
        %2486 = vmatprep.mubr.f32.mxu0 0.0
        %2487 = vmatmul.mubr.f32.gmra.mxu0 %v2420
        %v2488 = vpop.f32.mrf.mxu0
        %v2489 = vadd.f32 0.0, %v2488
        %v2490 = vpop.f32.mrf.mxu0
        %2491 = vdwg.mxu0
        %v2492 = vld [vmem:[%s9] sm:$0xff]
        %v2493 = vld [vmem:[%s9 + $0x8] sm:$0xff]
        %v2494 = vld [vmem:[%s9 + $0x10] sm:$0xff]
        %v2495 = vld [vmem:[%s9 + $0x18] sm:$0xff]
        %v2497 = vsel %vm1851, %v2270, 0
        %2499 = vmatprep.subr.mxu0 0.0
        %2500 = vmatpush1.msra.mxu0 0.0
        %2501 = vmatprep.subr.mxu0 0.0
        %2502 = vmatpush1.msra.mxu0 0.0
        %2503 = vmatprep.subr.mxu0 0.0
        %2504 = vmatpush1.msra.mxu0 0.0
        %2505 = vmatprep.subr.mxu0 0.0
        %2506 = vmatpush1.msra.mxu0 0.0
        %2507 = vmatprep.subr.mxu0 0.0
        %2508 = vmatpush1.msra.mxu0 0.0
        %2509 = vmatprep.subr.mxu0 0.0
        %2510 = vmatpush1.msra.mxu0 0.0
        %2511 = vmatprep.subr.mxu0 0.0
        %2512 = vmatpush1.msra.mxu0 0.0
        %2513 = vmatprep.subr.mxu0 0.0
        %2514 = vmatpush1.msra.mxu0 0.0
        %2515 = vmatprep.subr.mxu0 0.0
        %2516 = vmatpush1.msra.mxu0 0.0
        %2517 = vmatprep.subr.mxu0 0.0
        %2518 = vmatpush1.msra.mxu0 0.0
        %2519 = vmatprep.subr.mxu0 0.0
        %2520 = vmatpush1.msra.mxu0 0.0
        %2521 = vmatprep.subr.mxu0 0.0
        %2522 = vmatpush1.msra.mxu0 0.0
        %2523 = vmatprep.subr.mxu0 0.0
        %2524 = vmatpush1.msra.mxu0 0.0
        %2525 = vmatprep.subr.mxu0 0.0
        %2526 = vmatpush1.msra.mxu0 0.0
        %2527 = vmatprep.subr.mxu0 0.0
        %2528 = vmatpush1.msra.mxu0 0.0
        %2529 = vmatprep.subr.mxu0 0.0
        %2530 = vmatpush1.msra.mxu0 %v2492
        %2531 = vmatprep.subr.mxu0 0.0
        %2532 = vmatpush2.msra.mxu0 0.0
        %2533 = vmatprep.subr.mxu0 0.0
        %2534 = vmatpush2.msra.mxu0 0.0
        %2535 = vmatprep.subr.mxu0 0.0
        %2536 = vmatpush2.msra.mxu0 0.0
        %2537 = vmatprep.subr.mxu0 0.0
        %2538 = vmatpush2.msra.mxu0 0.0
        %2539 = vmatprep.subr.mxu0 0.0
        %2540 = vmatpush2.msra.mxu0 0.0
        %2541 = vmatprep.subr.mxu0 0.0
        %2542 = vmatpush2.msra.mxu0 0.0
        %2543 = vmatprep.subr.mxu0 0.0
        %2544 = vmatpush2.msra.mxu0 0.0
        %2545 = vmatprep.subr.mxu0 0.0
        %2546 = vmatpush2.msra.mxu0 0.0
        %2547 = vmatprep.subr.mxu0 0.0
        %2548 = vmatpush2.msra.mxu0 0.0
        %2549 = vmatprep.subr.mxu0 0.0
        %2550 = vmatpush2.msra.mxu0 0.0
        %2551 = vmatprep.subr.mxu0 0.0
        %2552 = vmatpush2.msra.mxu0 0.0
        %2553 = vmatprep.subr.mxu0 0.0
        %2554 = vmatpush2.msra.mxu0 0.0
        %2555 = vmatprep.subr.mxu0 0.0
        %2556 = vmatpush2.msra.mxu0 0.0
        %2557 = vmatprep.subr.mxu0 0.0
        %2558 = vmatpush2.msra.mxu0 0.0
        %2559 = vmatprep.subr.mxu0 0.0
        %2560 = vmatpush2.msra.mxu0 0.0
        %2561 = vmatprep.subr.mxu0 0.0
        %2562 = vmatpush2.msra.mxu0 0.0
        %2563 = vmatprep.mubr.f32.mxu0 0.0
        %2564 = vmatmul.mubr.f32.gmra.mxu0 %v2497
        %v2565 = vpop.f32.mrf.mxu0
        %v2566 = vadd.f32 0.0, %v2565
        %v2567 = vpop.f32.mrf.mxu0
        %2568 = vdwg.mxu0
        %v2570 = vsel %vm1851, %v2343, 0
        %2572 = vmatprep.subr.mxu0 0.0
        %2573 = vmatpush1.msra.mxu0 0.0
        %2574 = vmatprep.subr.mxu0 0.0
        %2575 = vmatpush1.msra.mxu0 0.0
        %2576 = vmatprep.subr.mxu0 0.0
        %2577 = vmatpush1.msra.mxu0 0.0
        %2578 = vmatprep.subr.mxu0 0.0
        %2579 = vmatpush1.msra.mxu0 0.0
        %2580 = vmatprep.subr.mxu0 0.0
        %2581 = vmatpush1.msra.mxu0 0.0
        %2582 = vmatprep.subr.mxu0 0.0
        %2583 = vmatpush1.msra.mxu0 0.0
        %2584 = vmatprep.subr.mxu0 0.0
        %2585 = vmatpush1.msra.mxu0 0.0
        %2586 = vmatprep.subr.mxu0 0.0
        %2587 = vmatpush1.msra.mxu0 0.0
        %2588 = vmatprep.subr.mxu0 0.0
        %2589 = vmatpush1.msra.mxu0 0.0
        %2590 = vmatprep.subr.mxu0 0.0
        %2591 = vmatpush1.msra.mxu0 0.0
        %2592 = vmatprep.subr.mxu0 0.0
        %2593 = vmatpush1.msra.mxu0 0.0
        %2594 = vmatprep.subr.mxu0 0.0
        %2595 = vmatpush1.msra.mxu0 0.0
        %2596 = vmatprep.subr.mxu0 0.0
        %2597 = vmatpush1.msra.mxu0 0.0
        %2598 = vmatprep.subr.mxu0 0.0
        %2599 = vmatpush1.msra.mxu0 0.0
        %2600 = vmatprep.subr.mxu0 0.0
        %2601 = vmatpush1.msra.mxu0 0.0
        %2602 = vmatprep.subr.mxu0 0.0
        %2603 = vmatpush1.msra.mxu0 %v2493
        %2604 = vmatprep.subr.mxu0 0.0
        %2605 = vmatpush2.msra.mxu0 0.0
        %2606 = vmatprep.subr.mxu0 0.0
        %2607 = vmatpush2.msra.mxu0 0.0
        %2608 = vmatprep.subr.mxu0 0.0
        %2609 = vmatpush2.msra.mxu0 0.0
        %2610 = vmatprep.subr.mxu0 0.0
        %2611 = vmatpush2.msra.mxu0 0.0
        %2612 = vmatprep.subr.mxu0 0.0
        %2613 = vmatpush2.msra.mxu0 0.0
        %2614 = vmatprep.subr.mxu0 0.0
        %2615 = vmatpush2.msra.mxu0 0.0
        %2616 = vmatprep.subr.mxu0 0.0
        %2617 = vmatpush2.msra.mxu0 0.0
        %2618 = vmatprep.subr.mxu0 0.0
        %2619 = vmatpush2.msra.mxu0 0.0
        %2620 = vmatprep.subr.mxu0 0.0
        %2621 = vmatpush2.msra.mxu0 0.0
        %2622 = vmatprep.subr.mxu0 0.0
        %2623 = vmatpush2.msra.mxu0 0.0
        %2624 = vmatprep.subr.mxu0 0.0
        %2625 = vmatpush2.msra.mxu0 0.0
        %2626 = vmatprep.subr.mxu0 0.0
        %2627 = vmatpush2.msra.mxu0 0.0
        %2628 = vmatprep.subr.mxu0 0.0
        %2629 = vmatpush2.msra.mxu0 0.0
        %2630 = vmatprep.subr.mxu0 0.0
        %2631 = vmatpush2.msra.mxu0 0.0
        %2632 = vmatprep.subr.mxu0 0.0
        %2633 = vmatpush2.msra.mxu0 0.0
        %2634 = vmatprep.subr.mxu0 0.0
        %2635 = vmatpush2.msra.mxu0 0.0
        %2636 = vmatprep.mubr.f32.mxu0 0.0
        %2637 = vmatmul.mubr.f32.gmra.mxu0 %v2570
        %v2638 = vpop.f32.mrf.mxu0
        %v2639 = vadd.f32 0.0, %v2638
        %v2640 = vpop.f32.mrf.mxu0
        %2641 = vdwg.mxu0
        %v2643 = vsel %vm1851, %v2416, 0
        %2645 = vmatprep.subr.mxu0 0.0
        %2646 = vmatpush1.msra.mxu0 0.0
        %2647 = vmatprep.subr.mxu0 0.0
        %2648 = vmatpush1.msra.mxu0 0.0
        %2649 = vmatprep.subr.mxu0 0.0
        %2650 = vmatpush1.msra.mxu0 0.0
        %2651 = vmatprep.subr.mxu0 0.0
        %2652 = vmatpush1.msra.mxu0 0.0
        %2653 = vmatprep.subr.mxu0 0.0
        %2654 = vmatpush1.msra.mxu0 0.0
        %2655 = vmatprep.subr.mxu0 0.0
        %2656 = vmatpush1.msra.mxu0 0.0
        %2657 = vmatprep.subr.mxu0 0.0
        %2658 = vmatpush1.msra.mxu0 0.0
        %2659 = vmatprep.subr.mxu0 0.0
        %2660 = vmatpush1.msra.mxu0 0.0
        %2661 = vmatprep.subr.mxu0 0.0
        %2662 = vmatpush1.msra.mxu0 0.0
        %2663 = vmatprep.subr.mxu0 0.0
        %2664 = vmatpush1.msra.mxu0 0.0
        %2665 = vmatprep.subr.mxu0 0.0
        %2666 = vmatpush1.msra.mxu0 0.0
        %2667 = vmatprep.subr.mxu0 0.0
        %2668 = vmatpush1.msra.mxu0 0.0
        %2669 = vmatprep.subr.mxu0 0.0
        %2670 = vmatpush1.msra.mxu0 0.0
        %2671 = vmatprep.subr.mxu0 0.0
        %2672 = vmatpush1.msra.mxu0 0.0
        %2673 = vmatprep.subr.mxu0 0.0
        %2674 = vmatpush1.msra.mxu0 0.0
        %2675 = vmatprep.subr.mxu0 0.0
        %2676 = vmatpush1.msra.mxu0 %v2494
        %2677 = vmatprep.subr.mxu0 0.0
        %2678 = vmatpush2.msra.mxu0 0.0
        %2679 = vmatprep.subr.mxu0 0.0
        %2680 = vmatpush2.msra.mxu0 0.0
        %2681 = vmatprep.subr.mxu0 0.0
        %2682 = vmatpush2.msra.mxu0 0.0
        %2683 = vmatprep.subr.mxu0 0.0
        %2684 = vmatpush2.msra.mxu0 0.0
        %2685 = vmatprep.subr.mxu0 0.0
        %2686 = vmatpush2.msra.mxu0 0.0
        %2687 = vmatprep.subr.mxu0 0.0
        %2688 = vmatpush2.msra.mxu0 0.0
        %2689 = vmatprep.subr.mxu0 0.0
        %2690 = vmatpush2.msra.mxu0 0.0
        %2691 = vmatprep.subr.mxu0 0.0
        %2692 = vmatpush2.msra.mxu0 0.0
        %2693 = vmatprep.subr.mxu0 0.0
        %2694 = vmatpush2.msra.mxu0 0.0
        %2695 = vmatprep.subr.mxu0 0.0
        %2696 = vmatpush2.msra.mxu0 0.0
        %2697 = vmatprep.subr.mxu0 0.0
        %2698 = vmatpush2.msra.mxu0 0.0
        %2699 = vmatprep.subr.mxu0 0.0
        %2700 = vmatpush2.msra.mxu0 0.0
        %2701 = vmatprep.subr.mxu0 0.0
        %2702 = vmatpush2.msra.mxu0 0.0
        %2703 = vmatprep.subr.mxu0 0.0
        %2704 = vmatpush2.msra.mxu0 0.0
        %2705 = vmatprep.subr.mxu0 0.0
        %2706 = vmatpush2.msra.mxu0 0.0
        %2707 = vmatprep.subr.mxu0 0.0
        %2708 = vmatpush2.msra.mxu0 0.0
        %2709 = vmatprep.mubr.f32.mxu0 0.0
        %2710 = vmatmul.mubr.f32.gmra.mxu0 %v2643
        %v2711 = vpop.f32.mrf.mxu0
        %v2712 = vadd.f32 0.0, %v2711
        %v2713 = vpop.f32.mrf.mxu0
        %2714 = vdwg.mxu0
        %v2716 = vsel %vm1851, %v2489, 0
        %2718 = vmatprep.subr.mxu0 0.0
        %2719 = vmatpush1.msra.mxu0 0.0
        %2720 = vmatprep.subr.mxu0 0.0
        %2721 = vmatpush1.msra.mxu0 0.0
        %2722 = vmatprep.subr.mxu0 0.0
        %2723 = vmatpush1.msra.mxu0 0.0
        %2724 = vmatprep.subr.mxu0 0.0
        %2725 = vmatpush1.msra.mxu0 0.0
        %2726 = vmatprep.subr.mxu0 0.0
        %2727 = vmatpush1.msra.mxu0 0.0
        %2728 = vmatprep.subr.mxu0 0.0
        %2729 = vmatpush1.msra.mxu0 0.0
        %2730 = vmatprep.subr.mxu0 0.0
        %2731 = vmatpush1.msra.mxu0 0.0
        %2732 = vmatprep.subr.mxu0 0.0
        %2733 = vmatpush1.msra.mxu0 0.0
        %2734 = vmatprep.subr.mxu0 0.0
        %2735 = vmatpush1.msra.mxu0 0.0
        %2736 = vmatprep.subr.mxu0 0.0
        %2737 = vmatpush1.msra.mxu0 0.0
        %2738 = vmatprep.subr.mxu0 0.0
        %2739 = vmatpush1.msra.mxu0 0.0
        %2740 = vmatprep.subr.mxu0 0.0
        %2741 = vmatpush1.msra.mxu0 0.0
        %2742 = vmatprep.subr.mxu0 0.0
        %2743 = vmatpush1.msra.mxu0 0.0
        %2744 = vmatprep.subr.mxu0 0.0
        %2745 = vmatpush1.msra.mxu0 0.0
        %2746 = vmatprep.subr.mxu0 0.0
        %2747 = vmatpush1.msra.mxu0 0.0
        %2748 = vmatprep.subr.mxu0 0.0
        %2749 = vmatpush1.msra.mxu0 %v2495
        %2750 = vmatprep.subr.mxu0 0.0
        %2751 = vmatpush2.msra.mxu0 0.0
        %2752 = vmatprep.subr.mxu0 0.0
        %2753 = vmatpush2.msra.mxu0 0.0
        %2754 = vmatprep.subr.mxu0 0.0
        %2755 = vmatpush2.msra.mxu0 0.0
        %2756 = vmatprep.subr.mxu0 0.0
        %2757 = vmatpush2.msra.mxu0 0.0
        %2758 = vmatprep.subr.mxu0 0.0
        %2759 = vmatpush2.msra.mxu0 0.0
        %2760 = vmatprep.subr.mxu0 0.0
        %2761 = vmatpush2.msra.mxu0 0.0
        %2762 = vmatprep.subr.mxu0 0.0
        %2763 = vmatpush2.msra.mxu0 0.0
        %2764 = vmatprep.subr.mxu0 0.0
        %2765 = vmatpush2.msra.mxu0 0.0
        %2766 = vmatprep.subr.mxu0 0.0
        %2767 = vmatpush2.msra.mxu0 0.0
        %2768 = vmatprep.subr.mxu0 0.0
        %2769 = vmatpush2.msra.mxu0 0.0
        %2770 = vmatprep.subr.mxu0 0.0
        %2771 = vmatpush2.msra.mxu0 0.0
        %2772 = vmatprep.subr.mxu0 0.0
        %2773 = vmatpush2.msra.mxu0 0.0
        %2774 = vmatprep.subr.mxu0 0.0
        %2775 = vmatpush2.msra.mxu0 0.0
        %2776 = vmatprep.subr.mxu0 0.0
        %2777 = vmatpush2.msra.mxu0 0.0
        %2778 = vmatprep.subr.mxu0 0.0
        %2779 = vmatpush2.msra.mxu0 0.0
        %2780 = vmatprep.subr.mxu0 0.0
        %2781 = vmatpush2.msra.mxu0 0.0
        %2782 = vmatprep.mubr.f32.mxu0 0.0
        %2783 = vmatmul.mubr.f32.gmra.mxu0 %v2716
        %v2784 = vpop.f32.mrf.mxu0
        %v2785 = vadd.f32 0.0, %v2784
        %v2786 = vpop.f32.mrf.mxu0
        %2787 = vdwg.mxu0
        %v2788 = vadd.f32 %v2566, %v2639
        %v2789 = vadd.f32 %v2788, %v2712
        %v2790 = vadd.f32 %v2789, %v2785
        %v2791 = vadd.f32 %v842, %v2790
        %v2792 = vld [vmem:[%s10] sm:$0x1]
        %v2794 = vlaneseq
        %v2795 = vshrl.u32 %v2794, 7
        %v2796 = vsub.s32 0, %v2795
        %v2797 = vrot.slane %v2792, %v2796
        %v2799 = vadd.f32 %v2791, %v2797
        %v2800 = vld [vmem:[%s13] sm:$0x1]
        %v2801 = vld [vmem:[%s14] sm:$0x1]
        %v2802 = vsel %vm847, %v2799, 0.0
        %2803 = vadd.xlane.f32.xlu0 %v2802
        %v2804 = vpop.xlane.xlu0 %2803
        %v2805 = vmul.f32 %v2804, %v851
        %v2806 = vsub.f32 %v2799, %v2805
        %v2807 = vmul.f32 %v2806, %v2806
        %v2808 = vsel %vm847, %v2807, 0.0
        %2809 = vadd.xlane.f32.xlu0 %v2808
        %v2810 = vpop.xlane.xlu0 %2809
        %v2811 = vmul.f32 %v2810, %v851
        %v2812 = vadd.f32 %v2811, 1e-05
        %v2813 = vrsqrt.pop %v2812
        %v2814 = vmul.f32 %v2806, %v2813
        %v2816 = vlaneseq
        %v2817 = vshrl.u32 %v2816, 7
        %v2818 = vsub.s32 0, %v2817
        %v2819 = vrot.slane %v2800, %v2818
        %v2821 = vmul.f32 %v2814, %v2819
        %v2823 = vlaneseq
        %v2824 = vshrl.u32 %v2823, 7
        %v2825 = vsub.s32 0, %v2824
        %v2826 = vrot.slane %v2801, %v2825
        %v2828 = vadd.f32 %v2821, %v2826
        %v2829 = vld [vmem:[%s15] sm:$0xff]
        %v2830 = vld [vmem:[%s15 + $0x8] sm:$0xff]
        %v2831 = vld [vmem:[%s15 + $0x10] sm:$0xff]
        %v2832 = vld [vmem:[%s15 + $0x18] sm:$0xff]
        %v2833 = vld [vmem:[%s16] sm:$0x1]
        %v2835 = vlaneseq
        %v2836 = vshrl.u32 %v2835, 7
        %v2837 = vsub.s32 0, %v2836
        %v2838 = vrot.slane %v2833, %v2837
        %v2841 = vsel %vm847, %v2828, 0
        %2843 = vmatprep.subr.mxu0 0.0
        %2844 = vmatpush1.msra.mxu0 0.0
        %2845 = vmatprep.subr.mxu0 0.0
        %2846 = vmatpush1.msra.mxu0 0.0
        %2847 = vmatprep.subr.mxu0 0.0
        %2848 = vmatpush1.msra.mxu0 0.0
        %2849 = vmatprep.subr.mxu0 0.0
        %2850 = vmatpush1.msra.mxu0 0.0
        %2851 = vmatprep.subr.mxu0 0.0
        %2852 = vmatpush1.msra.mxu0 0.0
        %2853 = vmatprep.subr.mxu0 0.0
        %2854 = vmatpush1.msra.mxu0 0.0
        %2855 = vmatprep.subr.mxu0 0.0
        %2856 = vmatpush1.msra.mxu0 0.0
        %2857 = vmatprep.subr.mxu0 0.0
        %2858 = vmatpush1.msra.mxu0 0.0
        %2859 = vmatprep.subr.mxu0 0.0
        %2860 = vmatpush1.msra.mxu0 0.0
        %2861 = vmatprep.subr.mxu0 0.0
        %2862 = vmatpush1.msra.mxu0 0.0
        %2863 = vmatprep.subr.mxu0 0.0
        %2864 = vmatpush1.msra.mxu0 0.0
        %2865 = vmatprep.subr.mxu0 0.0
        %2866 = vmatpush1.msra.mxu0 0.0
        %2867 = vmatprep.subr.mxu0 0.0
        %2868 = vmatpush1.msra.mxu0 %v2832
        %2869 = vmatprep.subr.mxu0 0.0
        %2870 = vmatpush1.msra.mxu0 %v2831
        %2871 = vmatprep.subr.mxu0 0.0
        %2872 = vmatpush1.msra.mxu0 %v2830
        %2873 = vmatprep.subr.mxu0 0.0
        %2874 = vmatpush1.msra.mxu0 %v2829
        %2875 = vmatprep.subr.mxu0 0.0
        %2876 = vmatpush2.msra.mxu0 0.0
        %2877 = vmatprep.subr.mxu0 0.0
        %2878 = vmatpush2.msra.mxu0 0.0
        %2879 = vmatprep.subr.mxu0 0.0
        %2880 = vmatpush2.msra.mxu0 0.0
        %2881 = vmatprep.subr.mxu0 0.0
        %2882 = vmatpush2.msra.mxu0 0.0
        %2883 = vmatprep.subr.mxu0 0.0
        %2884 = vmatpush2.msra.mxu0 0.0
        %2885 = vmatprep.subr.mxu0 0.0
        %2886 = vmatpush2.msra.mxu0 0.0
        %2887 = vmatprep.subr.mxu0 0.0
        %2888 = vmatpush2.msra.mxu0 0.0
        %2889 = vmatprep.subr.mxu0 0.0
        %2890 = vmatpush2.msra.mxu0 0.0
        %2891 = vmatprep.subr.mxu0 0.0
        %2892 = vmatpush2.msra.mxu0 0.0
        %2893 = vmatprep.subr.mxu0 0.0
        %2894 = vmatpush2.msra.mxu0 0.0
        %2895 = vmatprep.subr.mxu0 0.0
        %2896 = vmatpush2.msra.mxu0 0.0
        %2897 = vmatprep.subr.mxu0 0.0
        %2898 = vmatpush2.msra.mxu0 0.0
        %2899 = vmatprep.subr.mxu0 0.0
        %2900 = vmatpush2.msra.mxu0 0.0
        %2901 = vmatprep.subr.mxu0 0.0
        %2902 = vmatpush2.msra.mxu0 0.0
        %2903 = vmatprep.subr.mxu0 0.0
        %2904 = vmatpush2.msra.mxu0 0.0
        %2905 = vmatprep.subr.mxu0 0.0
        %2906 = vmatpush2.msra.mxu0 0.0
        %2907 = vmatprep.mubr.f32.mxu0 0.0
        %2908 = vmatmul.mubr.f32.gmra.mxu0 %v2841
        %v2909 = vpop.f32.mrf.mxu0
        %v2910 = vadd.f32 %v2838, %v2909
        %v2911 = vpop.f32.mrf.mxu0
        %2912 = vdwg.mxu0
        %v2913 = vmax.f32 %v2910, 0.0
        %v2914 = vld [vmem:[%s17] sm:$0xff]
        %v2915 = vld [vmem:[%s17 + $0x8] sm:$0xff]
        %v2916 = vld [vmem:[%s17 + $0x10] sm:$0xff]
        %v2917 = vld [vmem:[%s17 + $0x18] sm:$0xff]
        %v2918 = vld [vmem:[%s18] sm:$0x1]
        %v2920 = vlaneseq
        %v2921 = vshrl.u32 %v2920, 7
        %v2922 = vsub.s32 0, %v2921
        %v2923 = vrot.slane %v2918, %v2922
        %v2926 = vsel %vm847, %v2913, 0
        %2928 = vmatprep.subr.mxu0 0.0
        %2929 = vmatpush1.msra.mxu0 0.0
        %2930 = vmatprep.subr.mxu0 0.0
        %2931 = vmatpush1.msra.mxu0 0.0
        %2932 = vmatprep.subr.mxu0 0.0
        %2933 = vmatpush1.msra.mxu0 0.0
        %2934 = vmatprep.subr.mxu0 0.0
        %2935 = vmatpush1.msra.mxu0 0.0
        %2936 = vmatprep.subr.mxu0 0.0
        %2937 = vmatpush1.msra.mxu0 0.0
        %2938 = vmatprep.subr.mxu0 0.0
        %2939 = vmatpush1.msra.mxu0 0.0
        %2940 = vmatprep.subr.mxu0 0.0
        %2941 = vmatpush1.msra.mxu0 0.0
        %2942 = vmatprep.subr.mxu0 0.0
        %2943 = vmatpush1.msra.mxu0 0.0
        %2944 = vmatprep.subr.mxu0 0.0
        %2945 = vmatpush1.msra.mxu0 0.0
        %2946 = vmatprep.subr.mxu0 0.0
        %2947 = vmatpush1.msra.mxu0 0.0
        %2948 = vmatprep.subr.mxu0 0.0
        %2949 = vmatpush1.msra.mxu0 0.0
        %2950 = vmatprep.subr.mxu0 0.0
        %2951 = vmatpush1.msra.mxu0 0.0
        %2952 = vmatprep.subr.mxu0 0.0
        %2953 = vmatpush1.msra.mxu0 %v2917
        %2954 = vmatprep.subr.mxu0 0.0
        %2955 = vmatpush1.msra.mxu0 %v2916
        %2956 = vmatprep.subr.mxu0 0.0
        %2957 = vmatpush1.msra.mxu0 %v2915
        %2958 = vmatprep.subr.mxu0 0.0
        %2959 = vmatpush1.msra.mxu0 %v2914
        %2960 = vmatprep.subr.mxu0 0.0
        %2961 = vmatpush2.msra.mxu0 0.0
        %2962 = vmatprep.subr.mxu0 0.0
        %2963 = vmatpush2.msra.mxu0 0.0
        %2964 = vmatprep.subr.mxu0 0.0
        %2965 = vmatpush2.msra.mxu0 0.0
        %2966 = vmatprep.subr.mxu0 0.0
        %2967 = vmatpush2.msra.mxu0 0.0
        %2968 = vmatprep.subr.mxu0 0.0
        %2969 = vmatpush2.msra.mxu0 0.0
        %2970 = vmatprep.subr.mxu0 0.0
        %2971 = vmatpush2.msra.mxu0 0.0
        %2972 = vmatprep.subr.mxu0 0.0
        %2973 = vmatpush2.msra.mxu0 0.0
        %2974 = vmatprep.subr.mxu0 0.0
        %2975 = vmatpush2.msra.mxu0 0.0
        %2976 = vmatprep.subr.mxu0 0.0
        %2977 = vmatpush2.msra.mxu0 0.0
        %2978 = vmatprep.subr.mxu0 0.0
        %2979 = vmatpush2.msra.mxu0 0.0
        %2980 = vmatprep.subr.mxu0 0.0
        %2981 = vmatpush2.msra.mxu0 0.0
        %2982 = vmatprep.subr.mxu0 0.0
        %2983 = vmatpush2.msra.mxu0 0.0
        %2984 = vmatprep.subr.mxu0 0.0
        %2985 = vmatpush2.msra.mxu0 0.0
        %2986 = vmatprep.subr.mxu0 0.0
        %2987 = vmatpush2.msra.mxu0 0.0
        %2988 = vmatprep.subr.mxu0 0.0
        %2989 = vmatpush2.msra.mxu0 0.0
        %2990 = vmatprep.subr.mxu0 0.0
        %2991 = vmatpush2.msra.mxu0 0.0
        %2992 = vmatprep.mubr.f32.mxu0 0.0
        %2993 = vmatmul.mubr.f32.gmra.mxu0 %v2926
        %v2994 = vpop.f32.mrf.mxu0
        %v2995 = vadd.f32 %v2923, %v2994
        %v2996 = vpop.f32.mrf.mxu0
        %2997 = vdwg.mxu0
        %v2998 = vadd.f32 %v2799, %v2995
        %v2999 = vld [vmem:[%s19] sm:$0xff]
        %v3000 = vld [vmem:[%s19 + $0x8] sm:$0xff]
        %v3001 = vld [vmem:[%s19 + $0x10] sm:$0xff]
        %v3002 = vld [vmem:[%s19 + $0x18] sm:$0xff]
        %v3003 = vld [vmem:[%s20] sm:$0x1]
        %v3005 = vlaneseq
        %v3006 = vshrl.u32 %v3005, 7
        %v3007 = vsub.s32 0, %v3006
        %v3008 = vrot.slane %v3003, %v3007
        %v3011 = vsel %vm847, %v2998, 0
        %3013 = vmatprep.subr.mxu0 0.0
        %3014 = vmatpush1.msra.mxu0 0.0
        %3015 = vmatprep.subr.mxu0 0.0
        %3016 = vmatpush1.msra.mxu0 0.0
        %3017 = vmatprep.subr.mxu0 0.0
        %3018 = vmatpush1.msra.mxu0 0.0
        %3019 = vmatprep.subr.mxu0 0.0
        %3020 = vmatpush1.msra.mxu0 0.0
        %3021 = vmatprep.subr.mxu0 0.0
        %3022 = vmatpush1.msra.mxu0 0.0
        %3023 = vmatprep.subr.mxu0 0.0
        %3024 = vmatpush1.msra.mxu0 0.0
        %3025 = vmatprep.subr.mxu0 0.0
        %3026 = vmatpush1.msra.mxu0 0.0
        %3027 = vmatprep.subr.mxu0 0.0
        %3028 = vmatpush1.msra.mxu0 0.0
        %3029 = vmatprep.subr.mxu0 0.0
        %3030 = vmatpush1.msra.mxu0 0.0
        %3031 = vmatprep.subr.mxu0 0.0
        %3032 = vmatpush1.msra.mxu0 0.0
        %3033 = vmatprep.subr.mxu0 0.0
        %3034 = vmatpush1.msra.mxu0 0.0
        %3035 = vmatprep.subr.mxu0 0.0
        %3036 = vmatpush1.msra.mxu0 0.0
        %3037 = vmatprep.subr.mxu0 0.0
        %3038 = vmatpush1.msra.mxu0 %v3002
        %3039 = vmatprep.subr.mxu0 0.0
        %3040 = vmatpush1.msra.mxu0 %v3001
        %3041 = vmatprep.subr.mxu0 0.0
        %3042 = vmatpush1.msra.mxu0 %v3000
        %3043 = vmatprep.subr.mxu0 0.0
        %3044 = vmatpush1.msra.mxu0 %v2999
        %3045 = vmatprep.subr.mxu0 0.0
        %3046 = vmatpush2.msra.mxu0 0.0
        %3047 = vmatprep.subr.mxu0 0.0
        %3048 = vmatpush2.msra.mxu0 0.0
        %3049 = vmatprep.subr.mxu0 0.0
        %3050 = vmatpush2.msra.mxu0 0.0
        %3051 = vmatprep.subr.mxu0 0.0
        %3052 = vmatpush2.msra.mxu0 0.0
        %3053 = vmatprep.subr.mxu0 0.0
        %3054 = vmatpush2.msra.mxu0 0.0
        %3055 = vmatprep.subr.mxu0 0.0
        %3056 = vmatpush2.msra.mxu0 0.0
        %3057 = vmatprep.subr.mxu0 0.0
        %3058 = vmatpush2.msra.mxu0 0.0
        %3059 = vmatprep.subr.mxu0 0.0
        %3060 = vmatpush2.msra.mxu0 0.0
        %3061 = vmatprep.subr.mxu0 0.0
        %3062 = vmatpush2.msra.mxu0 0.0
        %3063 = vmatprep.subr.mxu0 0.0
        %3064 = vmatpush2.msra.mxu0 0.0
        %3065 = vmatprep.subr.mxu0 0.0
        %3066 = vmatpush2.msra.mxu0 0.0
        %3067 = vmatprep.subr.mxu0 0.0
        %3068 = vmatpush2.msra.mxu0 0.0
        %3069 = vmatprep.subr.mxu0 0.0
        %3070 = vmatpush2.msra.mxu0 0.0
        %3071 = vmatprep.subr.mxu0 0.0
        %3072 = vmatpush2.msra.mxu0 0.0
        %3073 = vmatprep.subr.mxu0 0.0
        %3074 = vmatpush2.msra.mxu0 0.0
        %3075 = vmatprep.subr.mxu0 0.0
        %3076 = vmatpush2.msra.mxu0 0.0
        %3077 = vmatprep.mubr.f32.mxu0 0.0
        %3078 = vmatmul.mubr.f32.gmra.mxu0 %v3011
        %v3079 = vpop.f32.mrf.mxu0
        %v3080 = vadd.f32 %v3008, %v3079
        %v3081 = vpop.f32.mrf.mxu0
        %3082 = vdwg.mxu0
        %v3083 = vmax.f32 %v3080, 0.0
        %v3084 = vld [vmem:[%s21] sm:$0xff]
        %v3085 = vld [vmem:[%s21 + $0x8] sm:$0xff]
        %v3086 = vld [vmem:[%s21 + $0x10] sm:$0xff]
        %v3087 = vld [vmem:[%s21 + $0x18] sm:$0xff]
        %v3088 = vld [vmem:[%s22] sm:$0x1]
        %v3090 = vlaneseq
        %v3091 = vshrl.u32 %v3090, 7
        %v3092 = vsub.s32 0, %v3091
        %v3093 = vrot.slane %v3088, %v3092
        %v3096 = vsel %vm847, %v3083, 0
        %3098 = vmatprep.subr.mxu0 0.0
        %3099 = vmatpush1.msra.mxu0 0.0
        %3100 = vmatprep.subr.mxu0 0.0
        %3101 = vmatpush1.msra.mxu0 0.0
        %3102 = vmatprep.subr.mxu0 0.0
        %3103 = vmatpush1.msra.mxu0 0.0
        %3104 = vmatprep.subr.mxu0 0.0
        %3105 = vmatpush1.msra.mxu0 0.0
        %3106 = vmatprep.subr.mxu0 0.0
        %3107 = vmatpush1.msra.mxu0 0.0
        %3108 = vmatprep.subr.mxu0 0.0
        %3109 = vmatpush1.msra.mxu0 0.0
        %3110 = vmatprep.subr.mxu0 0.0
        %3111 = vmatpush1.msra.mxu0 0.0
        %3112 = vmatprep.subr.mxu0 0.0
        %3113 = vmatpush1.msra.mxu0 0.0
        %3114 = vmatprep.subr.mxu0 0.0
        %3115 = vmatpush1.msra.mxu0 0.0
        %3116 = vmatprep.subr.mxu0 0.0
        %3117 = vmatpush1.msra.mxu0 0.0
        %3118 = vmatprep.subr.mxu0 0.0
        %3119 = vmatpush1.msra.mxu0 0.0
        %3120 = vmatprep.subr.mxu0 0.0
        %3121 = vmatpush1.msra.mxu0 0.0
        %3122 = vmatprep.subr.mxu0 0.0
        %3123 = vmatpush1.msra.mxu0 %v3087
        %3124 = vmatprep.subr.mxu0 0.0
        %3125 = vmatpush1.msra.mxu0 %v3086
        %3126 = vmatprep.subr.mxu0 0.0
        %3127 = vmatpush1.msra.mxu0 %v3085
        %3128 = vmatprep.subr.mxu0 0.0
        %3129 = vmatpush1.msra.mxu0 %v3084
        %3130 = vmatprep.subr.mxu0 0.0
        %3131 = vmatpush2.msra.mxu0 0.0
        %3132 = vmatprep.subr.mxu0 0.0
        %3133 = vmatpush2.msra.mxu0 0.0
        %3134 = vmatprep.subr.mxu0 0.0
        %3135 = vmatpush2.msra.mxu0 0.0
        %3136 = vmatprep.subr.mxu0 0.0
        %3137 = vmatpush2.msra.mxu0 0.0
        %3138 = vmatprep.subr.mxu0 0.0
        %3139 = vmatpush2.msra.mxu0 0.0
        %3140 = vmatprep.subr.mxu0 0.0
        %3141 = vmatpush2.msra.mxu0 0.0
        %3142 = vmatprep.subr.mxu0 0.0
        %3143 = vmatpush2.msra.mxu0 0.0
        %3144 = vmatprep.subr.mxu0 0.0
        %3145 = vmatpush2.msra.mxu0 0.0
        %3146 = vmatprep.subr.mxu0 0.0
        %3147 = vmatpush2.msra.mxu0 0.0
        %3148 = vmatprep.subr.mxu0 0.0
        %3149 = vmatpush2.msra.mxu0 0.0
        %3150 = vmatprep.subr.mxu0 0.0
        %3151 = vmatpush2.msra.mxu0 0.0
        %3152 = vmatprep.subr.mxu0 0.0
        %3153 = vmatpush2.msra.mxu0 0.0
        %3154 = vmatprep.subr.mxu0 0.0
        %3155 = vmatpush2.msra.mxu0 0.0
        %3156 = vmatprep.subr.mxu0 0.0
        %3157 = vmatpush2.msra.mxu0 0.0
        %3158 = vmatprep.subr.mxu0 0.0
        %3159 = vmatpush2.msra.mxu0 0.0
        %3160 = vmatprep.subr.mxu0 0.0
        %3161 = vmatpush2.msra.mxu0 0.0
        %3162 = vmatprep.mubr.f32.mxu0 0.0
        %3163 = vmatmul.mubr.f32.gmra.mxu0 %v3096
        %v3164 = vpop.f32.mrf.mxu0
        %v3165 = vadd.f32 %v3093, %v3164
        %v3166 = vpop.f32.mrf.mxu0
        %3167 = vdwg.mxu0
        %v3168 = vmax.f32 %v3165, 0.0
        %v3169 = vld [vmem:[%s23] sm:$0x1]
        %v3170 = vld [vmem:[#allocation2] sm:$0x1]
        %3172 = vset.pattern.permute.xlu0 0
        %3173 = vperm.xlu0 %3172, %v3170
        %v3174 = vpop.permute.xlu0 %3173
        %v3176 = vlaneseq
        %v3177 = vshrl.u32 %v3176, 7
        %v3178 = vsub.s32 0, %v3177
        %v3179 = vrot.slane %v3174, %v3178
        %v3181 = vsel %vm847, %v3169, 0
        %v3184 = vsel %vm847, %v3168, 0
        %3186 = vmatprep.subr.mxu0 0.0
        %3187 = vmatpush1.xpose.msra.mxu0 0.0
        %3188 = vmatprep.subr.mxu0 0.0
        %3189 = vmatpush1.xpose.msra.mxu0 0.0
        %3190 = vmatprep.subr.mxu0 0.0
        %3191 = vmatpush1.xpose.msra.mxu0 0.0
        %3192 = vmatprep.subr.mxu0 0.0
        %3193 = vmatpush1.xpose.msra.mxu0 0.0
        %3194 = vmatprep.subr.mxu0 0.0
        %3195 = vmatpush1.xpose.msra.mxu0 0.0
        %3196 = vmatprep.subr.mxu0 0.0
        %3197 = vmatpush1.xpose.msra.mxu0 0.0
        %3198 = vmatprep.subr.mxu0 0.0
        %3199 = vmatpush1.xpose.msra.mxu0 0.0
        %3200 = vmatprep.subr.mxu0 0.0
        %3201 = vmatpush1.xpose.msra.mxu0 0.0
        %3202 = vmatprep.subr.mxu0 0.0
        %3203 = vmatpush1.xpose.msra.mxu0 0.0
        %3204 = vmatprep.subr.mxu0 0.0
        %3205 = vmatpush1.xpose.msra.mxu0 0.0
        %3206 = vmatprep.subr.mxu0 0.0
        %3207 = vmatpush1.xpose.msra.mxu0 0.0
        %3208 = vmatprep.subr.mxu0 0.0
        %3209 = vmatpush1.xpose.msra.mxu0 0.0
        %3210 = vmatprep.subr.mxu0 0.0
        %3211 = vmatpush1.xpose.msra.mxu0 0.0
        %3212 = vmatprep.subr.mxu0 0.0
        %3213 = vmatpush1.xpose.msra.mxu0 0.0
        %3214 = vmatprep.subr.mxu0 0.0
        %3215 = vmatpush1.xpose.msra.mxu0 0.0
        %3216 = vmatprep.subr.mxu0 0.0
        %3217 = vmatpush1.xpose.msra.mxu0 %v3184
        %3218 = vmatprep.subr.mxu0 0.0
        %3219 = vmatpush2.xpose.msra.mxu0 0.0
        %3220 = vmatprep.subr.mxu0 0.0
        %3221 = vmatpush2.xpose.msra.mxu0 0.0
        %3222 = vmatprep.subr.mxu0 0.0
        %3223 = vmatpush2.xpose.msra.mxu0 0.0
        %3224 = vmatprep.subr.mxu0 0.0
        %3225 = vmatpush2.xpose.msra.mxu0 0.0
        %3226 = vmatprep.subr.mxu0 0.0
        %3227 = vmatpush2.xpose.msra.mxu0 0.0
        %3228 = vmatprep.subr.mxu0 0.0
        %3229 = vmatpush2.xpose.msra.mxu0 0.0
        %3230 = vmatprep.subr.mxu0 0.0
        %3231 = vmatpush2.xpose.msra.mxu0 0.0
        %3232 = vmatprep.subr.mxu0 0.0
        %3233 = vmatpush2.xpose.msra.mxu0 0.0
        %3234 = vmatprep.subr.mxu0 0.0
        %3235 = vmatpush2.xpose.msra.mxu0 0.0
        %3236 = vmatprep.subr.mxu0 0.0
        %3237 = vmatpush2.xpose.msra.mxu0 0.0
        %3238 = vmatprep.subr.mxu0 0.0
        %3239 = vmatpush2.xpose.msra.mxu0 0.0
        %3240 = vmatprep.subr.mxu0 0.0
        %3241 = vmatpush2.xpose.msra.mxu0 0.0
        %3242 = vmatprep.subr.mxu0 0.0
        %3243 = vmatpush2.xpose.msra.mxu0 0.0
        %3244 = vmatprep.subr.mxu0 0.0
        %3245 = vmatpush2.xpose.msra.mxu0 0.0
        %3246 = vmatprep.subr.mxu0 0.0
        %3247 = vmatpush2.xpose.msra.mxu0 0.0
        %3248 = vmatprep.subr.mxu0 0.0
        %3249 = vmatpush2.xpose.msra.mxu0 0.0
        %3250 = vmatprep.mubr.f32.mxu0 0.0
        %3251 = vmatmul.mubr.f32.gmra.mxu0 %v3181
        %v3252 = vpop.f32.mrf.mxu0
        %v3253 = vadd.f32 %v3179, %v3252
        %v3254 = vpop.f32.mrf.mxu0
        %3255 = vdwg.mxu0
        %v3256 = vsub.f32 0.0, %v3253
        %v3257 = vmul.f32 %v3256, 1.442695
        %v3258 = vpow.pop %v3257
        %v3259 = vadd.f32 %v3258, 1.0
        %v3260 = vrcp.pop %v3259
        %vm3261 = vcmask 57344
        %3262 = vst.msk [vmem:[%s756] sm:$0x1] %vm3261, %v3260
        %s3263 = sand.u32 %s579, 1
        %s3264 = scalar_lea.sflag [#allocation4], %s3263
        %s3265 = sand.u32 %s579, 1
        %s3266 = scalar_lea.vmem [#allocation3], %s3265
        // Predicated region
        $region121: #{tpu_custom_call.1} parent=119 // pred_check
          %p3267 = pneg %p589
        $region122: #{tpu_custom_call.1} parent=119 // pred_check_branch
          %3269 = sbr.rel (%p3267) target = $region124
        $region123: #{tpu_custom_call.1} parent=119 // pred_region
          %s3271 = ssub.s32 16, 16
          %3272 = vsyncadd %s3264, %s3271
          %s3273 = smul.addr %s41, 16
          %s3274 = scalar_lea.hbm %s25, %s3273
          %s3276 = sshll.u32 %s3266, 4
          %s3277 = int_to_ptr.vmem [resolvable:$true] %s3276
          %3279 = dma.vmem_to_hbm [thread:$0]  %s3277, 16, %s3274, %s3264
        $region124: #{tpu_custom_call.1} parent=119 // pred_fallthru
          _
      $region120: #{tpu_custom_call.1} parent=5 // pred_fallthru
        _
      %p3280 = scmp.le.s32.totalorder 2, %s36
      // Predicated region
      $region125: #{tpu_custom_call.1} parent=5 // pred_check
        %p3281 = pneg %p3280
      $region126: #{tpu_custom_call.1} parent=5 // pred_check_branch
        %3283 = sbr.rel (%p3281) target = $region128
      $region127: #{tpu_custom_call.1} parent=5 // pred_region
        %s3284 = ssub.s32 %s36, 2
        // Predicated region
        $region129: #{tpu_custom_call.1} parent=127 // pred_check
          %p3285 = pneg %p595
        $region130: #{tpu_custom_call.1} parent=127 // pred_check_branch
          %3287 = sbr.rel (%p3285) target = $region132
        $region131: #{tpu_custom_call.1} parent=127 // pred_region
          %s3288 = sand.u32 %s580, 1
          %s3289 = scalar_lea.sflag [#allocation4], %s3288
          %s3290 = sand.u32 %s580, 1
          %s3291 = scalar_lea.vmem [#allocation3], %s3290
          %3292 = dma.done %s3289, 16
        $region132: #{tpu_custom_call.1} parent=127 // pred_fallthru
          _
      $region128: #{tpu_custom_call.1} parent=5 // pred_fallthru
        _
    $region6: #{tpu_custom_call.1} parent=1 // loop_footer
      %s40 = sadd.s32 1, %s36
    $region7: #{tpu_custom_call.1} parent=1 // loop_footer_branch
      %35 = sbr.rel target = $region3
    $region8: #{tpu_custom_call.1} parent=1 // loop_exit
      _
    %3293 = vsyncpa [#allocation4], 1
    %s3294 = scalar_lea.sflag [#allocation4], 1
    %3295 = vsyncpa %s3294, 1

</llo_original>
